<compile_context>
chip_gen: v6e
topology: v6e:2x2x1
jax: 0.10.0
libtpu: 0.0.40
codegen_flags: <defaults>
</compile_context>

<pallas_src>
import functools

import jax
import jax.numpy as jnp
from jax.experimental import pallas as pl
from jax.experimental.pallas import tpu as pltpu

BN_EPS = 1e-5


# --------------------------------------------------------------------------------------
# Generation-aware VMEM planning and tile selection.
# --------------------------------------------------------------------------------------
def _vmem_plan():
    """(vmem_limit_bytes, per-grid-step working-set budget), per TPU generation."""
    cap = 64 * 1024 * 1024  # conservative default: v7x per-TensorCore VMEM
    try:
        info = pltpu.get_tpu_info()
        cap = int(getattr(info, "vmem_capacity_bytes", cap) or cap)
    except Exception:
        pass
    if cap <= 64 * 1024 * 1024:
        # v7x: 64 MiB / TC and the grid is sharded across 2 TCs -- stay conservative.
        limit, budget = 44 * 1024 * 1024, 10 * 1024 * 1024
    else:
        # v5e / v6e: 128 MiB physical -- use it (fewer, fatter grid steps).
        limit, budget = 96 * 1024 * 1024, 28 * 1024 * 1024
    return min(limit, cap * 3 // 4), budget


def _choose_tile(h, n, fits):
    cands = [th for th in range(1, h + 1) if h % th == 0 and fits(th)]
    if not cands:
        return 1
    # Prefer tiles whose total grid (N * n_tiles) is even and >= 2 so both v7x
    # TensorCores get balanced work under ("parallel", "parallel") semantics.
    good = [th for th in cands if (n * (h // th)) >= 2 and (n * (h // th)) % 2 == 0]
    return max(good) if good else max(cands)


def _pick_conv_tile_h(h, w, cin, cout, in_bytes, cdt_bytes, budget, n):
    def fits(th):
        x_tile = th * w * cin * in_bytes
        halo = 2 * w * cin * in_bytes
        y_tile = th * w * cout * cdt_bytes
        w_tap = 9 * cin * cout * cdt_bytes
        x_cat = 3 * (th + 2) * w * cin * cdt_bytes   # lane-concatenated dx taps
        acc = th * w * cout * 4
        stats = 2 * cout * 4
        # 2x double-buffered pipelined ins/outs + in-kernel temporaries.
        est = 2 * (x_tile + halo + y_tile + w_tap + stats) + 2 * x_cat + acc + y_tile
        return est <= budget

    return _choose_tile(h, n, fits)


def _pick_elem_tile_h(h, w, c, in_bytes, budget, n):
    def fits(th):
        if th != h and (th * w) % 128 != 0:
            return False            # keep the transposed NCHW store block legal/lane-dense
        # Pure elementwise: 2x double-buffered in/out + one f32 temporary.
        est = (2 * in_bytes + 2 * 4 + 4) * th * w * c
        return est <= budget

    return _choose_tile(h, n, fits)


# --------------------------------------------------------------------------------------
# Conv3x3 (stride 1, pad 1) + per-tile BN partials.
# --------------------------------------------------------------------------------------
def _conv3x3_stats_kernel(*refs, apply_input_act, compute_dtype, fuse_k):
    """3x3 conv on one (TH, W) row-tile + per-channel (sum, sumsq) partials.

    If apply_input_act, the previous layer's BN affine + ReLU is applied to the input
    tile (and its halo rows) on load, so the previous layer's raw conv output is
    consumed directly from HBM.
    """
    if apply_input_act:
        (xm_ref, xt_ref, xb_ref, w_ref, scale_ref, shift_ref,
         y_ref, stats_ref) = refs
    else:
        xm_ref, xt_ref, xb_ref, w_ref, y_ref, stats_ref = refs
        scale_ref = shift_ref = None

    th, w_dim, cin = xm_ref.shape
    cout = y_ref.shape[-1]
    i = pl.program_id(1)
    n_tiles = pl.num_programs(1)

    def load(ref):
        v = ref[...]
        if apply_input_act:
            # Previous layer's BN affine + ReLU fused into this layer's input load.
            v = jnp.maximum(v.astype(jnp.float32) * scale_ref[...] + shift_ref[...], 0.0)
        # bf16 operands feed the MXU at native rate; the accumulator stays f32.
        return v.astype(compute_dtype)

    # H halo: single rows fetched via clamped index_maps; zeroed at image borders.
    top_valid = (i > 0).astype(compute_dtype)
    bot_valid = (i < n_tiles - 1).astype(compute_dtype)
    x_mid = load(xm_ref)                            # (TH, W, Cin)
    x_top = (load(xt_ref) * top_valid)[None]        # (1, W, Cin)
    x_bot = (load(xb_ref) * bot_valid)[None]        # (1, W, Cin)
    xt = jnp.concatenate([x_top, x_mid, x_bot], axis=0)   # (TH+2, W, Cin)

    # W halo: XLU rolls + zeroing of the wrapped edge column (no unaligned slices).
    col = jax.lax.broadcasted_iota(jnp.int32, xt.shape, 1)
    zero = jnp.zeros((), compute_dtype)
    left = jnp.where(col == 0, zero, pltpu.roll(xt, shift=1, axis=1))              # x[w-1]
    right = jnp.where(col == w_dim - 1, zero, pltpu.roll(xt, shift=w_dim - 1, axis=1))  # x[w+1]
    taps = (left, xt, right)                        # dx = 0, 1, 2

    acc = jnp.zeros((th * w_dim, cout), jnp.float32)
    if fuse_k:
        # Lane-concatenate the dx taps so each MXU call contracts K = 3*Cin
        # (weights are pre-reshaped to (3, 3*Cin, Cout), dx-major, in the wrapper).
        x_cat = jnp.concatenate(taps, axis=-1)      # (TH+2, W, 3*Cin)
        for dy in range(3):
            patch = x_cat[dy:dy + th].reshape(th * w_dim, 3 * cin)
            acc = acc + jnp.dot(patch, w_ref[dy], preferred_element_type=jnp.float32)
    else:
        # Fallback: 9 channel-matmuls (K = Cin), weights kept as (3, 3, Cin, Cout).
        for dy in range(3):
            for dx in range(3):
                patch = taps[dx][dy:dy + th].reshape(th * w_dim, cin)
                acc = acc + jnp.dot(patch, w_ref[dy, dx],
                                    preferred_element_type=jnp.float32)

    # Conv bias intentionally omitted: training-mode BN mean-subtraction cancels it.
    y_ref[...] = acc.reshape(th, w_dim, cout).astype(y_ref.dtype)
    # NOTE: E[x^2]-mean^2 in f32, clamped in the wrapper; fine at these activation scales.
    stats_ref[...] = jnp.concatenate(
        [jnp.sum(acc, axis=0, keepdims=True),
         jnp.sum(acc * acc, axis=0, keepdims=True)], axis=0)      # (2, Cout) partials


def _conv3x3_stats_call(x, w_k, scale, shift, *, fuse_k, compute_dtype, tile_h):
    n, h, w_dim, cin = x.shape
    cout = w_k.shape[-1]
    limit, budget = _vmem_plan()
    cdt_bytes = jnp.dtype(compute_dtype).itemsize
    th = tile_h or _pick_conv_tile_h(h, w_dim, cin, cout,
                                     x.dtype.itemsize, cdt_bytes, budget, n)
    assert h % th == 0, (h, th)
    n_tiles = h // th
    fused_act = scale is not None

    in_specs = [
        pl.BlockSpec((None, th, w_dim, cin), lambda b, i: (b, i, 0, 0)),
        pl.BlockSpec((None, None, w_dim, cin),
                     lambda b, i: (b, jnp.maximum(i * th - 1, 0), 0, 0)),
        pl.BlockSpec((None, None, w_dim, cin),
                     lambda b, i: (b, jnp.minimum((i + 1) * th, h - 1), 0, 0)),
        pl.BlockSpec(w_k.shape, lambda b, i: (0,) * w_k.ndim),
    ]
    args = [x, x, x, w_k]
    if fused_act:
        in_specs += [pl.BlockSpec((1, cin), lambda b, i: (0, 0)),
                     pl.BlockSpec((1, cin), lambda b, i: (0, 0))]
        args += [scale, shift]

    flops = 2 * 9 * n * h * w_dim * cin * cout
    bytes_accessed = (x.size * x.dtype.itemsize + w_k.size * cdt_bytes
                      + n * h * w_dim * cout * cdt_bytes + n * n_tiles * 2 * cout * 4)

    return pl.pallas_call(
        functools.partial(_conv3x3_stats_kernel, apply_input_act=fused_act,
                          compute_dtype=compute_dtype, fuse_k=fuse_k),
        grid=(n, n_tiles),
        in_specs=in_specs,
        out_specs=(
            pl.BlockSpec((None, th, w_dim, cout), lambda b, i: (b, i, 0, 0)),
            pl.BlockSpec((None, None, 2, cout), lambda b, i: (b, i, 0, 0)),
        ),
        out_shape=(
            jax.ShapeDtypeStruct((n, h, w_dim, cout), compute_dtype),
            jax.ShapeDtypeStruct((n, n_tiles, 2, cout), jnp.float32),
        ),
        compiler_params=pltpu.CompilerParams(
            dimension_semantics=("parallel", "parallel"),
            vmem_limit_bytes=limit),
        cost_estimate=pl.CostEstimate(
            flops=flops, transcendentals=0, bytes_accessed=bytes_accessed),
    )(*args)


def _conv3x3_stats(x, w, scale=None, shift=None, *, compute_dtype, tile_h=None):
    """One 3x3 / pad-1 conv over NHWC x -> (raw conv output, per-tile BN partials)."""
    _, _, _, cin = x.shape
    cout = w.shape[-1]
    w_c = w.astype(compute_dtype)
    try:
        return _conv3x3_stats_call(x, w_c.reshape(3, 3 * cin, cout), scale, shift,
                                   fuse_k=True, compute_dtype=compute_dtype,
                                   tile_h=tile_h)
    except Exception:
        # TODO(synk): fallback (K = Cin, 9 matmuls) for Mosaic versions that cannot
        # lower the minor-dim lane-concatenate used by the K = 3*Cin path.
        return _conv3x3_stats_call(x, w_c, scale, shift, fuse_k=False,
                                   compute_dtype=compute_dtype, tile_h=tile_h)


# --------------------------------------------------------------------------------------
# Final BN affine + ReLU, fused with the NHWC -> NCHW output transpose.
# --------------------------------------------------------------------------------------
def _norm_relu_t_kernel(y_ref, scale_ref, shift_ref, o_ref):
    th, w_dim, c = y_ref.shape
    v = jnp.maximum(y_ref[...].astype(jnp.float32) * scale_ref[...] + shift_ref[...], 0.0)
    # (TH, W, C) -> (C, TH*W): 2-D transpose; the store is lane-dense (TH*W >= 128) and
    # directly materializes the NCHW output (the wrapper reshape is free metadata-only).
    o_ref[...] = v.reshape(th * w_dim, c).T.astype(o_ref.dtype)


def _norm_relu_kernel(y_ref, scale_ref, shift_ref, o_ref):
    o_ref[...] = jnp.maximum(
        y_ref[...].astype(jnp.float32) * scale_ref[...] + shift_ref[...], 0.0
    ).astype(o_ref.dtype)


def _norm_relu_nchw(y, scale, shift, *, tile_h=None):
    """Tile-wise y*scale + shift -> ReLU, emitted directly in NCHW layout."""
    n, h, w_dim, c = y.shape
    limit, budget = _vmem_plan()
    th = tile_h or _pick_elem_tile_h(h, w_dim, c, y.dtype.itemsize, budget, n)
    if th != h and (th * w_dim) % 128 != 0:
        th = h
    assert h % th == 0, (h, th)
    n_tiles = h // th
    common = dict(
        grid=(n, n_tiles),
        in_specs=[pl.BlockSpec((None, th, w_dim, c), lambda b, i: (b, i, 0, 0)),
                  pl.BlockSpec((1, c), lambda b, i: (0, 0)),
                  pl.BlockSpec((1, c), lambda b, i: (0, 0))],
        compiler_params=pltpu.CompilerParams(
            dimension_semantics=("parallel", "parallel"),
            vmem_limit_bytes=limit),
    )
    try:
        out = pl.pallas_call(
            _norm_relu_t_kernel,
            out_specs=pl.BlockSpec((None, c, th * w_dim), lambda b, i: (b, 0, i)),
            out_shape=jax.ShapeDtypeStruct((n, c, h * w_dim), jnp.float32),
            **common,
        )(y, scale, shift)
        return out.reshape(n, c, h, w_dim)       # free: splits the minor dim in place
    except Exception:
        # TODO(synk): fallback if the in-kernel (TH*W, C)->(C, TH*W) transpose cannot
        # lower; the NHWC->NCHW transpose then costs one extra XLA pass.
        out = pl.pallas_call(
            _norm_relu_kernel,
            out_specs=pl.BlockSpec((None, th, w_dim, c), lambda b, i: (b, i, 0, 0)),
            out_shape=jax.ShapeDtypeStruct((n, h, w_dim, c), jnp.float32),
            **common,
        )(y, scale, shift)
        return jnp.transpose(out, (0, 3, 1, 2))


def _bn_affine_from_stats(stats, gamma, beta, count):
    """Fold per-tile (sum, sumsq) partials into BN scale/shift (one-pass variance)."""
    c = stats.shape[-1]
    totals = jnp.sum(stats.reshape(-1, 2, c), axis=0)             # (2, C)
    mean = totals[0] / count
    var = jnp.maximum(totals[1] / count - mean * mean, 0.0)        # clamp fp noise
    scale = gamma * jax.lax.rsqrt(var + BN_EPS)
    shift = beta - mean * scale
    return scale.reshape(1, c), shift.reshape(1, c)


# --------------------------------------------------------------------------------------
# Public forward.
# --------------------------------------------------------------------------------------
def double_conv2d_bn_forward(x_nchw, params, *, compute_dtype=jnp.bfloat16, tile_h=None):
    """Matches double_conv2d_bn.forward (training-mode BN).  NCHW in/out like PyTorch.

    compute_dtype is the dtype of the MXU operands and of the conv1->conv2 / conv2->bn2
    intermediates (bf16 by default); accumulation and BN statistics are always f32.
    """
    x = jnp.transpose(x_nchw, (0, 2, 3, 1)).astype(jnp.float32)    # NCHW -> NHWC
    n, h, w_dim, _ = x.shape
    count = n * h * w_dim

    # conv1 + batch-stat partials (conv bias cancelled by training-mode BN).
    y1, st1 = _conv3x3_stats(x, params["w1"], compute_dtype=compute_dtype, tile_h=tile_h)
    sc1, sh1 = _bn_affine_from_stats(st1, params["g1"], params["be1"], count)

    # conv2 with bn1+ReLU fused into its input load, + batch-stat partials.
    y2, st2 = _conv3x3_stats(y1, params["w2"], scale=sc1, shift=sh1,
                             compute_dtype=compute_dtype, tile_h=tile_h)
    sc2, sh2 = _bn_affine_from_stats(st2, params["g2"], params["be2"], count)

    # bn2 + ReLU, emitted directly as NCHW.
    return _norm_relu_nchw(y2, sc2, sh2, tile_h=tile_h)


def init_params(key, in_channels, out_channels, kernel_size=3):
    """Deterministic parameter init (shapes match the PyTorch module)."""
    k1, k2, k3, k4 = jax.random.split(key, 4)
    fan_in1 = in_channels * kernel_size * kernel_size
    fan_in2 = out_channels * kernel_size * kernel_size
    bound1 = 1.0 / jnp.sqrt(fan_in1)
    bound2 = 1.0 / jnp.sqrt(fan_in2)
    # Weights stored HWIO (kh, kw, Cin, Cout); PyTorch stores OIHW.
    w1 = jax.random.uniform(k1, (kernel_size, kernel_size, in_channels, out_channels),
                            jnp.float32, -bound1, bound1)
    b1 = jax.random.uniform(k2, (out_channels,), jnp.float32, -bound1, bound1)
    w2 = jax.random.uniform(k3, (kernel_size, kernel_size, out_channels, out_channels),
                            jnp.float32, -bound2, bound2)
    b2 = jax.random.uniform(k4, (out_channels,), jnp.float32, -bound2, bound2)
    # BatchNorm2d default init: weight=1, bias=0.  (b1/b2 are unused by the kernels:
    # they cancel exactly under training-mode BN; kept for API fidelity / reference.)
    g1 = jnp.ones((out_channels,), jnp.float32)
    be1 = jnp.zeros((out_channels,), jnp.float32)
    g2 = jnp.ones((out_channels,), jnp.float32)
    be2 = jnp.zeros((out_channels,), jnp.float32)
    return dict(w1=w1, b1=b1, g1=g1, be1=be1, w2=w2, b2=b2, g2=g2, be2=be2)


def _ref_forward(x_nchw, params):
    """Pure-JAX f32 reference (lax conv WITH bias + batch-stats BN + ReLU)."""
    def block(x, w, b, g, be):
        y = jax.lax.conv_general_dilated(
            x, w, window_strides=(1, 1), padding=((1, 1), (1, 1)),
            dimension_numbers=("NHWC", "HWIO", "NHWC"),
            precision=jax.lax.Precision.HIGHEST)
        y = y + b.reshape(1, 1, 1, -1)
        m = jnp.mean(y, axis=(0, 1, 2), keepdims=True)
        v = jnp.mean((y - m) ** 2, axis=(0, 1, 2), keepdims=True)
        y = (y - m) * jax.lax.rsqrt(v + BN_EPS) * g.reshape(1, 1, 1, -1) \
            + be.reshape(1, 1, 1, -1)
        return jnp.maximum(y, 0.0)

    x = jnp.transpose(x_nchw, (0, 2, 3, 1))
    y = block(x, params["w1"], params["b1"], params["g1"], params["be1"])
    y = block(y, params["w2"], params["b2"], params["g2"], params["be2"])
    return jnp.transpose(y, (0, 3, 1, 2))


if __name__ == "__main__":
    N, Cin, Cout, H, W = 2, 4, 8, 16, 16

    key = jax.random.PRNGKey(0)
    kx, kp = jax.random.split(key)
    x = jax.random.normal(kx, (N, Cin, H, W), jnp.float32)   # NCHW, like PyTorch
    params = init_params(kp, Cin, Cout)

    ref = jax.block_until_ready(_ref_forward(x, params))

    # 1) f32 compute path with an explicit 2-tile split: exercises the clamped H-halo,
    #    border zeroing, and multi-tile BN-stat reduction without bf16 quantization.
    out_f32 = jax.block_until_ready(
        double_conv2d_bn_forward(x, params, compute_dtype=jnp.float32, tile_h=8))
    assert out_f32.shape == (N, Cout, H, W), out_f32.shape
    if not jnp.allclose(out_f32, ref, rtol=3e-2, atol=3e-2):
        max_err = float(jnp.max(jnp.abs(out_f32 - ref)))
        raise AssertionError(f"f32 path mismatch vs reference, max abs err={max_err}")

    # 2) Default bf16-MXU path (bf16 operands + bf16 intermediates, f32 accumulation);
    #    tolerance reflects bf16 quantization across two stacked conv+BN blocks.
    out_bf16 = jax.block_until_ready(double_conv2d_bn_forward(x, params))
    assert out_bf16.shape == (N, Cout, H, W), out_bf16.shape
    if not jnp.allclose(out_bf16, ref, rtol=7e-2, atol=7e-2):
        max_err = float(jnp.max(jnp.abs(out_bf16 - ref)))
        raise AssertionError(f"bf16 path mismatch vs reference, max abs err={max_err}")

    print("KERNEL_OK")
</pallas_src>

<mosaic_0001>
module attributes {stable_mosaic.version = 11 : i64} {
  func.func @_conv3x3_stats_kernel(%arg0: i32, %arg1: i32, %arg2: memref<1x8x16x4xf32, #tpu.memory_space<vmem>>, %arg3: memref<1x1x16x4xf32, #tpu.memory_space<vmem>>, %arg4: memref<1x1x16x4xf32, #tpu.memory_space<vmem>>, %arg5: memref<3x12x8xf32, #tpu.memory_space<vmem>>, %arg6: memref<1x8x16x8xf32, #tpu.memory_space<vmem>>, %arg7: memref<1x1x2x8xf32, #tpu.memory_space<vmem>>) attributes {dimension_semantics = [#tpu.dimension_semantics<parallel>, #tpu.dimension_semantics<parallel>], iteration_bounds = array<i64: 2, 2>, scalar_prefetch = 0 : i64, scratch_operands = 0 : i64, tpu.core_type = #tpu.core_type<tc>, window_params = [{transform_indices = @transform_0, window_bounds = array<i64: 1, 8, 16, 4>}, {transform_indices = @transform_1, window_bounds = array<i64: 1, 1, 16, 4>}, {transform_indices = @transform_2, window_bounds = array<i64: 1, 1, 16, 4>}, {pipeline_mode = #tpu.pipeline_mode<synchronous>, transform_indices = @transform_3, window_bounds = array<i64: 3, 12, 8>}, {transform_indices = @transform_4, window_bounds = array<i64: 1, 8, 16, 8>}, {transform_indices = @transform_5, window_bounds = array<i64: 1, 1, 2, 8>}]} {
    %c0_i32 = arith.constant 0 : i32
    %0 = arith.cmpi sgt, %arg1, %c0_i32 : i32
    %1 = arith.extui %0 : i1 to i32
    %2 = arith.sitofp %1 : i32 to f32
    %c1_i32 = arith.constant 1 : i32
    %3 = arith.cmpi slt, %arg1, %c1_i32 : i32
    %4 = arith.extui %3 : i1 to i32
    %5 = arith.sitofp %4 : i32 to f32
    %c0 = arith.constant 0 : index
    %c0_0 = arith.constant 0 : index
    %c0_1 = arith.constant 0 : index
    %c0_2 = arith.constant 0 : index
    %6 = vector.load %arg2[%c0, %c0_0, %c0_1, %c0_2] : memref<1x8x16x4xf32, #tpu.memory_space<vmem>>, vector<1x8x16x4xf32>
    %7 = vector.shape_cast %6 : vector<1x8x16x4xf32> to vector<8x16x4xf32>
    %c0_3 = arith.constant 0 : index
    %c0_4 = arith.constant 0 : index
    %c0_5 = arith.constant 0 : index
    %c0_6 = arith.constant 0 : index
    %8 = vector.load %arg3[%c0_3, %c0_4, %c0_5, %c0_6] : memref<1x1x16x4xf32, #tpu.memory_space<vmem>>, vector<1x1x16x4xf32>
    %9 = vector.shape_cast %8 : vector<1x1x16x4xf32> to vector<16x4xf32>
    %10 = vector.broadcast %2 : f32 to vector<16x4xf32>
    %11 = arith.mulf %9, %10 : vector<16x4xf32>
    %12 = vector.shape_cast %11 : vector<16x4xf32> to vector<1x16x4xf32>
    %c0_7 = arith.constant 0 : index
    %c0_8 = arith.constant 0 : index
    %c0_9 = arith.constant 0 : index
    %c0_10 = arith.constant 0 : index
    %13 = vector.load %arg4[%c0_7, %c0_8, %c0_9, %c0_10] : memref<1x1x16x4xf32, #tpu.memory_space<vmem>>, vector<1x1x16x4xf32>
    %14 = vector.shape_cast %13 : vector<1x1x16x4xf32> to vector<16x4xf32>
    %15 = vector.broadcast %5 : f32 to vector<16x4xf32>
    %16 = arith.mulf %14, %15 : vector<16x4xf32>
    %17 = vector.shape_cast %16 : vector<16x4xf32> to vector<1x16x4xf32>
    %18 = tpu.concatenate %12, %7, %17 in 0 : vector<1x16x4xf32>, vector<8x16x4xf32>, vector<1x16x4xf32> -> vector<10x16x4xf32>
    %19 = tpu.iota {dimensions = array<i32: 1>} : vector<10x16x4xi32>
    %c0_i32_11 = arith.constant 0 : i32
    %20 = vector.broadcast %c0_i32_11 : i32 to vector<10x16x4xi32>
    %21 = arith.cmpi eq, %19, %20 : vector<10x16x4xi32>
    %c1_i32_12 = arith.constant 1 : i32
    %22 = tpu.dynamic_rotate %18 by %c1_i32_12 dim 1 : vector<10x16x4xf32>, i32 -> vector<10x16x4xf32>
    %cst = arith.constant 0.000000e+00 : f32
    %23 = vector.broadcast %cst : f32 to vector<10x16x4xf32>
    %24 = arith.select %21, %23, %22 : vector<10x16x4xi1>, vector<10x16x4xf32>
    %c15_i32 = arith.constant 15 : i32
    %25 = vector.broadcast %c15_i32 : i32 to vector<10x16x4xi32>
    %26 = arith.cmpi eq, %19, %25 : vector<10x16x4xi32>
    %c15_i32_13 = arith.constant 15 : i32
    %27 = tpu.dynamic_rotate %18 by %c15_i32_13 dim 1 : vector<10x16x4xf32>, i32 -> vector<10x16x4xf32>
    %cst_14 = arith.constant 0.000000e+00 : f32
    %28 = vector.broadcast %cst_14 : f32 to vector<10x16x4xf32>
    %29 = arith.select %26, %28, %27 : vector<10x16x4xi1>, vector<10x16x4xf32>
    %cst_15 = arith.constant 0.000000e+00 : f32
    %30 = vector.broadcast %cst_15 : f32 to vector<128x8xf32>
    %31 = tpu.concatenate %24, %18, %29 in 2 : vector<10x16x4xf32>, vector<10x16x4xf32>, vector<10x16x4xf32> -> vector<10x16x12xf32>
    %32 = vector.extract_strided_slice %31 {offsets = [0, 0, 0], sizes = [8, 16, 12], strides = [1, 1, 1]} : vector<10x16x12xf32> to vector<8x16x12xf32>
    %33 = vector.shape_cast %32 : vector<8x16x12xf32> to vector<128x12xf32>
    %c0_16 = arith.constant 0 : index
    %c0_17 = arith.constant 0 : index
    %c0_18 = arith.constant 0 : index
    %34 = vector.load %arg5[%c0_16, %c0_17, %c0_18] : memref<3x12x8xf32, #tpu.memory_space<vmem>>, vector<1x12x8xf32>
    %35 = vector.shape_cast %34 : vector<1x12x8xf32> to vector<12x8xf32>
    %cst_19 = arith.constant dense<0.000000e+00> : vector<128x8xf32>
    %36 = tpu.matmul %33, %35, %cst_19 {dimension_numbers = #tpu.dot_dimension_numbers<[1], [0], [0], [1], [0, 0, 1, 1], [], []>} : vector<128x12xf32>, vector<12x8xf32>, vector<128x8xf32> -> vector<128x8xf32>
    %37 = arith.addf %30, %36 : vector<128x8xf32>
    %38 = vector.extract_strided_slice %31 {offsets = [1, 0, 0], sizes = [8, 16, 12], strides = [1, 1, 1]} : vector<10x16x12xf32> to vector<8x16x12xf32>
    %39 = vector.shape_cast %38 : vector<8x16x12xf32> to vector<128x12xf32>
    %c1 = arith.constant 1 : index
    %c0_20 = arith.constant 0 : index
    %c0_21 = arith.constant 0 : index
    %40 = vector.load %arg5[%c1, %c0_20, %c0_21] : memref<3x12x8xf32, #tpu.memory_space<vmem>>, vector<1x12x8xf32>
    %41 = vector.shape_cast %40 : vector<1x12x8xf32> to vector<12x8xf32>
    %cst_22 = arith.constant dense<0.000000e+00> : vector<128x8xf32>
    %42 = tpu.matmul %39, %41, %cst_22 {dimension_numbers = #tpu.dot_dimension_numbers<[1], [0], [0], [1], [0, 0, 1, 1], [], []>} : vector<128x12xf32>, vector<12x8xf32>, vector<128x8xf32> -> vector<128x8xf32>
    %43 = arith.addf %37, %42 : vector<128x8xf32>
    %44 = vector.extract_strided_slice %31 {offsets = [2, 0, 0], sizes = [8, 16, 12], strides = [1, 1, 1]} : vector<10x16x12xf32> to vector<8x16x12xf32>
    %45 = vector.shape_cast %44 : vector<8x16x12xf32> to vector<128x12xf32>
    %c2 = arith.constant 2 : index
    %c0_23 = arith.constant 0 : index
    %c0_24 = arith.constant 0 : index
    %46 = vector.load %arg5[%c2, %c0_23, %c0_24] : memref<3x12x8xf32, #tpu.memory_space<vmem>>, vector<1x12x8xf32>
    %47 = vector.shape_cast %46 : vector<1x12x8xf32> to vector<12x8xf32>
    %cst_25 = arith.constant dense<0.000000e+00> : vector<128x8xf32>
    %48 = tpu.matmul %45, %47, %cst_25 {dimension_numbers = #tpu.dot_dimension_numbers<[1], [0], [0], [1], [0, 0, 1, 1], [], []>} : vector<128x12xf32>, vector<12x8xf32>, vector<128x8xf32> -> vector<128x8xf32>
    %49 = arith.addf %43, %48 : vector<128x8xf32>
    %50 = vector.shape_cast %49 : vector<128x8xf32> to vector<8x16x8xf32>
    %c0_26 = arith.constant 0 : index
    %c0_27 = arith.constant 0 : index
    %c0_28 = arith.constant 0 : index
    %c0_29 = arith.constant 0 : index
    %51 = vector.load %arg6[%c0_26, %c0_27, %c0_28, %c0_29] : memref<1x8x16x8xf32, #tpu.memory_space<vmem>>, vector<1x8x16x8xf32>
    %52 = vector.shape_cast %51 : vector<1x8x16x8xf32> to vector<8x16x8xf32>
    %53 = vector.shape_cast %50 : vector<8x16x8xf32> to vector<1x8x16x8xf32>
    tpu.vector_store %arg6[%c0_26, %c0_27, %c0_28, %c0_29], %53 {strides = array<i32>} : memref<1x8x16x8xf32, #tpu.memory_space<vmem>>, vector<1x8x16x8xf32>,
    %cst_30 = arith.constant dense<0.000000e+00> : vector<8xf32>
    %54 = vector.multi_reduction <add>, %49, %cst_30 [0] : vector<128x8xf32> to vector<8xf32>
    %55 = vector.shape_cast %54 : vector<8xf32> to vector<1x8xf32>
    %56 = arith.mulf %49, %49 : vector<128x8xf32>
    %cst_31 = arith.constant dense<0.000000e+00> : vector<8xf32>
    %57 = vector.multi_reduction <add>, %56, %cst_31 [0] : vector<128x8xf32> to vector<8xf32>
    %58 = vector.shape_cast %57 : vector<8xf32> to vector<1x8xf32>
    %59 = tpu.concatenate %55, %58 in 0 : vector<1x8xf32>, vector<1x8xf32> -> vector<2x8xf32>
    %c0_32 = arith.constant 0 : index
    %c0_33 = arith.constant 0 : index
    %c0_34 = arith.constant 0 : index
    %c0_35 = arith.constant 0 : index
    %60 = vector.load %arg7[%c0_32, %c0_33, %c0_34, %c0_35] : memref<1x1x2x8xf32, #tpu.memory_space<vmem>>, vector<1x1x2x8xf32>
    %61 = vector.shape_cast %60 : vector<1x1x2x8xf32> to vector<2x8xf32>
    %62 = vector.shape_cast %59 : vector<2x8xf32> to vector<1x1x2x8xf32>
    tpu.vector_store %arg7[%c0_32, %c0_33, %c0_34, %c0_35], %62 {strides = array<i32>} : memref<1x1x2x8xf32, #tpu.memory_space<vmem>>, vector<1x1x2x8xf32>,
    return
  }
  func.func @transform_0(%arg0: i32, %arg1: i32) -> (i32, i32, i32, i32) {
    %c0_i32 = arith.constant 0 : i32
    %c0_i32_0 = arith.constant 0 : i32
    %c0_i32_1 = arith.constant 0 : i32
    return %arg0, %arg1, %c0_i32, %c0_i32_0 : i32, i32, i32, i32
  }
  func.func @transform_1(%arg0: i32, %arg1: i32) -> (i32, i32, i32, i32) {
    %c8_i32 = arith.constant 8 : i32
    %0 = arith.muli %arg1, %c8_i32 : i32
    %c1_i32 = arith.constant 1 : i32
    %1 = arith.subi %0, %c1_i32 : i32
    %c0_i32 = arith.constant 0 : i32
    %2 = arith.maxsi %1, %c0_i32 : i32
    %c0_i32_0 = arith.constant 0 : i32
    %c0_i32_1 = arith.constant 0 : i32
    %c0_i32_2 = arith.constant 0 : i32
    return %arg0, %2, %c0_i32_0, %c0_i32_1 : i32, i32, i32, i32
  }
  func.func @transform_2(%arg0: i32, %arg1: i32) -> (i32, i32, i32, i32) {
    %c1_i32 = arith.constant 1 : i32
    %0 = arith.addi %arg1, %c1_i32 : i32
    %c8_i32 = arith.constant 8 : i32
    %1 = arith.muli %0, %c8_i32 : i32
    %c15_i32 = arith.constant 15 : i32
    %2 = arith.minsi %1, %c15_i32 : i32
    %c0_i32 = arith.constant 0 : i32
    %c0_i32_0 = arith.constant 0 : i32
    %c0_i32_1 = arith.constant 0 : i32
    return %arg0, %2, %c0_i32, %c0_i32_0 : i32, i32, i32, i32
  }
  func.func @transform_3(%arg0: i32, %arg1: i32) -> (i32, i32, i32) {
    %c0_i32 = arith.constant 0 : i32
    %c0_i32_0 = arith.constant 0 : i32
    %c0_i32_1 = arith.constant 0 : i32
    %c0_i32_2 = arith.constant 0 : i32
    return %c0_i32, %c0_i32_0, %c0_i32_1 : i32, i32, i32
  }
  func.func @transform_4(%arg0: i32, %arg1: i32) -> (i32, i32, i32, i32) {
    %c0_i32 = arith.constant 0 : i32
    %c0_i32_0 = arith.constant 0 : i32
    %c0_i32_1 = arith.constant 0 : i32
    return %arg0, %arg1, %c0_i32, %c0_i32_0 : i32, i32, i32, i32
  }
  func.func @transform_5(%arg0: i32, %arg1: i32) -> (i32, i32, i32, i32) {
    %c0_i32 = arith.constant 0 : i32
    %c0_i32_0 = arith.constant 0 : i32
    %c0_i32_1 = arith.constant 0 : i32
    return %arg0, %arg1, %c0_i32, %c0_i32_0 : i32, i32, i32, i32
  }
}

module attributes {stable_mosaic.version = 11 : i64} {
  func.func @_conv3x3_stats_kernel(%arg0: i32, %arg1: i32, %arg2: memref<1x8x16x4xf32, #tpu.memory_space<vmem>>, %arg3: memref<1x1x16x4xf32, #tpu.memory_space<vmem>>, %arg4: memref<1x1x16x4xf32, #tpu.memory_space<vmem>>, %arg5: memref<3x3x4x8xf32, #tpu.memory_space<vmem>>, %arg6: memref<1x8x16x8xf32, #tpu.memory_space<vmem>>, %arg7: memref<1x1x2x8xf32, #tpu.memory_space<vmem>>) attributes {dimension_semantics = [#tpu.dimension_semantics<parallel>, #tpu.dimension_semantics<parallel>], iteration_bounds = array<i64: 2, 2>, scalar_prefetch = 0 : i64, scratch_operands = 0 : i64, tpu.core_type = #tpu.core_type<tc>, window_params = [{transform_indices = @transform_0, window_bounds = array<i64: 1, 8, 16, 4>}, {transform_indices = @transform_1, window_bounds = array<i64: 1, 1, 16, 4>}, {transform_indices = @transform_2, window_bounds = array<i64: 1, 1, 16, 4>}, {pipeline_mode = #tpu.pipeline_mode<synchronous>, transform_indices = @transform_3, window_bounds = array<i64: 3, 3, 4, 8>}, {transform_indices = @transform_4, window_bounds = array<i64: 1, 8, 16, 8>}, {transform_indices = @transform_5, window_bounds = array<i64: 1, 1, 2, 8>}]} {
    %c0_i32 = arith.constant 0 : i32
    %0 = arith.cmpi sgt, %arg1, %c0_i32 : i32
    %1 = arith.extui %0 : i1 to i32
    %2 = arith.sitofp %1 : i32 to f32
    %c1_i32 = arith.constant 1 : i32
    %3 = arith.cmpi slt, %arg1, %c1_i32 : i32
    %4 = arith.extui %3 : i1 to i32
    %5 = arith.sitofp %4 : i32 to f32
    %c0 = arith.constant 0 : index
    %c0_0 = arith.constant 0 : index
    %c0_1 = arith.constant 0 : index
    %c0_2 = arith.constant 0 : index
    %6 = vector.load %arg2[%c0, %c0_0, %c0_1, %c0_2] : memref<1x8x16x4xf32, #tpu.memory_space<vmem>>, vector<1x8x16x4xf32>
    %7 = vector.shape_cast %6 : vector<1x8x16x4xf32> to vector<8x16x4xf32>
    %c0_3 = arith.constant 0 : index
    %c0_4 = arith.constant 0 : index
    %c0_5 = arith.constant 0 : index
    %c0_6 = arith.constant 0 : index
    %8 = vector.load %arg3[%c0_3, %c0_4, %c0_5, %c0_6] : memref<1x1x16x4xf32, #tpu.memory_space<vmem>>, vector<1x1x16x4xf32>
    %9 = vector.shape_cast %8 : vector<1x1x16x4xf32> to vector<16x4xf32>
    %10 = vector.broadcast %2 : f32 to vector<16x4xf32>
    %11 = arith.mulf %9, %10 : vector<16x4xf32>
    %12 = vector.shape_cast %11 : vector<16x4xf32> to vector<1x16x4xf32>
    %c0_7 = arith.constant 0 : index
    %c0_8 = arith.constant 0 : index
    %c0_9 = arith.constant 0 : index
    %c0_10 = arith.constant 0 : index
    %13 = vector.load %arg4[%c0_7, %c0_8, %c0_9, %c0_10] : memref<1x1x16x4xf32, #tpu.memory_space<vmem>>, vector<1x1x16x4xf32>
    %14 = vector.shape_cast %13 : vector<1x1x16x4xf32> to vector<16x4xf32>
    %15 = vector.broadcast %5 : f32 to vector<16x4xf32>
    %16 = arith.mulf %14, %15 : vector<16x4xf32>
    %17 = vector.shape_cast %16 : vector<16x4xf32> to vector<1x16x4xf32>
    %18 = tpu.concatenate %12, %7, %17 in 0 : vector<1x16x4xf32>, vector<8x16x4xf32>, vector<1x16x4xf32> -> vector<10x16x4xf32>
    %19 = tpu.iota {dimensions = array<i32: 1>} : vector<10x16x4xi32>
    %c0_i32_11 = arith.constant 0 : i32
    %20 = vector.broadcast %c0_i32_11 : i32 to vector<10x16x4xi32>
    %21 = arith.cmpi eq, %19, %20 : vector<10x16x4xi32>
    %c1_i32_12 = arith.constant 1 : i32
    %22 = tpu.dynamic_rotate %18 by %c1_i32_12 dim 1 : vector<10x16x4xf32>, i32 -> vector<10x16x4xf32>
    %cst = arith.constant 0.000000e+00 : f32
    %23 = vector.broadcast %cst : f32 to vector<10x16x4xf32>
    %24 = arith.select %21, %23, %22 : vector<10x16x4xi1>, vector<10x16x4xf32>
    %c15_i32 = arith.constant 15 : i32
    %25 = vector.broadcast %c15_i32 : i32 to vector<10x16x4xi32>
    %26 = arith.cmpi eq, %19, %25 : vector<10x16x4xi32>
    %c15_i32_13 = arith.constant 15 : i32
    %27 = tpu.dynamic_rotate %18 by %c15_i32_13 dim 1 : vector<10x16x4xf32>, i32 -> vector<10x16x4xf32>
    %cst_14 = arith.constant 0.000000e+00 : f32
    %28 = vector.broadcast %cst_14 : f32 to vector<10x16x4xf32>
    %29 = arith.select %26, %28, %27 : vector<10x16x4xi1>, vector<10x16x4xf32>
    %cst_15 = arith.constant 0.000000e+00 : f32
    %30 = vector.broadcast %cst_15 : f32 to vector<128x8xf32>
    %31 = vector.extract_strided_slice %24 {offsets = [0, 0, 0], sizes = [8, 16, 4], strides = [1, 1, 1]} : vector<10x16x4xf32> to vector<8x16x4xf32>
    %32 = vector.shape_cast %31 : vector<8x16x4xf32> to vector<128x4xf32>
    %c0_16 = arith.constant 0 : index
    %c0_17 = arith.constant 0 : index
    %c0_18 = arith.constant 0 : index
    %c0_19 = arith.constant 0 : index
    %33 = vector.load %arg5[%c0_16, %c0_17, %c0_18, %c0_19] : memref<3x3x4x8xf32, #tpu.memory_space<vmem>>, vector<1x1x4x8xf32>
    %34 = vector.shape_cast %33 : vector<1x1x4x8xf32> to vector<4x8xf32>
    %cst_20 = arith.constant dense<0.000000e+00> : vector<128x8xf32>
    %35 = tpu.matmul %32, %34, %cst_20 {dimension_numbers = #tpu.dot_dimension_numbers<[1], [0], [0], [1], [0, 0, 1, 1], [], []>} : vector<128x4xf32>, vector<4x8xf32>, vector<128x8xf32> -> vector<128x8xf32>
    %36 = arith.addf %30, %35 : vector<128x8xf32>
    %37 = vector.extract_strided_slice %18 {offsets = [0, 0, 0], sizes = [8, 16, 4], strides = [1, 1, 1]} : vector<10x16x4xf32> to vector<8x16x4xf32>
    %38 = vector.shape_cast %37 : vector<8x16x4xf32> to vector<128x4xf32>
    %c0_21 = arith.constant 0 : index
    %c1 = arith.constant 1 : index
    %c0_22 = arith.constant 0 : index
    %c0_23 = arith.constant 0 : index
    %39 = vector.load %arg5[%c0_21, %c1, %c0_22, %c0_23] : memref<3x3x4x8xf32, #tpu.memory_space<vmem>>, vector<1x1x4x8xf32>
    %40 = vector.shape_cast %39 : vector<1x1x4x8xf32> to vector<4x8xf32>
    %cst_24 = arith.constant dense<0.000000e+00> : vector<128x8xf32>
    %41 = tpu.matmul %38, %40, %cst_24 {dimension_numbers = #tpu.dot_dimension_numbers<[1], [0], [0], [1], [0, 0, 1, 1], [], []>} : vector<128x4xf32>, vector<4x8xf32>, vector<128x8xf32> -> vector<128x8xf32>
    %42 = arith.addf %36, %41 : vector<128x8xf32>
    %43 = vector.extract_strided_slice %29 {offsets = [0, 0, 0], sizes = [8, 16, 4], strides = [1, 1, 1]} : vector<10x16x4xf32> to vector<8x16x4xf32>
    %44 = vector.shape_cast %43 : vector<8x16x4xf32> to vector<128x4xf32>
    %c0_25 = arith.constant 0 : index
    %c2 = arith.constant 2 : index
    %c0_26 = arith.constant 0 : index
    %c0_27 = arith.constant 0 : index
    %45 = vector.load %arg5[%c0_25, %c2, %c0_26, %c0_27] : memref<3x3x4x8xf32, #tpu.memory_space<vmem>>, vector<1x1x4x8xf32>
    %46 = vector.shape_cast %45 : vector<1x1x4x8xf32> to vector<4x8xf32>
    %cst_28 = arith.constant dense<0.000000e+00> : vector<128x8xf32>
    %47 = tpu.matmul %44, %46, %cst_28 {dimension_numbers = #tpu.dot_dimension_numbers<[1], [0], [0], [1], [0, 0, 1, 1], [], []>} : vector<128x4xf32>, vector<4x8xf32>, vector<128x8xf32> -> vector<128x8xf32>
    %48 = arith.addf %42, %47 : vector<128x8xf32>
    %49 = vector.extract_strided_slice %24 {offsets = [1, 0, 0], sizes = [8, 16, 4], strides = [1, 1, 1]} : vector<10x16x4xf32> to vector<8x16x4xf32>
    %50 = vector.shape_cast %49 : vector<8x16x4xf32> to vector<128x4xf32>
    %c1_29 = arith.constant 1 : index
    %c0_30 = arith.constant 0 : index
    %c0_31 = arith.constant 0 : index
    %c0_32 = arith.constant 0 : index
    %51 = vector.load %arg5[%c1_29, %c0_30, %c0_31, %c0_32] : memref<3x3x4x8xf32, #tpu.memory_space<vmem>>, vector<1x1x4x8xf32>
    %52 = vector.shape_cast %51 : vector<1x1x4x8xf32> to vector<4x8xf32>
    %cst_33 = arith.constant dense<0.000000e+00> : vector<128x8xf32>
    %53 = tpu.matmul %50, %52, %cst_33 {dimension_numbers = #tpu.dot_dimension_numbers<[1], [0], [0], [1], [0, 0, 1, 1], [], []>} : vector<128x4xf32>, vector<4x8xf32>, vector<128x8xf32> -> vector<128x8xf32>
    %54 = arith.addf %48, %53 : vector<128x8xf32>
    %55 = vector.extract_strided_slice %18 {offsets = [1, 0, 0], sizes = [8, 16, 4], strides = [1, 1, 1]} : vector<10x16x4xf32> to vector<8x16x4xf32>
    %56 = vector.shape_cast %55 : vector<8x16x4xf32> to vector<128x4xf32>
    %c1_34 = arith.constant 1 : index
    %c1_35 = arith.constant 1 : index
    %c0_36 = arith.constant 0 : index
    %c0_37 = arith.constant 0 : index
    %57 = vector.load %arg5[%c1_34, %c1_35, %c0_36, %c0_37] : memref<3x3x4x8xf32, #tpu.memory_space<vmem>>, vector<1x1x4x8xf32>
    %58 = vector.shape_cast %57 : vector<1x1x4x8xf32> to vector<4x8xf32>
    %cst_38 = arith.constant dense<0.000000e+00> : vector<128x8xf32>
    %59 = tpu.matmul %56, %58, %cst_38 {dimension_numbers = #tpu.dot_dimension_numbers<[1], [0], [0], [1], [0, 0, 1, 1], [], []>} : vector<128x4xf32>, vector<4x8xf32>, vector<128x8xf32> -> vector<128x8xf32>
    %60 = arith.addf %54, %59 : vector<128x8xf32>
    %61 = vector.extract_strided_slice %29 {offsets = [1, 0, 0], sizes = [8, 16, 4], strides = [1, 1, 1]} : vector<10x16x4xf32> to vector<8x16x4xf32>
    %62 = vector.shape_cast %61 : vector<8x16x4xf32> to vector<128x4xf32>
    %c1_39 = arith.constant 1 : index
    %c2_40 = arith.constant 2 : index
    %c0_41 = arith.constant 0 : index
    %c0_42 = arith.constant 0 : index
    %63 = vector.load %arg5[%c1_39, %c2_40, %c0_41, %c0_42] : memref<3x3x4x8xf32, #tpu.memory_space<vmem>>, vector<1x1x4x8xf32>
    %64 = vector.shape_cast %63 : vector<1x1x4x8xf32> to vector<4x8xf32>
    %cst_43 = arith.constant dense<0.000000e+00> : vector<128x8xf32>
    %65 = tpu.matmul %62, %64, %cst_43 {dimension_numbers = #tpu.dot_dimension_numbers<[1], [0], [0], [1], [0, 0, 1, 1], [], []>} : vector<128x4xf32>, vector<4x8xf32>, vector<128x8xf32> -> vector<128x8xf32>
    %66 = arith.addf %60, %65 : vector<128x8xf32>
    %67 = vector.extract_strided_slice %24 {offsets = [2, 0, 0], sizes = [8, 16, 4], strides = [1, 1, 1]} : vector<10x16x4xf32> to vector<8x16x4xf32>
    %68 = vector.shape_cast %67 : vector<8x16x4xf32> to vector<128x4xf32>
    %c2_44 = arith.constant 2 : index
    %c0_45 = arith.constant 0 : index
    %c0_46 = arith.constant 0 : index
    %c0_47 = arith.constant 0 : index
    %69 = vector.load %arg5[%c2_44, %c0_45, %c0_46, %c0_47] : memref<3x3x4x8xf32, #tpu.memory_space<vmem>>, vector<1x1x4x8xf32>
    %70 = vector.shape_cast %69 : vector<1x1x4x8xf32> to vector<4x8xf32>
    %cst_48 = arith.constant dense<0.000000e+00> : vector<128x8xf32>
    %71 = tpu.matmul %68, %70, %cst_48 {dimension_numbers = #tpu.dot_dimension_numbers<[1], [0], [0], [1], [0, 0, 1, 1], [], []>} : vector<128x4xf32>, vector<4x8xf32>, vector<128x8xf32> -> vector<128x8xf32>
    %72 = arith.addf %66, %71 : vector<128x8xf32>
    %73 = vector.extract_strided_slice %18 {offsets = [2, 0, 0], sizes = [8, 16, 4], strides = [1, 1, 1]} : vector<10x16x4xf32> to vector<8x16x4xf32>
    %74 = vector.shape_cast %73 : vector<8x16x4xf32> to vector<128x4xf32>
    %c2_49 = arith.constant 2 : index
    %c1_50 = arith.constant 1 : index
    %c0_51 = arith.constant 0 : index
    %c0_52 = arith.constant 0 : index
    %75 = vector.load %arg5[%c2_49, %c1_50, %c0_51, %c0_52] : memref<3x3x4x8xf32, #tpu.memory_space<vmem>>, vector<1x1x4x8xf32>
    %76 = vector.shape_cast %75 : vector<1x1x4x8xf32> to vector<4x8xf32>
    %cst_53 = arith.constant dense<0.000000e+00> : vector<128x8xf32>
    %77 = tpu.matmul %74, %76, %cst_53 {dimension_numbers = #tpu.dot_dimension_numbers<[1], [0], [0], [1], [0, 0, 1, 1], [], []>} : vector<128x4xf32>, vector<4x8xf32>, vector<128x8xf32> -> vector<128x8xf32>
    %78 = arith.addf %72, %77 : vector<128x8xf32>
    %79 = vector.extract_strided_slice %29 {offsets = [2, 0, 0], sizes = [8, 16, 4], strides = [1, 1, 1]} : vector<10x16x4xf32> to vector<8x16x4xf32>
    %80 = vector.shape_cast %79 : vector<8x16x4xf32> to vector<128x4xf32>
    %c2_54 = arith.constant 2 : index
    %c2_55 = arith.constant 2 : index
    %c0_56 = arith.constant 0 : index
    %c0_57 = arith.constant 0 : index
    %81 = vector.load %arg5[%c2_54, %c2_55, %c0_56, %c0_57] : memref<3x3x4x8xf32, #tpu.memory_space<vmem>>, vector<1x1x4x8xf32>
    %82 = vector.shape_cast %81 : vector<1x1x4x8xf32> to vector<4x8xf32>
    %cst_58 = arith.constant dense<0.000000e+00> : vector<128x8xf32>
    %83 = tpu.matmul %80, %82, %cst_58 {dimension_numbers = #tpu.dot_dimension_numbers<[1], [0], [0], [1], [0, 0, 1, 1], [], []>} : vector<128x4xf32>, vector<4x8xf32>, vector<128x8xf32> -> vector<128x8xf32>
    %84 = arith.addf %78, %83 : vector<128x8xf32>
    %85 = vector.shape_cast %84 : vector<128x8xf32> to vector<8x16x8xf32>
    %c0_59 = arith.constant 0 : index
    %c0_60 = arith.constant 0 : index
    %c0_61 = arith.constant 0 : index
    %c0_62 = arith.constant 0 : index
    %86 = vector.load %arg6[%c0_59, %c0_60, %c0_61, %c0_62] : memref<1x8x16x8xf32, #tpu.memory_space<vmem>>, vector<1x8x16x8xf32>
    %87 = vector.shape_cast %86 : vector<1x8x16x8xf32> to vector<8x16x8xf32>
    %88 = vector.shape_cast %85 : vector<8x16x8xf32> to vector<1x8x16x8xf32>
    tpu.vector_store %arg6[%c0_59, %c0_60, %c0_61, %c0_62], %88 {strides = array<i32>} : memref<1x8x16x8xf32, #tpu.memory_space<vmem>>, vector<1x8x16x8xf32>,
    %cst_63 = arith.constant dense<0.000000e+00> : vector<8xf32>
    %89 = vector.multi_reduction <add>, %84, %cst_63 [0] : vector<128x8xf32> to vector<8xf32>
    %90 = vector.shape_cast %89 : vector<8xf32> to vector<1x8xf32>
    %91 = arith.mulf %84, %84 : vector<128x8xf32>
    %cst_64 = arith.constant dense<0.000000e+00> : vector<8xf32>
    %92 = vector.multi_reduction <add>, %91, %cst_64 [0] : vector<128x8xf32> to vector<8xf32>
    %93 = vector.shape_cast %92 : vector<8xf32> to vector<1x8xf32>
    %94 = tpu.concatenate %90, %93 in 0 : vector<1x8xf32>, vector<1x8xf32> -> vector<2x8xf32>
    %c0_65 = arith.constant 0 : index
    %c0_66 = arith.constant 0 : index
    %c0_67 = arith.constant 0 : index
    %c0_68 = arith.constant 0 : index
    %95 = vector.load %arg7[%c0_65, %c0_66, %c0_67, %c0_68] : memref<1x1x2x8xf32, #tpu.memory_space<vmem>>, vector<1x1x2x8xf32>
    %96 = vector.shape_cast %95 : vector<1x1x2x8xf32> to vector<2x8xf32>
    %97 = vector.shape_cast %94 : vector<2x8xf32> to vector<1x1x2x8xf32>
    tpu.vector_store %arg7[%c0_65, %c0_66, %c0_67, %c0_68], %97 {strides = array<i32>} : memref<1x1x2x8xf32, #tpu.memory_space<vmem>>, vector<1x1x2x8xf32>,
    return
  }
  func.func @transform_0(%arg0: i32, %arg1: i32) -> (i32, i32, i32, i32) {
    %c0_i32 = arith.constant 0 : i32
    %c0_i32_0 = arith.constant 0 : i32
    %c0_i32_1 = arith.constant 0 : i32
    return %arg0, %arg1, %c0_i32, %c0_i32_0 : i32, i32, i32, i32
  }
  func.func @transform_1(%arg0: i32, %arg1: i32) -> (i32, i32, i32, i32) {
    %c8_i32 = arith.constant 8 : i32
    %0 = arith.muli %arg1, %c8_i32 : i32
    %c1_i32 = arith.constant 1 : i32
    %1 = arith.subi %0, %c1_i32 : i32
    %c0_i32 = arith.constant 0 : i32
    %2 = arith.maxsi %1, %c0_i32 : i32
    %c0_i32_0 = arith.constant 0 : i32
    %c0_i32_1 = arith.constant 0 : i32
    %c0_i32_2 = arith.constant 0 : i32
    return %arg0, %2, %c0_i32_0, %c0_i32_1 : i32, i32, i32, i32
  }
  func.func @transform_2(%arg0: i32, %arg1: i32) -> (i32, i32, i32, i32) {
    %c1_i32 = arith.constant 1 : i32
    %0 = arith.addi %arg1, %c1_i32 : i32
    %c8_i32 = arith.constant 8 : i32
    %1 = arith.muli %0, %c8_i32 : i32
    %c15_i32 = arith.constant 15 : i32
    %2 = arith.minsi %1, %c15_i32 : i32
    %c0_i32 = arith.constant 0 : i32
    %c0_i32_0 = arith.constant 0 : i32
    %c0_i32_1 = arith.constant 0 : i32
    return %arg0, %2, %c0_i32, %c0_i32_0 : i32, i32, i32, i32
  }
  func.func @transform_3(%arg0: i32, %arg1: i32) -> (i32, i32, i32, i32) {
    %c0_i32 = arith.constant 0 : i32
    %c0_i32_0 = arith.constant 0 : i32
    %c0_i32_1 = arith.constant 0 : i32
    %c0_i32_2 = arith.constant 0 : i32
    %c0_i32_3 = arith.constant 0 : i32
    return %c0_i32, %c0_i32_0, %c0_i32_1, %c0_i32_2 : i32, i32, i32, i32
  }
  func.func @transform_4(%arg0: i32, %arg1: i32) -> (i32, i32, i32, i32) {
    %c0_i32 = arith.constant 0 : i32
    %c0_i32_0 = arith.constant 0 : i32
    %c0_i32_1 = arith.constant 0 : i32
    return %arg0, %arg1, %c0_i32, %c0_i32_0 : i32, i32, i32, i32
  }
  func.func @transform_5(%arg0: i32, %arg1: i32) -> (i32, i32, i32, i32) {
    %c0_i32 = arith.constant 0 : i32
    %c0_i32_0 = arith.constant 0 : i32
    %c0_i32_1 = arith.constant 0 : i32
    return %arg0, %arg1, %c0_i32, %c0_i32_0 : i32, i32, i32, i32
  }
}

</mosaic_0001>

<llo_original>
// kernel: tpu_custom_call.1
$region0: #{tpu_custom_call.1}
  #allocation0 [shape = 'u32[]', space=smem, size = 0x4, offset = 0x4, fixed_abs, tag = 'smem constant byte address 0x4 - core index']
  #allocation1 [shape = 'u32[144,128]{1,0:T(1,128)}', space=vmem, size = 0x12000, scoped, tag = 'internal scratch']
  %s0 = inlined_call_operand.vmem [shape: f32[2,16,16,4], index: 0, kind: input, shape index: {}]
  %s1 = inlined_call_operand.vmem [shape: f32[2,16,16,4], index: 1, kind: input, shape index: {}]
  %s2 = inlined_call_operand.vmem [shape: f32[2,16,16,4], index: 2, kind: input, shape index: {}]
  %s3 = inlined_call_operand.vmem [shape: f32[3,12,8], index: 3, kind: input, shape index: {}]
  %s4 = inlined_call_operand.vmem [shape: f32[2,16,16,8], index: 4, kind: output, shape index: {0}]
  %s5 = inlined_call_operand.hbm [shape: f32[2,2,2,8], index: 5, kind: output, shape index: {1}]
  %6 = xla_tuple %s4, %s5
  %s7 = sld [smem:[#allocation0]]
  $region57: #{tpu_custom_call.1} parent=0
    _
  %s9 = ssub.s32 1, %s7
  %s10 = scalar_select 0, %s9, %s7
  $region1: #{tpu_custom_call.1} parent=0
    #allocation2 [shape = 'u8[2048]{0}', space=vmem, size = 0x800, scoped, tag = 'output window, operand 1']
    #allocation3 [shape = 's32[2]{0}', space=sflag, size = 0x8, scoped, tag = 'scoped memory for tpu_custom_call.1']
    %11 = vsyncpa [#allocation3], 0
    %s12 = scalar_lea.sflag [#allocation3], 1
    %13 = vsyncpa %s12, 0
    loop: start=0, step=1, limit=6
    $region2: #{tpu_custom_call.1} parent=1 // loop_pre_header
      _
    $region3: #{tpu_custom_call.1} parent=1 // loop_header
      %s15 = sphi 0, %s19
      %p16 = scmp.ge.s32.totalorder %s15, 6
      %s22 = sphi 0, %s34
      %s23 = sphi 0, %s30
      %s24 = sphi 0, %s22
      %s25 = sphi 0, %s23
      %s26 = sphi 0, %s24
      %s27 = sphi 0, %s25
      %s39 = sphi 0, %s41
      %s42 = sphi 0, %s39
      %s43 = sphi 0, %s42
      %s59 = sphi 0, %s43
      %s75 = sphi 0, %s77
      %s78 = sphi 0, %s75
      %s79 = sphi 0, %s78
      %s95 = sphi 0, %s79
      %s111 = sphi 0, %s113
      %s114 = sphi 0, %s111
      %s115 = sphi 0, %s114
      %s131 = sphi 0, %s115
      %s135 = sphi 0, %s135
      %s137 = sphi 0, %s135
      %s138 = sphi 0, %s137
      %s152 = sphi 0, %s138
      %s160 = sphi 0, %s162
      %s163 = sphi 0, %s160
      %s164 = sphi 0, %s163
      %s180 = sphi 0, %s164
      %s188 = sphi 0, %s190
      %s191 = sphi 0, %s188
      %s192 = sphi 0, %s191
      %s208 = sphi 0, %s192
    $region4: #{tpu_custom_call.1} parent=1 // loop_header_branch
      %18 = sbr.rel (%p16) target = $region8
    $region5: #{tpu_custom_call.1} parent=1 // loop_body
      %s20 = ssub.s32 %s15, 1
      %s21 = ssub.s32 %s15, 2
      %s28 = sadd.s32 1, %s23
      %p29 = scmp.ge.s32.totalorder %s28, 2
      %s30 = scalar_select %p29, 0, %s28
      %s31 = sadd.s32 1, %s22
      %s32 = scalar_select %p29, %s31, %s22
      %p33 = scmp.ge.s32.totalorder %s32, 2
      %s34 = scalar_select %p33, 0, %s32
      %s35 = ssub.s32 %s22, %s34
      %s36 = ssub.s32 %s23, %s30
      %s37 = sor.u32 %s35, %s36
      %p38 = scmp.eq.s32.totalorder %s37, 0
      %s40 = sadd.s32 %s39, 1
      %s41 = scalar_select %p38, %s39, %s40
      %p44 = pneg %p38
      %p45 = scmp.eq.s32.totalorder %s15, 3
      %p46 = por %p44, %p45
      %p47 = scmp.ne.s32.totalorder %s39, %s42
      %p48 = scmp.eq.s32.totalorder %s15, 0
      %p49 = por %p47, %p48
      %p50 = scmp.ne.s32.totalorder %s39, %s42
      %p51 = scmp.eq.s32.totalorder %s20, 3
      %p52 = por %p50, %p51
      %p53 = scmp.ne.s32.totalorder %s42, %s43
      %p54 = scmp.eq.s32.totalorder %s20, 0
      %p55 = por %p53, %p54
      %p56 = scmp.ne.s32.totalorder %s42, %s43
      %p57 = scmp.eq.s32.totalorder %s21, 3
      %p58 = por %p56, %p57
      %p60 = scmp.ne.s32.totalorder %s43, %s59
      %p61 = scmp.eq.s32.totalorder %s21, 0
      %p62 = por %p60, %p61
      %s63 = smul.u32 %s23, 8
      %s64 = ssub.s32 %s63, 1
      %p65 = scmp.gt.s32.totalorder %s64, 0
      %s66 = scalar_select %p65, %s64, 0
      %s67 = smul.u32 %s30, 8
      %s68 = ssub.s32 %s67, 1
      %p69 = scmp.gt.s32.totalorder %s68, 0
      %s70 = scalar_select %p69, %s68, 0
      %s71 = ssub.s32 %s22, %s34
      %s72 = ssub.s32 %s66, %s70
      %s73 = sor.u32 %s71, %s72
      %p74 = scmp.eq.s32.totalorder %s73, 0
      %s76 = sadd.s32 %s75, 1
      %s77 = scalar_select %p74, %s75, %s76
      %p80 = pneg %p74
      %p81 = scmp.eq.s32.totalorder %s15, 3
      %p82 = por %p80, %p81
      %p83 = scmp.ne.s32.totalorder %s75, %s78
      %p84 = scmp.eq.s32.totalorder %s15, 0
      %p85 = por %p83, %p84
      %p86 = scmp.ne.s32.totalorder %s75, %s78
      %p87 = scmp.eq.s32.totalorder %s20, 3
      %p88 = por %p86, %p87
      %p89 = scmp.ne.s32.totalorder %s78, %s79
      %p90 = scmp.eq.s32.totalorder %s20, 0
      %p91 = por %p89, %p90
      %p92 = scmp.ne.s32.totalorder %s78, %s79
      %p93 = scmp.eq.s32.totalorder %s21, 3
      %p94 = por %p92, %p93
      %p96 = scmp.ne.s32.totalorder %s79, %s95
      %p97 = scmp.eq.s32.totalorder %s21, 0
      %p98 = por %p96, %p97
      %s99 = sadd.s32 %s23, 1
      %s100 = smul.u32 %s99, 8
      %p101 = scmp.lt.s32.totalorder %s100, 15
      %s102 = scalar_select %p101, %s100, 15
      %s103 = sadd.s32 %s30, 1
      %s104 = smul.u32 %s103, 8
      %p105 = scmp.lt.s32.totalorder %s104, 15
      %s106 = scalar_select %p105, %s104, 15
      %s107 = ssub.s32 %s22, %s34
      %s108 = ssub.s32 %s102, %s106
      %s109 = sor.u32 %s107, %s108
      %p110 = scmp.eq.s32.totalorder %s109, 0
      %s112 = sadd.s32 %s111, 1
      %s113 = scalar_select %p110, %s111, %s112
      %p116 = pneg %p110
      %p117 = scmp.eq.s32.totalorder %s15, 3
      %p118 = por %p116, %p117
      %p119 = scmp.ne.s32.totalorder %s111, %s114
      %p120 = scmp.eq.s32.totalorder %s15, 0
      %p121 = por %p119, %p120
      %p122 = scmp.ne.s32.totalorder %s111, %s114
      %p123 = scmp.eq.s32.totalorder %s20, 3
      %p124 = por %p122, %p123
      %p125 = scmp.ne.s32.totalorder %s114, %s115
      %p126 = scmp.eq.s32.totalorder %s20, 0
      %p127 = por %p125, %p126
      %p128 = scmp.ne.s32.totalorder %s114, %s115
      %p129 = scmp.eq.s32.totalorder %s21, 3
      %p130 = por %p128, %p129
      %p132 = scmp.ne.s32.totalorder %s115, %s131
      %p133 = scmp.eq.s32.totalorder %s21, 0
      %p134 = por %p132, %p133
      %s136 = sadd.s32 %s135, 1
      %p139 = scmp.eq.s32.totalorder %s15, 3
      %p140 = scmp.ne.s32.totalorder %s135, %s137
      %p141 = scmp.eq.s32.totalorder %s15, 0
      %p142 = por %p140, %p141
      %p143 = scmp.ne.s32.totalorder %s135, %s137
      %p144 = scmp.eq.s32.totalorder %s20, 3
      %p145 = por %p143, %p144
      %p146 = scmp.ne.s32.totalorder %s137, %s138
      %p147 = scmp.eq.s32.totalorder %s20, 0
      %p148 = por %p146, %p147
      %p149 = scmp.ne.s32.totalorder %s137, %s138
      %p150 = scmp.eq.s32.totalorder %s21, 3
      %p151 = por %p149, %p150
      %p153 = scmp.ne.s32.totalorder %s138, %s152
      %p154 = scmp.eq.s32.totalorder %s21, 0
      %p155 = por %p153, %p154
      %s156 = ssub.s32 %s22, %s34
      %s157 = ssub.s32 %s23, %s30
      %s158 = sor.u32 %s156, %s157
      %p159 = scmp.eq.s32.totalorder %s158, 0
      %s161 = sadd.s32 %s160, 1
      %s162 = scalar_select %p159, %s160, %s161
      %p165 = pneg %p159
      %p166 = scmp.eq.s32.totalorder %s15, 3
      %p167 = por %p165, %p166
      %p168 = scmp.ne.s32.totalorder %s160, %s163
      %p169 = scmp.eq.s32.totalorder %s15, 0
      %p170 = por %p168, %p169
      %p171 = scmp.ne.s32.totalorder %s160, %s163
      %p172 = scmp.eq.s32.totalorder %s20, 3
      %p173 = por %p171, %p172
      %p174 = scmp.ne.s32.totalorder %s163, %s164
      %p175 = scmp.eq.s32.totalorder %s20, 0
      %p176 = por %p174, %p175
      %p177 = scmp.ne.s32.totalorder %s163, %s164
      %p178 = scmp.eq.s32.totalorder %s21, 3
      %p179 = por %p177, %p178
      %p181 = scmp.ne.s32.totalorder %s164, %s180
      %p182 = scmp.eq.s32.totalorder %s21, 0
      %p183 = por %p181, %p182
      %s184 = ssub.s32 %s22, %s34
      %s185 = ssub.s32 %s23, %s30
      %s186 = sor.u32 %s184, %s185
      %p187 = scmp.eq.s32.totalorder %s186, 0
      %s189 = sadd.s32 %s188, 1
      %s190 = scalar_select %p187, %s188, %s189
      %p193 = pneg %p187
      %p194 = scmp.eq.s32.totalorder %s15, 3
      %p195 = por %p193, %p194
      %p196 = scmp.ne.s32.totalorder %s188, %s191
      %p197 = scmp.eq.s32.totalorder %s15, 0
      %p198 = por %p196, %p197
      %p199 = scmp.ne.s32.totalorder %s188, %s191
      %p200 = scmp.eq.s32.totalorder %s20, 3
      %p201 = por %p199, %p200
      %p202 = scmp.ne.s32.totalorder %s191, %s192
      %p203 = scmp.eq.s32.totalorder %s20, 0
      %p204 = por %p202, %p203
      %p205 = scmp.ne.s32.totalorder %s191, %s192
      %p206 = scmp.eq.s32.totalorder %s21, 3
      %p207 = por %p205, %p206
      %p209 = scmp.ne.s32.totalorder %s192, %s208
      %p210 = scmp.eq.s32.totalorder %s21, 0
      %p211 = por %p209, %p210
      %p212 = scmp.le.s32.totalorder 1, %s15
      %p213 = scmp.lt.s32.totalorder %s15, 5
      %p214 = pnand %p212, %p213
      %p215 = pneg %p214
      // Predicated region
      $region9: #{tpu_custom_call.1} parent=5 // pred_check
        _
      $region10: #{tpu_custom_call.1} parent=5 // pred_check_branch
        %217 = sbr.rel (%p214) target = $region12
      $region11: #{tpu_custom_call.1} parent=5 // pred_region
        %s218 = ssub.s32 %s15, 1
        // Predicated region
        $region13: #{tpu_custom_call.1} parent=11 // pred_check
          %p219 = pneg %p148
        $region14: #{tpu_custom_call.1} parent=11 // pred_check_branch
          %221 = sbr.rel (%p219) target = $region16
        $region15: #{tpu_custom_call.1} parent=11 // pred_region
          _
        $region16: #{tpu_custom_call.1} parent=11 // pred_fallthru
          _
      $region12: #{tpu_custom_call.1} parent=5 // pred_fallthru
        _
      %p222 = scmp.lt.s32.totalorder %s15, 4
      // Predicated region
      $region17: #{tpu_custom_call.1} parent=5 // pred_check
        %p223 = pneg %p222
      $region18: #{tpu_custom_call.1} parent=5 // pred_check_branch
        %225 = sbr.rel (%p223) target = $region20
      $region19: #{tpu_custom_call.1} parent=5 // pred_region
        // Predicated region
        $region21: #{tpu_custom_call.1} parent=19 // pred_check
          %p226 = pneg %p49
        $region22: #{tpu_custom_call.1} parent=19 // pred_check_branch
          %228 = sbr.rel (%p226) target = $region24
        $region23: #{tpu_custom_call.1} parent=19 // pred_region
          %s229 = smul.u32 8, %s23
          %p230 = scmp.lt.s32.totalorder %s22, 1
          %s231 = scalar_select %p230, %s22, 1
          %p232 = scmp.lt.s32.totalorder %s229, 15
          %s233 = scalar_select %p232, %s229, 15
          %s234 = smul.addr %s233, 2
          %s235 = smul.addr %s231, 32
          %s236 = sadd.s32 %s234, %s235
          %s237 = smul.addr %s236, 8
          %s238 = scalar_lea.vmem %s0, %s237
          %s239 = smul.u32 8, %s23
        $region24: #{tpu_custom_call.1} parent=19 // pred_fallthru
          _
        // Predicated region
        $region25: #{tpu_custom_call.1} parent=19 // pred_check
          %p240 = pneg %p85
        $region26: #{tpu_custom_call.1} parent=19 // pred_check_branch
          %242 = sbr.rel (%p240) target = $region28
        $region27: #{tpu_custom_call.1} parent=19 // pred_region
          %s243 = smul.u32 %s23, 8
          %s244 = ssub.s32 %s243, 1
          %p245 = scmp.gt.s32.totalorder %s244, 0
          %s246 = scalar_select %p245, %s244, 0
          %p247 = scmp.lt.s32.totalorder %s22, 1
          %s248 = scalar_select %p247, %s22, 1
          %p249 = scmp.lt.s32.totalorder %s246, 15
          %s250 = scalar_select %p249, %s246, 15
          %s251 = smul.addr %s250, 2
          %s252 = smul.addr %s248, 32
          %s253 = sadd.s32 %s251, %s252
          %s254 = smul.addr %s253, 8
          %s255 = scalar_lea.vmem %s1, %s254
          %s256 = smul.u32 %s23, 8
          %s257 = ssub.s32 %s256, 1
          %p258 = scmp.gt.s32.totalorder %s257, 0
          %s259 = scalar_select %p258, %s257, 0
        $region28: #{tpu_custom_call.1} parent=19 // pred_fallthru
          _
        // Predicated region
        $region29: #{tpu_custom_call.1} parent=19 // pred_check
          %p260 = pneg %p121
        $region30: #{tpu_custom_call.1} parent=19 // pred_check_branch
          %262 = sbr.rel (%p260) target = $region32
        $region31: #{tpu_custom_call.1} parent=19 // pred_region
          %s263 = sadd.s32 %s23, 1
          %s264 = smul.u32 %s263, 8
          %p265 = scmp.lt.s32.totalorder %s264, 15
          %s266 = scalar_select %p265, %s264, 15
          %p267 = scmp.lt.s32.totalorder %s22, 1
          %s268 = scalar_select %p267, %s22, 1
          %p269 = scmp.lt.s32.totalorder %s266, 15
          %s270 = scalar_select %p269, %s266, 15
          %s271 = smul.addr %s270, 2
          %s272 = smul.addr %s268, 32
          %s273 = sadd.s32 %s271, %s272
          %s274 = smul.addr %s273, 8
          %s275 = scalar_lea.vmem %s2, %s274
          %s276 = sadd.s32 %s23, 1
          %s277 = smul.u32 %s276, 8
          %p278 = scmp.lt.s32.totalorder %s277, 15
          %s279 = scalar_select %p278, %s277, 15
        $region32: #{tpu_custom_call.1} parent=19 // pred_fallthru
          _
      $region20: #{tpu_custom_call.1} parent=5 // pred_fallthru
        _
      %p280 = scmp.le.s32.totalorder 1, %s15
      %p281 = scmp.lt.s32.totalorder %s15, 5
      %p282 = pnand %p280, %p281
      %p283 = pneg %p282
      // Predicated region
      $region33: #{tpu_custom_call.1} parent=5 // pred_check
        _
      $region34: #{tpu_custom_call.1} parent=5 // pred_check_branch
        %285 = sbr.rel (%p282) target = $region36
      $region35: #{tpu_custom_call.1} parent=5 // pred_region
        %s286 = ssub.s32 %s15, 1
        %s287 = smul.u32 8, %s25
        %p288 = scmp.lt.s32.totalorder %s24, 1
        %s289 = scalar_select %p288, %s24, 1
        %p290 = scmp.lt.s32.totalorder %s287, 15
        %s291 = scalar_select %p290, %s287, 15
        %s292 = smul.addr %s291, 2
        %s293 = smul.addr %s289, 32
        %s294 = sadd.s32 %s292, %s293
        %s295 = smul.addr %s294, 8
        %s296 = scalar_lea.vmem %s0, %s295
        %p297 = pneg %p55
        %p298 = pneg %p52
        %s299 = smul.u32 %s25, 8
        %s300 = ssub.s32 %s299, 1
        %p301 = scmp.gt.s32.totalorder %s300, 0
        %s302 = scalar_select %p301, %s300, 0
        %p303 = scmp.lt.s32.totalorder %s24, 1
        %s304 = scalar_select %p303, %s24, 1
        %p305 = scmp.lt.s32.totalorder %s302, 15
        %s306 = scalar_select %p305, %s302, 15
        %s307 = smul.addr %s306, 2
        %s308 = smul.addr %s304, 32
        %s309 = sadd.s32 %s307, %s308
        %s310 = smul.addr %s309, 8
        %s311 = scalar_lea.vmem %s1, %s310
        %p312 = pneg %p91
        %p313 = pneg %p88
        %s314 = sadd.s32 %s25, 1
        %s315 = smul.u32 %s314, 8
        %p316 = scmp.lt.s32.totalorder %s315, 15
        %s317 = scalar_select %p316, %s315, 15
        %p318 = scmp.lt.s32.totalorder %s24, 1
        %s319 = scalar_select %p318, %s24, 1
        %p320 = scmp.lt.s32.totalorder %s317, 15
        %s321 = scalar_select %p320, %s317, 15
        %s322 = smul.addr %s321, 2
        %s323 = smul.addr %s319, 32
        %s324 = sadd.s32 %s322, %s323
        %s325 = smul.addr %s324, 8
        %s326 = scalar_lea.vmem %s2, %s325
        %p327 = pneg %p127
        %p328 = pneg %p124
        %p329 = pneg %p148
        %p330 = pneg %p145
        %p331 = pneg %p176
        %p332 = pneg %p173
        %s333 = smul.u32 8, %s25
        %p334 = scmp.lt.s32.totalorder %s24, 1
        %s335 = scalar_select %p334, %s24, 1
        %p336 = scmp.lt.s32.totalorder %s333, 15
        %s337 = scalar_select %p336, %s333, 15
        %s338 = smul.addr %s337, 2
        %s339 = smul.addr %s335, 32
        %s340 = sadd.s32 %s338, %s339
        %s341 = smul.addr %s340, 8
        %s342 = scalar_lea.vmem %s4, %s341
        %p343 = pneg %p204
        %p344 = pneg %p201
        %s345 = sand.u32 %s191, 1
        %s346 = scalar_lea.sflag [#allocation3], %s345
        %s347 = sand.u32 %s191, 1
        %s348 = smul.addr %s347, 2
        %s349 = scalar_lea.vmem [#allocation2], %s348
        %s350 = smul.u32 8, %s25
        %p351 = scmp.lt.s32.totalorder %s24, 1
        %s352 = scalar_select %p351, %s24, 1
        %p353 = scmp.lt.s32.totalorder %s350, 15
        %s354 = scalar_select %p353, %s350, 15
        %s355 = smul.addr %s354, 2
        %s356 = smul.addr %s352, 32
        %s357 = sadd.s32 %s355, %s356
        %s358 = smul.addr %s357, 8
        %s359 = scalar_lea.vmem %s0, %s358
        %s360 = smul.u32 8, %s25
        %s361 = smul.u32 %s25, 8
        %s362 = ssub.s32 %s361, 1
        %p363 = scmp.gt.s32.totalorder %s362, 0
        %s364 = scalar_select %p363, %s362, 0
        %p365 = scmp.lt.s32.totalorder %s24, 1
        %s366 = scalar_select %p365, %s24, 1
        %p367 = scmp.lt.s32.totalorder %s364, 15
        %s368 = scalar_select %p367, %s364, 15
        %s369 = smul.addr %s368, 2
        %s370 = smul.addr %s366, 32
        %s371 = sadd.s32 %s369, %s370
        %s372 = smul.addr %s371, 8
        %s373 = scalar_lea.vmem %s1, %s372
        %s374 = smul.u32 %s25, 8
        %s375 = ssub.s32 %s374, 1
        %p376 = scmp.gt.s32.totalorder %s375, 0
        %s377 = scalar_select %p376, %s375, 0
        %s378 = sadd.s32 %s25, 1
        %s379 = smul.u32 %s378, 8
        %p380 = scmp.lt.s32.totalorder %s379, 15
        %s381 = scalar_select %p380, %s379, 15
        %p382 = scmp.lt.s32.totalorder %s24, 1
        %s383 = scalar_select %p382, %s24, 1
        %p384 = scmp.lt.s32.totalorder %s381, 15
        %s385 = scalar_select %p384, %s381, 15
        %s386 = smul.addr %s385, 2
        %s387 = smul.addr %s383, 32
        %s388 = sadd.s32 %s386, %s387
        %s389 = smul.addr %s388, 8
        %s390 = scalar_lea.vmem %s2, %s389
        %s391 = sadd.s32 %s25, 1
        %s392 = smul.u32 %s391, 8
        %p393 = scmp.lt.s32.totalorder %s392, 15
        %s394 = scalar_select %p393, %s392, 15
        %s395 = smul.u32 8, %s25
        %p396 = scmp.lt.s32.totalorder %s24, 1
        %s397 = scalar_select %p396, %s24, 1
        %p398 = scmp.lt.s32.totalorder %s395, 15
        %s399 = scalar_select %p398, %s395, 15
        %s400 = smul.addr %s399, 2
        %s401 = smul.addr %s397, 32
        %s402 = sadd.s32 %s400, %s401
        %s403 = smul.addr %s402, 8
        %s404 = scalar_lea.vmem %s4, %s403
        %s405 = smul.u32 8, %s25
        %p406 = scmp.gt.s32.totalorder %s25, 0
        %s407 = scalar_select %p406, 1, 0
        %s408 = scvt.s32.f32 %s407
        %p409 = scmp.lt.s32.totalorder %s25, 1
        %s410 = scalar_select %p409, 1, 0
        %s411 = scvt.s32.f32 %s410
        %v412 = vld [vmem:[%s359] sm:$0xff]
        %v413 = vld [vmem:[%s359 + $0x8] sm:$0xff]
        %v414 = vld [vmem:[%s359 + $0x10] sm:$0xff]
        %v415 = vld [vmem:[%s359 + $0x18] sm:$0xff]
        %v416 = vld [vmem:[%s359 + $0x20] sm:$0xff]
        %v417 = vld [vmem:[%s359 + $0x28] sm:$0xff]
        %v418 = vld [vmem:[%s359 + $0x30] sm:$0xff]
        %v419 = vld [vmem:[%s359 + $0x38] sm:$0xff]
        %v420 = vld [vmem:[%s359 + $0x40] sm:$0xff]
        %v421 = vld [vmem:[%s359 + $0x48] sm:$0xff]
        %v422 = vld [vmem:[%s359 + $0x50] sm:$0xff]
        %v423 = vld [vmem:[%s359 + $0x58] sm:$0xff]
        %v424 = vld [vmem:[%s359 + $0x60] sm:$0xff]
        %v425 = vld [vmem:[%s359 + $0x68] sm:$0xff]
        %v426 = vld [vmem:[%s359 + $0x70] sm:$0xff]
        %v427 = vld [vmem:[%s359 + $0x78] sm:$0xff]
        %v428 = vld [vmem:[%s373] sm:$0xff]
        %v429 = vld [vmem:[%s373 + $0x8] sm:$0xff]
        %v430 = vstv %s408
        %v431 = vmul.f32 %v428, %v430
        %v432 = vmul.f32 %v429, %v430
        %v433 = vld [vmem:[%s390] sm:$0xff]
        %v434 = vld [vmem:[%s390 + $0x8] sm:$0xff]
        %v435 = vstv %s411
        %v436 = vmul.f32 %v433, %v435
        %v437 = vmul.f32 %v434, %v435
        %v438 = vlaneseq
        %v439 = vshrl.u32 %v438, 7
        %v440 = vadd.s32 %v439, 8
        %vm441 = vcmp.eq.s32.totalorder %v439, 0
        %vm442 = vcmp.eq.s32.totalorder %v440, 0
        %v443 = vrot.slane %v431, 7
        %v444 = vrot.slane %v412, 7
        %v445 = vrot.slane %v414, 7
        %v446 = vrot.slane %v416, 7
        %v447 = vrot.slane %v418, 7
        %v448 = vrot.slane %v420, 7
        %v449 = vrot.slane %v422, 7
        %v450 = vrot.slane %v424, 7
        %v451 = vrot.slane %v426, 7
        %v452 = vrot.slane %v436, 7
        %v453 = vrot.slane %v432, 7
        %v454 = vrot.slane %v413, 7
        %v455 = vrot.slane %v415, 7
        %v456 = vrot.slane %v417, 7
        %v457 = vrot.slane %v419, 7
        %v458 = vrot.slane %v421, 7
        %v459 = vrot.slane %v423, 7
        %v460 = vrot.slane %v425, 7
        %v461 = vrot.slane %v427, 7
        %v462 = vrot.slane %v437, 7
        %vm463 = vcmp.lt.s32.totalorder %v439, 1
        %v464 = vsel %vm463, %v443, %v453
        %v465 = vsel %vm463, %v444, %v454
        %v466 = vsel %vm463, %v445, %v455
        %v467 = vsel %vm463, %v446, %v456
        %v468 = vsel %vm463, %v447, %v457
        %v469 = vsel %vm463, %v448, %v458
        %v470 = vsel %vm463, %v449, %v459
        %v471 = vsel %vm463, %v450, %v460
        %v472 = vsel %vm463, %v451, %v461
        %v473 = vsel %vm463, %v452, %v462
        %v474 = vsel %vm463, %v453, %v443
        %v475 = vsel %vm463, %v454, %v444
        %v476 = vsel %vm463, %v455, %v445
        %v477 = vsel %vm463, %v456, %v446
        %v478 = vsel %vm463, %v457, %v447
        %v479 = vsel %vm463, %v458, %v448
        %v480 = vsel %vm463, %v459, %v449
        %v481 = vsel %vm463, %v460, %v450
        %v482 = vsel %vm463, %v461, %v451
        %v483 = vsel %vm463, %v462, %v452
        %v484 = vsel %vm441, 0.0, %v474
        %v485 = vsel %vm442, 0.0, %v464
        %v486 = vsel %vm441, 0.0, %v475
        %v487 = vsel %vm442, 0.0, %v465
        %v488 = vsel %vm441, 0.0, %v476
        %v489 = vsel %vm442, 0.0, %v466
        %v490 = vsel %vm441, 0.0, %v477
        %v491 = vsel %vm442, 0.0, %v467
        %v492 = vsel %vm441, 0.0, %v478
        %v493 = vsel %vm442, 0.0, %v468
        %v494 = vsel %vm441, 0.0, %v479
        %v495 = vsel %vm442, 0.0, %v469
        %v496 = vsel %vm441, 0.0, %v480
        %v497 = vsel %vm442, 0.0, %v470
        %v498 = vsel %vm441, 0.0, %v481
        %v499 = vsel %vm442, 0.0, %v471
        %v500 = vsel %vm441, 0.0, %v482
        %v501 = vsel %vm442, 0.0, %v472
        %v502 = vsel %vm441, 0.0, %v483
        %v503 = vsel %vm442, 0.0, %v473
        %vm504 = vcmp.eq.s32.totalorder %v439, 15
        %vm505 = vcmp.eq.s32.totalorder %v440, 15
        %v506 = vrot.slane %v431, 1
        %v507 = vrot.slane %v412, 1
        %v508 = vrot.slane %v414, 1
        %v509 = vrot.slane %v416, 1
        %v510 = vrot.slane %v418, 1
        %v511 = vrot.slane %v420, 1
        %v512 = vrot.slane %v422, 1
        %v513 = vrot.slane %v424, 1
        %v514 = vrot.slane %v426, 1
        %v515 = vrot.slane %v436, 1
        %v516 = vrot.slane %v432, 1
        %v517 = vrot.slane %v413, 1
        %v518 = vrot.slane %v415, 1
        %v519 = vrot.slane %v417, 1
        %v520 = vrot.slane %v419, 1
        %v521 = vrot.slane %v421, 1
        %v522 = vrot.slane %v423, 1
        %v523 = vrot.slane %v425, 1
        %v524 = vrot.slane %v427, 1
        %v525 = vrot.slane %v437, 1
        %vm526 = vcmp.lt.s32.totalorder %v439, 7
        %v527 = vsel %vm526, %v506, %v516
        %v528 = vsel %vm526, %v507, %v517
        %v529 = vsel %vm526, %v508, %v518
        %v530 = vsel %vm526, %v509, %v519
        %v531 = vsel %vm526, %v510, %v520
        %v532 = vsel %vm526, %v511, %v521
        %v533 = vsel %vm526, %v512, %v522
        %v534 = vsel %vm526, %v513, %v523
        %v535 = vsel %vm526, %v514, %v524
        %v536 = vsel %vm526, %v515, %v525
        %v537 = vsel %vm526, %v516, %v506
        %v538 = vsel %vm526, %v517, %v507
        %v539 = vsel %vm526, %v518, %v508
        %v540 = vsel %vm526, %v519, %v509
        %v541 = vsel %vm526, %v520, %v510
        %v542 = vsel %vm526, %v521, %v511
        %v543 = vsel %vm526, %v522, %v512
        %v544 = vsel %vm526, %v523, %v513
        %v545 = vsel %vm526, %v524, %v514
        %v546 = vsel %vm526, %v525, %v515
        %v547 = vsel %vm504, 0.0, %v527
        %v548 = vsel %vm505, 0.0, %v537
        %v549 = vsel %vm504, 0.0, %v528
        %v550 = vsel %vm505, 0.0, %v538
        %v551 = vsel %vm504, 0.0, %v529
        %v552 = vsel %vm505, 0.0, %v539
        %v553 = vsel %vm504, 0.0, %v530
        %v554 = vsel %vm505, 0.0, %v540
        %v555 = vsel %vm504, 0.0, %v531
        %v556 = vsel %vm505, 0.0, %v541
        %v557 = vsel %vm504, 0.0, %v532
        %v558 = vsel %vm505, 0.0, %v542
        %v559 = vsel %vm504, 0.0, %v533
        %v560 = vsel %vm505, 0.0, %v543
        %v561 = vsel %vm504, 0.0, %v534
        %v562 = vsel %vm505, 0.0, %v544
        %v563 = vsel %vm504, 0.0, %v535
        %v564 = vsel %vm505, 0.0, %v545
        %v565 = vsel %vm504, 0.0, %v536
        %v566 = vsel %vm505, 0.0, %v546
        %587 = vrot.lane.b32.xlu0 %v431, 4
        %v588 = vpop.permute.xlu0 %587
        %589 = vrot.lane.b32.xlu0 %v432, 4
        %v590 = vpop.permute.xlu0 %589
        %591 = vrot.lane.b32.xlu0 %v412, 4
        %v592 = vpop.permute.xlu0 %591
        %593 = vrot.lane.b32.xlu0 %v413, 4
        %v594 = vpop.permute.xlu0 %593
        %595 = vrot.lane.b32.xlu0 %v414, 4
        %v596 = vpop.permute.xlu0 %595
        %597 = vrot.lane.b32.xlu0 %v415, 4
        %v598 = vpop.permute.xlu0 %597
        %599 = vrot.lane.b32.xlu0 %v416, 4
        %v600 = vpop.permute.xlu0 %599
        %601 = vrot.lane.b32.xlu0 %v417, 4
        %v602 = vpop.permute.xlu0 %601
        %603 = vrot.lane.b32.xlu0 %v418, 4
        %v604 = vpop.permute.xlu0 %603
        %605 = vrot.lane.b32.xlu0 %v419, 4
        %v606 = vpop.permute.xlu0 %605
        %607 = vrot.lane.b32.xlu0 %v420, 4
        %v608 = vpop.permute.xlu0 %607
        %609 = vrot.lane.b32.xlu0 %v421, 4
        %v610 = vpop.permute.xlu0 %609
        %611 = vrot.lane.b32.xlu0 %v422, 4
        %v612 = vpop.permute.xlu0 %611
        %613 = vrot.lane.b32.xlu0 %v423, 4
        %v614 = vpop.permute.xlu0 %613
        %615 = vrot.lane.b32.xlu0 %v424, 4
        %v616 = vpop.permute.xlu0 %615
        %617 = vrot.lane.b32.xlu0 %v425, 4
        %v618 = vpop.permute.xlu0 %617
        %619 = vrot.lane.b32.xlu0 %v426, 4
        %v620 = vpop.permute.xlu0 %619
        %621 = vrot.lane.b32.xlu0 %v427, 4
        %v622 = vpop.permute.xlu0 %621
        %623 = vrot.lane.b32.xlu0 %v436, 4
        %v624 = vpop.permute.xlu0 %623
        %625 = vrot.lane.b32.xlu0 %v437, 4
        %v626 = vpop.permute.xlu0 %625
        %667 = vrot.lane.b32.xlu0 %v547, 8
        %v668 = vpop.permute.xlu0 %667
        %669 = vrot.lane.b32.xlu0 %v548, 8
        %v670 = vpop.permute.xlu0 %669
        %671 = vrot.lane.b32.xlu0 %v549, 8
        %v672 = vpop.permute.xlu0 %671
        %673 = vrot.lane.b32.xlu0 %v550, 8
        %v674 = vpop.permute.xlu0 %673
        %675 = vrot.lane.b32.xlu0 %v551, 8
        %v676 = vpop.permute.xlu0 %675
        %677 = vrot.lane.b32.xlu0 %v552, 8
        %v678 = vpop.permute.xlu0 %677
        %679 = vrot.lane.b32.xlu0 %v553, 8
        %v680 = vpop.permute.xlu0 %679
        %681 = vrot.lane.b32.xlu0 %v554, 8
        %v682 = vpop.permute.xlu0 %681
        %683 = vrot.lane.b32.xlu0 %v555, 8
        %v684 = vpop.permute.xlu0 %683
        %685 = vrot.lane.b32.xlu0 %v556, 8
        %v686 = vpop.permute.xlu0 %685
        %687 = vrot.lane.b32.xlu0 %v557, 8
        %v688 = vpop.permute.xlu0 %687
        %689 = vrot.lane.b32.xlu0 %v558, 8
        %v690 = vpop.permute.xlu0 %689
        %691 = vrot.lane.b32.xlu0 %v559, 8
        %v692 = vpop.permute.xlu0 %691
        %693 = vrot.lane.b32.xlu0 %v560, 8
        %v694 = vpop.permute.xlu0 %693
        %695 = vrot.lane.b32.xlu0 %v561, 8
        %v696 = vpop.permute.xlu0 %695
        %697 = vrot.lane.b32.xlu0 %v562, 8
        %v698 = vpop.permute.xlu0 %697
        %699 = vrot.lane.b32.xlu0 %v563, 8
        %v700 = vpop.permute.xlu0 %699
        %701 = vrot.lane.b32.xlu0 %v564, 8
        %v702 = vpop.permute.xlu0 %701
        %703 = vrot.lane.b32.xlu0 %v565, 8
        %v704 = vpop.permute.xlu0 %703
        %705 = vrot.lane.b32.xlu0 %v566, 8
        %v706 = vpop.permute.xlu0 %705
        %vm727 = vcmask 31744
        %v728 = vsel %vm727, %v484, %v588
        %v729 = vsel %vm727, %v485, %v590
        %v730 = vsel %vm727, %v486, %v592
        %v731 = vsel %vm727, %v487, %v594
        %v732 = vsel %vm727, %v488, %v596
        %v733 = vsel %vm727, %v489, %v598
        %v734 = vsel %vm727, %v490, %v600
        %v735 = vsel %vm727, %v491, %v602
        %v736 = vsel %vm727, %v492, %v604
        %v737 = vsel %vm727, %v493, %v606
        %v738 = vsel %vm727, %v494, %v608
        %v739 = vsel %vm727, %v495, %v610
        %v740 = vsel %vm727, %v496, %v612
        %v741 = vsel %vm727, %v497, %v614
        %v742 = vsel %vm727, %v498, %v616
        %v743 = vsel %vm727, %v499, %v618
        %v744 = vsel %vm727, %v500, %v620
        %v745 = vsel %vm727, %v501, %v622
        %v746 = vsel %vm727, %v502, %v624
        %v747 = vsel %vm727, %v503, %v626
        %vm748 = vcmask 64512
        %v749 = vsel %vm748, %v728, %v668
        %v750 = vsel %vm748, %v729, %v670
        %v751 = vsel %vm748, %v730, %v672
        %v752 = vsel %vm748, %v731, %v674
        %v753 = vsel %vm748, %v732, %v676
        %v754 = vsel %vm748, %v733, %v678
        %v755 = vsel %vm748, %v734, %v680
        %v756 = vsel %vm748, %v735, %v682
        %v757 = vsel %vm748, %v736, %v684
        %v758 = vsel %vm748, %v737, %v686
        %v759 = vsel %vm748, %v738, %v688
        %v760 = vsel %vm748, %v739, %v690
        %v761 = vsel %vm748, %v740, %v692
        %v762 = vsel %vm748, %v741, %v694
        %v763 = vsel %vm748, %v742, %v696
        %v764 = vsel %vm748, %v743, %v698
        %v765 = vsel %vm748, %v744, %v700
        %v766 = vsel %vm748, %v745, %v702
        %v767 = vsel %vm748, %v746, %v704
        %v768 = vsel %vm748, %v747, %v706
        %v769 = vld [vmem:[%s3] sm:$0xff]
        %v770 = vld [vmem:[%s3 + $0x8] sm:$0xf]
        %s771 = scalar_lea.vmem %s3, 16
        %v772 = vld [vmem:[%s771] sm:$0xff]
        %v773 = vld [vmem:[%s771 + $0x8] sm:$0xf]
        %vm774 = vcmask 97280
        %v776 = vsel %vm774, %v751, 0
        %v779 = vsel %vm774, %v752, 0
        %v782 = vsel %vm774, %v753, 0
        %v785 = vsel %vm774, %v754, 0
        %v788 = vsel %vm774, %v755, 0
        %v791 = vsel %vm774, %v756, 0
        %v794 = vsel %vm774, %v757, 0
        %v797 = vsel %vm774, %v758, 0
        %v800 = vsel %vm774, %v759, 0
        %v803 = vsel %vm774, %v760, 0
        %v806 = vsel %vm774, %v761, 0
        %v809 = vsel %vm774, %v762, 0
        %v812 = vsel %vm774, %v763, 0
        %v815 = vsel %vm774, %v764, 0
        %v818 = vsel %vm774, %v765, 0
        %v821 = vsel %vm774, %v766, 0
        %vm823 = vcmask 1043456
        %v825 = vsel %vm823, %v773, 0
        %827 = vmatprep.subr.mxu0 0.0
        %828 = vmatpush1.msra.mxu0 0.0
        %829 = vmatprep.subr.mxu0 0.0
        %830 = vmatpush1.msra.mxu0 0.0
        %831 = vmatprep.subr.mxu0 0.0
        %832 = vmatpush1.msra.mxu0 0.0
        %833 = vmatprep.subr.mxu0 0.0
        %834 = vmatpush1.msra.mxu0 0.0
        %835 = vmatprep.subr.mxu0 0.0
        %836 = vmatpush1.msra.mxu0 0.0
        %837 = vmatprep.subr.mxu0 0.0
        %838 = vmatpush1.msra.mxu0 0.0
        %839 = vmatprep.subr.mxu0 0.0
        %840 = vmatpush1.msra.mxu0 0.0
        %841 = vmatprep.subr.mxu0 0.0
        %842 = vmatpush1.msra.mxu0 0.0
        %843 = vmatprep.subr.mxu0 0.0
        %844 = vmatpush1.msra.mxu0 0.0
        %845 = vmatprep.subr.mxu0 0.0
        %846 = vmatpush1.msra.mxu0 0.0
        %847 = vmatprep.subr.mxu0 0.0
        %848 = vmatpush1.msra.mxu0 0.0
        %849 = vmatprep.subr.mxu0 0.0
        %850 = vmatpush1.msra.mxu0 0.0
        %851 = vmatprep.subr.mxu0 0.0
        %852 = vmatpush1.msra.mxu0 0.0
        %853 = vmatprep.subr.mxu0 0.0
        %854 = vmatpush1.msra.mxu0 0.0
        %855 = vmatprep.subr.mxu0 0.0
        %856 = vmatpush1.msra.mxu0 %v825
        %857 = vmatprep.subr.mxu0 0.0
        %858 = vmatpush1.msra.mxu0 %v772
        %859 = vmatprep.subr.mxu0 0.0
        %860 = vmatpush2.msra.mxu0 0.0
        %861 = vmatprep.subr.mxu0 0.0
        %862 = vmatpush2.msra.mxu0 0.0
        %863 = vmatprep.subr.mxu0 0.0
        %864 = vmatpush2.msra.mxu0 0.0
        %865 = vmatprep.subr.mxu0 0.0
        %866 = vmatpush2.msra.mxu0 0.0
        %867 = vmatprep.subr.mxu0 0.0
        %868 = vmatpush2.msra.mxu0 0.0
        %869 = vmatprep.subr.mxu0 0.0
        %870 = vmatpush2.msra.mxu0 0.0
        %871 = vmatprep.subr.mxu0 0.0
        %872 = vmatpush2.msra.mxu0 0.0
        %873 = vmatprep.subr.mxu0 0.0
        %874 = vmatpush2.msra.mxu0 0.0
        %875 = vmatprep.subr.mxu0 0.0
        %876 = vmatpush2.msra.mxu0 0.0
        %877 = vmatprep.subr.mxu0 0.0
        %878 = vmatpush2.msra.mxu0 0.0
        %879 = vmatprep.subr.mxu0 0.0
        %880 = vmatpush2.msra.mxu0 0.0
        %881 = vmatprep.subr.mxu0 0.0
        %882 = vmatpush2.msra.mxu0 0.0
        %883 = vmatprep.subr.mxu0 0.0
        %884 = vmatpush2.msra.mxu0 0.0
        %885 = vmatprep.subr.mxu0 0.0
        %886 = vmatpush2.msra.mxu0 0.0
        %887 = vmatprep.subr.mxu0 0.0
        %888 = vmatpush2.msra.mxu0 0.0
        %889 = vmatprep.subr.mxu0 0.0
        %890 = vmatpush2.msra.mxu0 0.0
        %891 = vmatprep.mubr.f32.mxu0 0.0
        %892 = vmatmul.mubr.f32.gmra.mxu0 %v776
        %v893 = vpop.f32.mrf.mxu0
        %v894 = vadd.f32 0.0, %v893
        %v895 = vpop.f32.mrf.mxu0
        %896 = vmatprep.mubr.f32.mxu0 0.0
        %897 = vmatmul.mubr.f32.gmra.mxu0 %v779
        %v898 = vpop.f32.mrf.mxu0
        %v899 = vadd.f32 0.0, %v898
        %v900 = vpop.f32.mrf.mxu0
        %901 = vmatprep.mubr.f32.mxu0 0.0
        %902 = vmatmul.mubr.f32.gmra.mxu0 %v782
        %v903 = vpop.f32.mrf.mxu0
        %v904 = vadd.f32 0.0, %v903
        %v905 = vpop.f32.mrf.mxu0
        %906 = vmatprep.mubr.f32.mxu0 0.0
        %907 = vmatmul.mubr.f32.gmra.mxu0 %v785
        %v908 = vpop.f32.mrf.mxu0
        %v909 = vadd.f32 0.0, %v908
        %v910 = vpop.f32.mrf.mxu0
        %911 = vmatprep.mubr.f32.mxu0 0.0
        %912 = vmatmul.mubr.f32.gmra.mxu0 %v788
        %v913 = vpop.f32.mrf.mxu0
        %v914 = vadd.f32 0.0, %v913
        %v915 = vpop.f32.mrf.mxu0
        %916 = vmatprep.mubr.f32.mxu0 0.0
        %917 = vmatmul.mubr.f32.gmra.mxu0 %v791
        %v918 = vpop.f32.mrf.mxu0
        %v919 = vadd.f32 0.0, %v918
        %v920 = vpop.f32.mrf.mxu0
        %921 = vmatprep.mubr.f32.mxu0 0.0
        %922 = vmatmul.mubr.f32.gmra.mxu0 %v794
        %v923 = vpop.f32.mrf.mxu0
        %v924 = vadd.f32 0.0, %v923
        %v925 = vpop.f32.mrf.mxu0
        %926 = vmatprep.mubr.f32.mxu0 0.0
        %927 = vmatmul.mubr.f32.gmra.mxu0 %v797
        %v928 = vpop.f32.mrf.mxu0
        %v929 = vadd.f32 0.0, %v928
        %v930 = vpop.f32.mrf.mxu0
        %931 = vmatprep.mubr.f32.mxu0 0.0
        %932 = vmatmul.mubr.f32.gmra.mxu0 %v800
        %v933 = vpop.f32.mrf.mxu0
        %v934 = vadd.f32 0.0, %v933
        %v935 = vpop.f32.mrf.mxu0
        %936 = vmatprep.mubr.f32.mxu0 0.0
        %937 = vmatmul.mubr.f32.gmra.mxu0 %v803
        %v938 = vpop.f32.mrf.mxu0
        %v939 = vadd.f32 0.0, %v938
        %v940 = vpop.f32.mrf.mxu0
        %941 = vmatprep.mubr.f32.mxu0 0.0
        %942 = vmatmul.mubr.f32.gmra.mxu0 %v806
        %v943 = vpop.f32.mrf.mxu0
        %v944 = vadd.f32 0.0, %v943
        %v945 = vpop.f32.mrf.mxu0
        %946 = vmatprep.mubr.f32.mxu0 0.0
        %947 = vmatmul.mubr.f32.gmra.mxu0 %v809
        %v948 = vpop.f32.mrf.mxu0
        %v949 = vadd.f32 0.0, %v948
        %v950 = vpop.f32.mrf.mxu0
        %951 = vmatprep.mubr.f32.mxu0 0.0
        %952 = vmatmul.mubr.f32.gmra.mxu0 %v812
        %v953 = vpop.f32.mrf.mxu0
        %v954 = vadd.f32 0.0, %v953
        %v955 = vpop.f32.mrf.mxu0
        %956 = vmatprep.mubr.f32.mxu0 0.0
        %957 = vmatmul.mubr.f32.gmra.mxu0 %v815
        %v958 = vpop.f32.mrf.mxu0
        %v959 = vadd.f32 0.0, %v958
        %v960 = vpop.f32.mrf.mxu0
        %961 = vmatprep.mubr.f32.mxu0 0.0
        %962 = vmatmul.mubr.f32.gmra.mxu0 %v818
        %v963 = vpop.f32.mrf.mxu0
        %v964 = vadd.f32 0.0, %v963
        %v965 = vpop.f32.mrf.mxu0
        %966 = vmatprep.mubr.f32.mxu0 0.0
        %967 = vmatmul.mubr.f32.gmra.mxu0 %v821
        %v968 = vpop.f32.mrf.mxu0
        %v969 = vadd.f32 0.0, %v968
        %v970 = vpop.f32.mrf.mxu0
        %971 = vdwg.mxu0
        %v973 = vsel %vm774, %v749, 0
        %v976 = vsel %vm774, %v750, 0
        %v979 = vsel %vm823, %v770, 0
        %981 = vmatprep.subr.mxu0 0.0
        %982 = vmatpush1.msra.mxu0 0.0
        %983 = vmatprep.subr.mxu0 0.0
        %984 = vmatpush1.msra.mxu0 0.0
        %985 = vmatprep.subr.mxu0 0.0
        %986 = vmatpush1.msra.mxu0 0.0
        %987 = vmatprep.subr.mxu0 0.0
        %988 = vmatpush1.msra.mxu0 0.0
        %989 = vmatprep.subr.mxu0 0.0
        %990 = vmatpush1.msra.mxu0 0.0
        %991 = vmatprep.subr.mxu0 0.0
        %992 = vmatpush1.msra.mxu0 0.0
        %993 = vmatprep.subr.mxu0 0.0
        %994 = vmatpush1.msra.mxu0 0.0
        %995 = vmatprep.subr.mxu0 0.0
        %996 = vmatpush1.msra.mxu0 0.0
        %997 = vmatprep.subr.mxu0 0.0
        %998 = vmatpush1.msra.mxu0 0.0
        %999 = vmatprep.subr.mxu0 0.0
        %1000 = vmatpush1.msra.mxu0 0.0
        %1001 = vmatprep.subr.mxu0 0.0
        %1002 = vmatpush1.msra.mxu0 0.0
        %1003 = vmatprep.subr.mxu0 0.0
        %1004 = vmatpush1.msra.mxu0 0.0
        %1005 = vmatprep.subr.mxu0 0.0
        %1006 = vmatpush1.msra.mxu0 0.0
        %1007 = vmatprep.subr.mxu0 0.0
        %1008 = vmatpush1.msra.mxu0 0.0
        %1009 = vmatprep.subr.mxu0 0.0
        %1010 = vmatpush1.msra.mxu0 %v979
        %1011 = vmatprep.subr.mxu0 0.0
        %1012 = vmatpush1.msra.mxu0 %v769
        %1013 = vmatprep.subr.mxu0 0.0
        %1014 = vmatpush2.msra.mxu0 0.0
        %1015 = vmatprep.subr.mxu0 0.0
        %1016 = vmatpush2.msra.mxu0 0.0
        %1017 = vmatprep.subr.mxu0 0.0
        %1018 = vmatpush2.msra.mxu0 0.0
        %1019 = vmatprep.subr.mxu0 0.0
        %1020 = vmatpush2.msra.mxu0 0.0
        %1021 = vmatprep.subr.mxu0 0.0
        %1022 = vmatpush2.msra.mxu0 0.0
        %1023 = vmatprep.subr.mxu0 0.0
        %1024 = vmatpush2.msra.mxu0 0.0
        %1025 = vmatprep.subr.mxu0 0.0
        %1026 = vmatpush2.msra.mxu0 0.0
        %1027 = vmatprep.subr.mxu0 0.0
        %1028 = vmatpush2.msra.mxu0 0.0
        %1029 = vmatprep.subr.mxu0 0.0
        %1030 = vmatpush2.msra.mxu0 0.0
        %1031 = vmatprep.subr.mxu0 0.0
        %1032 = vmatpush2.msra.mxu0 0.0
        %1033 = vmatprep.subr.mxu0 0.0
        %1034 = vmatpush2.msra.mxu0 0.0
        %1035 = vmatprep.subr.mxu0 0.0
        %1036 = vmatpush2.msra.mxu0 0.0
        %1037 = vmatprep.subr.mxu0 0.0
        %1038 = vmatpush2.msra.mxu0 0.0
        %1039 = vmatprep.subr.mxu0 0.0
        %1040 = vmatpush2.msra.mxu0 0.0
        %1041 = vmatprep.subr.mxu0 0.0
        %1042 = vmatpush2.msra.mxu0 0.0
        %1043 = vmatprep.subr.mxu0 0.0
        %1044 = vmatpush2.msra.mxu0 0.0
        %1045 = vmatprep.mubr.f32.mxu0 0.0
        %1046 = vmatmul.mubr.f32.gmra.mxu0 %v973
        %v1047 = vpop.f32.mrf.mxu0
        %v1048 = vadd.f32 %v894, %v1047
        %v1049 = vpop.f32.mrf.mxu0
        %1050 = vmatprep.mubr.f32.mxu0 0.0
        %1051 = vmatmul.mubr.f32.gmra.mxu0 %v976
        %v1052 = vpop.f32.mrf.mxu0
        %v1053 = vadd.f32 %v899, %v1052
        %v1054 = vpop.f32.mrf.mxu0
        %1055 = vmatprep.mubr.f32.mxu0 0.0
        %1056 = vmatmul.mubr.f32.gmra.mxu0 %v776
        %v1057 = vpop.f32.mrf.mxu0
        %v1058 = vadd.f32 %v904, %v1057
        %v1059 = vpop.f32.mrf.mxu0
        %1060 = vmatprep.mubr.f32.mxu0 0.0
        %1061 = vmatmul.mubr.f32.gmra.mxu0 %v779
        %v1062 = vpop.f32.mrf.mxu0
        %v1063 = vadd.f32 %v909, %v1062
        %v1064 = vpop.f32.mrf.mxu0
        %1065 = vmatprep.mubr.f32.mxu0 0.0
        %1066 = vmatmul.mubr.f32.gmra.mxu0 %v782
        %v1067 = vpop.f32.mrf.mxu0
        %v1068 = vadd.f32 %v914, %v1067
        %v1069 = vpop.f32.mrf.mxu0
        %1070 = vmatprep.mubr.f32.mxu0 0.0
        %1071 = vmatmul.mubr.f32.gmra.mxu0 %v785
        %v1072 = vpop.f32.mrf.mxu0
        %v1073 = vadd.f32 %v919, %v1072
        %v1074 = vpop.f32.mrf.mxu0
        %1075 = vmatprep.mubr.f32.mxu0 0.0
        %1076 = vmatmul.mubr.f32.gmra.mxu0 %v788
        %v1077 = vpop.f32.mrf.mxu0
        %v1078 = vadd.f32 %v924, %v1077
        %v1079 = vpop.f32.mrf.mxu0
        %1080 = vmatprep.mubr.f32.mxu0 0.0
        %1081 = vmatmul.mubr.f32.gmra.mxu0 %v791
        %v1082 = vpop.f32.mrf.mxu0
        %v1083 = vadd.f32 %v929, %v1082
        %v1084 = vpop.f32.mrf.mxu0
        %1085 = vmatprep.mubr.f32.mxu0 0.0
        %1086 = vmatmul.mubr.f32.gmra.mxu0 %v794
        %v1087 = vpop.f32.mrf.mxu0
        %v1088 = vadd.f32 %v934, %v1087
        %v1089 = vpop.f32.mrf.mxu0
        %1090 = vmatprep.mubr.f32.mxu0 0.0
        %1091 = vmatmul.mubr.f32.gmra.mxu0 %v797
        %v1092 = vpop.f32.mrf.mxu0
        %v1093 = vadd.f32 %v939, %v1092
        %v1094 = vpop.f32.mrf.mxu0
        %1095 = vmatprep.mubr.f32.mxu0 0.0
        %1096 = vmatmul.mubr.f32.gmra.mxu0 %v800
        %v1097 = vpop.f32.mrf.mxu0
        %v1098 = vadd.f32 %v944, %v1097
        %v1099 = vpop.f32.mrf.mxu0
        %1100 = vmatprep.mubr.f32.mxu0 0.0
        %1101 = vmatmul.mubr.f32.gmra.mxu0 %v803
        %v1102 = vpop.f32.mrf.mxu0
        %v1103 = vadd.f32 %v949, %v1102
        %v1104 = vpop.f32.mrf.mxu0
        %1105 = vmatprep.mubr.f32.mxu0 0.0
        %1106 = vmatmul.mubr.f32.gmra.mxu0 %v806
        %v1107 = vpop.f32.mrf.mxu0
        %v1108 = vadd.f32 %v954, %v1107
        %v1109 = vpop.f32.mrf.mxu0
        %1110 = vmatprep.mubr.f32.mxu0 0.0
        %1111 = vmatmul.mubr.f32.gmra.mxu0 %v809
        %v1112 = vpop.f32.mrf.mxu0
        %v1113 = vadd.f32 %v959, %v1112
        %v1114 = vpop.f32.mrf.mxu0
        %1115 = vmatprep.mubr.f32.mxu0 0.0
        %1116 = vmatmul.mubr.f32.gmra.mxu0 %v812
        %v1117 = vpop.f32.mrf.mxu0
        %v1118 = vadd.f32 %v964, %v1117
        %v1119 = vpop.f32.mrf.mxu0
        %1120 = vmatprep.mubr.f32.mxu0 0.0
        %1121 = vmatmul.mubr.f32.gmra.mxu0 %v815
        %v1122 = vpop.f32.mrf.mxu0
        %v1123 = vadd.f32 %v969, %v1122
        %v1124 = vpop.f32.mrf.mxu0
        %1125 = vdwg.mxu0
        %s1126 = scalar_lea.vmem %s3, 32
        %v1127 = vld [vmem:[%s1126] sm:$0xff]
        %v1128 = vld [vmem:[%s1126 + $0x8] sm:$0xf]
        %v1130 = vsel %vm774, %v767, 0
        %v1133 = vsel %vm774, %v768, 0
        %v1136 = vsel %vm823, %v1128, 0
        %1138 = vmatprep.subr.mxu0 0.0
        %1139 = vmatpush1.msra.mxu0 0.0
        %1140 = vmatprep.subr.mxu0 0.0
        %1141 = vmatpush1.msra.mxu0 0.0
        %1142 = vmatprep.subr.mxu0 0.0
        %1143 = vmatpush1.msra.mxu0 0.0
        %1144 = vmatprep.subr.mxu0 0.0
        %1145 = vmatpush1.msra.mxu0 0.0
        %1146 = vmatprep.subr.mxu0 0.0
        %1147 = vmatpush1.msra.mxu0 0.0
        %1148 = vmatprep.subr.mxu0 0.0
        %1149 = vmatpush1.msra.mxu0 0.0
        %1150 = vmatprep.subr.mxu0 0.0
        %1151 = vmatpush1.msra.mxu0 0.0
        %1152 = vmatprep.subr.mxu0 0.0
        %1153 = vmatpush1.msra.mxu0 0.0
        %1154 = vmatprep.subr.mxu0 0.0
        %1155 = vmatpush1.msra.mxu0 0.0
        %1156 = vmatprep.subr.mxu0 0.0
        %1157 = vmatpush1.msra.mxu0 0.0
        %1158 = vmatprep.subr.mxu0 0.0
        %1159 = vmatpush1.msra.mxu0 0.0
        %1160 = vmatprep.subr.mxu0 0.0
        %1161 = vmatpush1.msra.mxu0 0.0
        %1162 = vmatprep.subr.mxu0 0.0
        %1163 = vmatpush1.msra.mxu0 0.0
        %1164 = vmatprep.subr.mxu0 0.0
        %1165 = vmatpush1.msra.mxu0 0.0
        %1166 = vmatprep.subr.mxu0 0.0
        %1167 = vmatpush1.msra.mxu0 %v1136
        %1168 = vmatprep.subr.mxu0 0.0
        %1169 = vmatpush1.msra.mxu0 %v1127
        %1170 = vmatprep.subr.mxu0 0.0
        %1171 = vmatpush2.msra.mxu0 0.0
        %1172 = vmatprep.subr.mxu0 0.0
        %1173 = vmatpush2.msra.mxu0 0.0
        %1174 = vmatprep.subr.mxu0 0.0
        %1175 = vmatpush2.msra.mxu0 0.0
        %1176 = vmatprep.subr.mxu0 0.0
        %1177 = vmatpush2.msra.mxu0 0.0
        %1178 = vmatprep.subr.mxu0 0.0
        %1179 = vmatpush2.msra.mxu0 0.0
        %1180 = vmatprep.subr.mxu0 0.0
        %1181 = vmatpush2.msra.mxu0 0.0
        %1182 = vmatprep.subr.mxu0 0.0
        %1183 = vmatpush2.msra.mxu0 0.0
        %1184 = vmatprep.subr.mxu0 0.0
        %1185 = vmatpush2.msra.mxu0 0.0
        %1186 = vmatprep.subr.mxu0 0.0
        %1187 = vmatpush2.msra.mxu0 0.0
        %1188 = vmatprep.subr.mxu0 0.0
        %1189 = vmatpush2.msra.mxu0 0.0
        %1190 = vmatprep.subr.mxu0 0.0
        %1191 = vmatpush2.msra.mxu0 0.0
        %1192 = vmatprep.subr.mxu0 0.0
        %1193 = vmatpush2.msra.mxu0 0.0
        %1194 = vmatprep.subr.mxu0 0.0
        %1195 = vmatpush2.msra.mxu0 0.0
        %1196 = vmatprep.subr.mxu0 0.0
        %1197 = vmatpush2.msra.mxu0 0.0
        %1198 = vmatprep.subr.mxu0 0.0
        %1199 = vmatpush2.msra.mxu0 0.0
        %1200 = vmatprep.subr.mxu0 0.0
        %1201 = vmatpush2.msra.mxu0 0.0
        %1202 = vmatprep.mubr.f32.mxu0 0.0
        %1203 = vmatmul.mubr.f32.gmra.mxu0 %v782
        %v1204 = vpop.f32.mrf.mxu0
        %v1205 = vadd.f32 0.0, %v1204
        %v1206 = vpop.f32.mrf.mxu0
        %1207 = vmatprep.mubr.f32.mxu0 0.0
        %1208 = vmatmul.mubr.f32.gmra.mxu0 %v785
        %v1209 = vpop.f32.mrf.mxu0
        %v1210 = vadd.f32 0.0, %v1209
        %v1211 = vpop.f32.mrf.mxu0
        %1212 = vmatprep.mubr.f32.mxu0 0.0
        %1213 = vmatmul.mubr.f32.gmra.mxu0 %v788
        %v1214 = vpop.f32.mrf.mxu0
        %v1215 = vadd.f32 0.0, %v1214
        %v1216 = vpop.f32.mrf.mxu0
        %1217 = vmatprep.mubr.f32.mxu0 0.0
        %1218 = vmatmul.mubr.f32.gmra.mxu0 %v791
        %v1219 = vpop.f32.mrf.mxu0
        %v1220 = vadd.f32 0.0, %v1219
        %v1221 = vpop.f32.mrf.mxu0
        %1222 = vmatprep.mubr.f32.mxu0 0.0
        %1223 = vmatmul.mubr.f32.gmra.mxu0 %v794
        %v1224 = vpop.f32.mrf.mxu0
        %v1225 = vadd.f32 0.0, %v1224
        %v1226 = vpop.f32.mrf.mxu0
        %1227 = vmatprep.mubr.f32.mxu0 0.0
        %1228 = vmatmul.mubr.f32.gmra.mxu0 %v797
        %v1229 = vpop.f32.mrf.mxu0
        %v1230 = vadd.f32 0.0, %v1229
        %v1231 = vpop.f32.mrf.mxu0
        %1232 = vmatprep.mubr.f32.mxu0 0.0
        %1233 = vmatmul.mubr.f32.gmra.mxu0 %v800
        %v1234 = vpop.f32.mrf.mxu0
        %v1235 = vadd.f32 0.0, %v1234
        %v1236 = vpop.f32.mrf.mxu0
        %1237 = vmatprep.mubr.f32.mxu0 0.0
        %1238 = vmatmul.mubr.f32.gmra.mxu0 %v803
        %v1239 = vpop.f32.mrf.mxu0
        %v1240 = vadd.f32 0.0, %v1239
        %v1241 = vpop.f32.mrf.mxu0
        %1242 = vmatprep.mubr.f32.mxu0 0.0
        %1243 = vmatmul.mubr.f32.gmra.mxu0 %v806
        %v1244 = vpop.f32.mrf.mxu0
        %v1245 = vadd.f32 0.0, %v1244
        %v1246 = vpop.f32.mrf.mxu0
        %1247 = vmatprep.mubr.f32.mxu0 0.0
        %1248 = vmatmul.mubr.f32.gmra.mxu0 %v809
        %v1249 = vpop.f32.mrf.mxu0
        %v1250 = vadd.f32 0.0, %v1249
        %v1251 = vpop.f32.mrf.mxu0
        %1252 = vmatprep.mubr.f32.mxu0 0.0
        %1253 = vmatmul.mubr.f32.gmra.mxu0 %v812
        %v1254 = vpop.f32.mrf.mxu0
        %v1255 = vadd.f32 0.0, %v1254
        %v1256 = vpop.f32.mrf.mxu0
        %1257 = vmatprep.mubr.f32.mxu0 0.0
        %1258 = vmatmul.mubr.f32.gmra.mxu0 %v815
        %v1259 = vpop.f32.mrf.mxu0
        %v1260 = vadd.f32 0.0, %v1259
        %v1261 = vpop.f32.mrf.mxu0
        %1262 = vmatprep.mubr.f32.mxu0 0.0
        %1263 = vmatmul.mubr.f32.gmra.mxu0 %v818
        %v1264 = vpop.f32.mrf.mxu0
        %v1265 = vadd.f32 0.0, %v1264
        %v1266 = vpop.f32.mrf.mxu0
        %1267 = vmatprep.mubr.f32.mxu0 0.0
        %1268 = vmatmul.mubr.f32.gmra.mxu0 %v821
        %v1269 = vpop.f32.mrf.mxu0
        %v1270 = vadd.f32 0.0, %v1269
        %v1271 = vpop.f32.mrf.mxu0
        %1272 = vmatprep.mubr.f32.mxu0 0.0
        %1273 = vmatmul.mubr.f32.gmra.mxu0 %v1130
        %v1274 = vpop.f32.mrf.mxu0
        %v1275 = vadd.f32 0.0, %v1274
        %v1276 = vpop.f32.mrf.mxu0
        %1277 = vmatprep.mubr.f32.mxu0 0.0
        %1278 = vmatmul.mubr.f32.gmra.mxu0 %v1133
        %v1279 = vpop.f32.mrf.mxu0
        %v1280 = vadd.f32 0.0, %v1279
        %v1281 = vpop.f32.mrf.mxu0
        %1282 = vdwg.mxu0
        %v1283 = vadd.f32 %v1048, %v1205
        %v1284 = vadd.f32 %v1053, %v1210
        %v1285 = vadd.f32 %v1058, %v1215
        %v1286 = vadd.f32 %v1063, %v1220
        %v1287 = vadd.f32 %v1068, %v1225
        %v1288 = vadd.f32 %v1073, %v1230
        %v1289 = vadd.f32 %v1078, %v1235
        %v1290 = vadd.f32 %v1083, %v1240
        %v1291 = vadd.f32 %v1088, %v1245
        %v1292 = vadd.f32 %v1093, %v1250
        %v1293 = vadd.f32 %v1098, %v1255
        %v1294 = vadd.f32 %v1103, %v1260
        %v1295 = vadd.f32 %v1108, %v1265
        %v1296 = vadd.f32 %v1113, %v1270
        %v1297 = vadd.f32 %v1118, %v1275
        %v1298 = vadd.f32 %v1123, %v1280
        %1299 = vst.msk [vmem:[%s404] sm:$0xff] %vm748, %v1283
        %1300 = vst.msk [vmem:[%s404 + $0x8] sm:$0xff] %vm748, %v1284
        %1301 = vst.msk [vmem:[%s404 + $0x10] sm:$0xff] %vm748, %v1285
        %1302 = vst.msk [vmem:[%s404 + $0x18] sm:$0xff] %vm748, %v1286
        %1303 = vst.msk [vmem:[%s404 + $0x20] sm:$0xff] %vm748, %v1287
        %1304 = vst.msk [vmem:[%s404 + $0x28] sm:$0xff] %vm748, %v1288
        %1305 = vst.msk [vmem:[%s404 + $0x30] sm:$0xff] %vm748, %v1289
        %1306 = vst.msk [vmem:[%s404 + $0x38] sm:$0xff] %vm748, %v1290
        %1307 = vst.msk [vmem:[%s404 + $0x40] sm:$0xff] %vm748, %v1291
        %1308 = vst.msk [vmem:[%s404 + $0x48] sm:$0xff] %vm748, %v1292
        %1309 = vst.msk [vmem:[%s404 + $0x50] sm:$0xff] %vm748, %v1293
        %1310 = vst.msk [vmem:[%s404 + $0x58] sm:$0xff] %vm748, %v1294
        %1311 = vst.msk [vmem:[%s404 + $0x60] sm:$0xff] %vm748, %v1295
        %1312 = vst.msk [vmem:[%s404 + $0x68] sm:$0xff] %vm748, %v1296
        %1313 = vst.msk [vmem:[%s404 + $0x70] sm:$0xff] %vm748, %v1297
        %1314 = vst.msk [vmem:[%s404 + $0x78] sm:$0xff] %vm748, %v1298
        %v1315 = vsel %vm748, %v1283, 0.0
        %v1316 = vsel %vm748, %v1284, 0.0
        %v1317 = vadd.f32 %v1315, %v1316
        %v1318 = vsel %vm748, %v1285, 0.0
        %v1319 = vadd.f32 %v1317, %v1318
        %v1320 = vsel %vm748, %v1286, 0.0
        %v1321 = vadd.f32 %v1319, %v1320
        %v1322 = vsel %vm748, %v1287, 0.0
        %v1323 = vadd.f32 %v1321, %v1322
        %v1324 = vsel %vm748, %v1288, 0.0
        %v1325 = vadd.f32 %v1323, %v1324
        %v1326 = vsel %vm748, %v1289, 0.0
        %v1327 = vadd.f32 %v1325, %v1326
        %v1328 = vsel %vm748, %v1290, 0.0
        %v1329 = vadd.f32 %v1327, %v1328
        %v1330 = vsel %vm748, %v1291, 0.0
        %v1331 = vadd.f32 %v1329, %v1330
        %v1332 = vsel %vm748, %v1292, 0.0
        %v1333 = vadd.f32 %v1331, %v1332
        %v1334 = vsel %vm748, %v1293, 0.0
        %v1335 = vadd.f32 %v1333, %v1334
        %v1336 = vsel %vm748, %v1294, 0.0
        %v1337 = vadd.f32 %v1335, %v1336
        %v1338 = vsel %vm748, %v1295, 0.0
        %v1339 = vadd.f32 %v1337, %v1338
        %v1340 = vsel %vm748, %v1296, 0.0
        %v1341 = vadd.f32 %v1339, %v1340
        %v1342 = vsel %vm748, %v1297, 0.0
        %v1343 = vadd.f32 %v1341, %v1342
        %v1344 = vsel %vm748, %v1298, 0.0
        %v1345 = vadd.f32 %v1343, %v1344
        %v1346 = vrot.slane %v1345, 4
        %v1347 = vadd.f32 %v1345, %v1346
        %v1348 = vrot.slane %v1347, 2
        %v1349 = vadd.f32 %v1347, %v1348
        %v1350 = vrot.slane %v1349, 1
        %v1351 = vadd.f32 %v1349, %v1350
        %v1352 = vmul.f32 %v1283, %v1283
        %v1353 = vmul.f32 %v1284, %v1284
        %v1354 = vmul.f32 %v1285, %v1285
        %v1355 = vmul.f32 %v1286, %v1286
        %v1356 = vmul.f32 %v1287, %v1287
        %v1357 = vmul.f32 %v1288, %v1288
        %v1358 = vmul.f32 %v1289, %v1289
        %v1359 = vmul.f32 %v1290, %v1290
        %v1360 = vmul.f32 %v1291, %v1291
        %v1361 = vmul.f32 %v1292, %v1292
        %v1362 = vmul.f32 %v1293, %v1293
        %v1363 = vmul.f32 %v1294, %v1294
        %v1364 = vmul.f32 %v1295, %v1295
        %v1365 = vmul.f32 %v1296, %v1296
        %v1366 = vmul.f32 %v1297, %v1297
        %v1367 = vmul.f32 %v1298, %v1298
        %v1368 = vsel %vm748, %v1352, 0.0
        %v1369 = vsel %vm748, %v1353, 0.0
        %v1370 = vadd.f32 %v1368, %v1369
        %v1371 = vsel %vm748, %v1354, 0.0
        %v1372 = vadd.f32 %v1370, %v1371
        %v1373 = vsel %vm748, %v1355, 0.0
        %v1374 = vadd.f32 %v1372, %v1373
        %v1375 = vsel %vm748, %v1356, 0.0
        %v1376 = vadd.f32 %v1374, %v1375
        %v1377 = vsel %vm748, %v1357, 0.0
        %v1378 = vadd.f32 %v1376, %v1377
        %v1379 = vsel %vm748, %v1358, 0.0
        %v1380 = vadd.f32 %v1378, %v1379
        %v1381 = vsel %vm748, %v1359, 0.0
        %v1382 = vadd.f32 %v1380, %v1381
        %v1383 = vsel %vm748, %v1360, 0.0
        %v1384 = vadd.f32 %v1382, %v1383
        %v1385 = vsel %vm748, %v1361, 0.0
        %v1386 = vadd.f32 %v1384, %v1385
        %v1387 = vsel %vm748, %v1362, 0.0
        %v1388 = vadd.f32 %v1386, %v1387
        %v1389 = vsel %vm748, %v1363, 0.0
        %v1390 = vadd.f32 %v1388, %v1389
        %v1391 = vsel %vm748, %v1364, 0.0
        %v1392 = vadd.f32 %v1390, %v1391
        %v1393 = vsel %vm748, %v1365, 0.0
        %v1394 = vadd.f32 %v1392, %v1393
        %v1395 = vsel %vm748, %v1366, 0.0
        %v1396 = vadd.f32 %v1394, %v1395
        %v1397 = vsel %vm748, %v1367, 0.0
        %v1398 = vadd.f32 %v1396, %v1397
        %v1399 = vrot.slane %v1398, 4
        %v1400 = vadd.f32 %v1398, %v1399
        %v1401 = vrot.slane %v1400, 2
        %v1402 = vadd.f32 %v1400, %v1401
        %v1403 = vrot.slane %v1402, 1
        %v1404 = vadd.f32 %v1402, %v1403
        %vm1405 = vcmask 1040384
        %v1406 = vsel %vm1405, %v1351, %v1404
        %vm1407 = vcmask 58368
        %1408 = vst.msk [vmem:[%s349] sm:$0x3] %vm1407, %v1406
        %s1409 = smul.u32 8, %s25
        %p1410 = scmp.lt.s32.totalorder %s24, 1
        %s1411 = scalar_select %p1410, %s24, 1
        %p1412 = scmp.lt.s32.totalorder %s1409, 15
        %s1413 = scalar_select %p1412, %s1409, 15
        %s1414 = smul.addr %s1413, 2
        %s1415 = smul.addr %s1411, 32
        %s1416 = sadd.s32 %s1414, %s1415
        %s1417 = smul.addr %s1416, 8
        %s1418 = scalar_lea.vmem %s4, %s1417
        %s1419 = sand.u32 %s191, 1
        %s1420 = scalar_lea.sflag [#allocation3], %s1419
        %s1421 = sand.u32 %s191, 1
        %s1422 = smul.addr %s1421, 2
        %s1423 = scalar_lea.vmem [#allocation2], %s1422
        // Predicated region
        $region37: #{tpu_custom_call.1} parent=35 // pred_check
          %p1424 = pneg %p173
        $region38: #{tpu_custom_call.1} parent=35 // pred_check_branch
          %1426 = sbr.rel (%p1424) target = $region40
        $region39: #{tpu_custom_call.1} parent=35 // pred_region
          %s1427 = smul.u32 8, %s25
        $region40: #{tpu_custom_call.1} parent=35 // pred_fallthru
          _
        // Predicated region
        $region41: #{tpu_custom_call.1} parent=35 // pred_check
          %p1428 = pneg %p201
        $region42: #{tpu_custom_call.1} parent=35 // pred_check_branch
          %1430 = sbr.rel (%p1428) target = $region44
        $region43: #{tpu_custom_call.1} parent=35 // pred_region
          %s1432 = ssub.s32 32, 32
          %1433 = vsyncadd %s1420, %s1432
          %s1434 = smul.addr %s24, 2
          %s1435 = sadd.s32 %s25, %s1434
          %s1436 = smul.addr %s1435, 32
          %s1437 = scalar_lea.hbm %s5, %s1436
          %s1439 = sshll.u32 %s1423, 4
          %s1440 = int_to_ptr.vmem [resolvable:$true] %s1439
          %1442 = dma.vmem_to_hbm [thread:$0]  %s1440, 32, %s1437, %s1420
        $region44: #{tpu_custom_call.1} parent=35 // pred_fallthru
          _
      $region36: #{tpu_custom_call.1} parent=5 // pred_fallthru
        _
      %p1443 = scmp.le.s32.totalorder 2, %s15
      // Predicated region
      $region45: #{tpu_custom_call.1} parent=5 // pred_check
        %p1444 = pneg %p1443
      $region46: #{tpu_custom_call.1} parent=5 // pred_check_branch
        %1446 = sbr.rel (%p1444) target = $region48
      $region47: #{tpu_custom_call.1} parent=5 // pred_region
        %s1447 = ssub.s32 %s15, 2
        // Predicated region
        $region49: #{tpu_custom_call.1} parent=47 // pred_check
          %p1448 = pneg %p179
        $region50: #{tpu_custom_call.1} parent=47 // pred_check_branch
          %1450 = sbr.rel (%p1448) target = $region52
        $region51: #{tpu_custom_call.1} parent=47 // pred_region
          %s1451 = smul.u32 8, %s27
          %p1452 = scmp.lt.s32.totalorder %s26, 1
          %s1453 = scalar_select %p1452, %s26, 1
          %p1454 = scmp.lt.s32.totalorder %s1451, 15
          %s1455 = scalar_select %p1454, %s1451, 15
          %s1456 = smul.addr %s1455, 2
          %s1457 = smul.addr %s1453, 32
          %s1458 = sadd.s32 %s1456, %s1457
          %s1459 = smul.addr %s1458, 8
          %s1460 = scalar_lea.vmem %s4, %s1459
        $region52: #{tpu_custom_call.1} parent=47 // pred_fallthru
          _
        // Predicated region
        $region53: #{tpu_custom_call.1} parent=47 // pred_check
          %p1461 = pneg %p207
        $region54: #{tpu_custom_call.1} parent=47 // pred_check_branch
          %1463 = sbr.rel (%p1461) target = $region56
        $region55: #{tpu_custom_call.1} parent=47 // pred_region
          %s1464 = sand.u32 %s192, 1
          %s1465 = scalar_lea.sflag [#allocation3], %s1464
          %s1466 = sand.u32 %s192, 1
          %s1467 = smul.addr %s1466, 2
          %s1468 = scalar_lea.vmem [#allocation2], %s1467
          %1469 = dma.done %s1465, 32
        $region56: #{tpu_custom_call.1} parent=47 // pred_fallthru
          _
      $region48: #{tpu_custom_call.1} parent=5 // pred_fallthru
        _
    $region6: #{tpu_custom_call.1} parent=1 // loop_footer
      %s19 = sadd.s32 1, %s15
    $region7: #{tpu_custom_call.1} parent=1 // loop_footer_branch
      %14 = sbr.rel target = $region3
    $region8: #{tpu_custom_call.1} parent=1 // loop_exit
      _
    %1470 = vsyncpa [#allocation3], 1
    %s1471 = scalar_lea.sflag [#allocation3], 1
    %1472 = vsyncpa %s1471, 1

// kernel: tpu_custom_call.1
$region0: #{tpu_custom_call.1}
  #allocation0 [shape = 'u32[]', space=smem, size = 0x4, offset = 0x4, fixed_abs, tag = 'smem constant byte address 0x4 - core index']
  #allocation1 [shape = 'u32[144,128]{1,0:T(1,128)}', space=vmem, size = 0x12000, scoped, tag = 'internal scratch']
  %s0 = inlined_call_operand.vmem [shape: f32[2,16,16,4], index: 0, kind: input, shape index: {}]
  %s1 = inlined_call_operand.vmem [shape: f32[2,16,16,4], index: 1, kind: input, shape index: {}]
  %s2 = inlined_call_operand.vmem [shape: f32[2,16,16,4], index: 2, kind: input, shape index: {}]
  %s3 = inlined_call_operand.vmem [shape: f32[3,3,4,8], index: 3, kind: input, shape index: {}]
  %s4 = inlined_call_operand.vmem [shape: f32[2,16,16,8], index: 4, kind: output, shape index: {0}]
  %s5 = inlined_call_operand.hbm [shape: f32[2,2,2,8], index: 5, kind: output, shape index: {1}]
  %6 = xla_tuple %s4, %s5
  %s7 = sld [smem:[#allocation0]]
  $region57: #{tpu_custom_call.1} parent=0
    _
  %s9 = ssub.s32 1, %s7
  %s10 = scalar_select 0, %s9, %s7
  $region1: #{tpu_custom_call.1} parent=0
    #allocation2 [shape = 'u8[2048]{0}', space=vmem, size = 0x800, scoped, tag = 'output window, operand 1']
    #allocation3 [shape = 's32[2]{0}', space=sflag, size = 0x8, scoped, tag = 'scoped memory for tpu_custom_call.1']
    %11 = vsyncpa [#allocation3], 0
    %s12 = scalar_lea.sflag [#allocation3], 1
    %13 = vsyncpa %s12, 0
    loop: start=0, step=1, limit=6
    $region2: #{tpu_custom_call.1} parent=1 // loop_pre_header
      _
    $region3: #{tpu_custom_call.1} parent=1 // loop_header
      %s15 = sphi 0, %s19
      %p16 = scmp.ge.s32.totalorder %s15, 6
      %s22 = sphi 0, %s34
      %s23 = sphi 0, %s30
      %s24 = sphi 0, %s22
      %s25 = sphi 0, %s23
      %s26 = sphi 0, %s24
      %s27 = sphi 0, %s25
      %s39 = sphi 0, %s41
      %s42 = sphi 0, %s39
      %s43 = sphi 0, %s42
      %s59 = sphi 0, %s43
      %s75 = sphi 0, %s77
      %s78 = sphi 0, %s75
      %s79 = sphi 0, %s78
      %s95 = sphi 0, %s79
      %s111 = sphi 0, %s113
      %s114 = sphi 0, %s111
      %s115 = sphi 0, %s114
      %s131 = sphi 0, %s115
      %s135 = sphi 0, %s135
      %s137 = sphi 0, %s135
      %s138 = sphi 0, %s137
      %s152 = sphi 0, %s138
      %s160 = sphi 0, %s162
      %s163 = sphi 0, %s160
      %s164 = sphi 0, %s163
      %s180 = sphi 0, %s164
      %s188 = sphi 0, %s190
      %s191 = sphi 0, %s188
      %s192 = sphi 0, %s191
      %s208 = sphi 0, %s192
    $region4: #{tpu_custom_call.1} parent=1 // loop_header_branch
      %18 = sbr.rel (%p16) target = $region8
    $region5: #{tpu_custom_call.1} parent=1 // loop_body
      %s20 = ssub.s32 %s15, 1
      %s21 = ssub.s32 %s15, 2
      %s28 = sadd.s32 1, %s23
      %p29 = scmp.ge.s32.totalorder %s28, 2
      %s30 = scalar_select %p29, 0, %s28
      %s31 = sadd.s32 1, %s22
      %s32 = scalar_select %p29, %s31, %s22
      %p33 = scmp.ge.s32.totalorder %s32, 2
      %s34 = scalar_select %p33, 0, %s32
      %s35 = ssub.s32 %s22, %s34
      %s36 = ssub.s32 %s23, %s30
      %s37 = sor.u32 %s35, %s36
      %p38 = scmp.eq.s32.totalorder %s37, 0
      %s40 = sadd.s32 %s39, 1
      %s41 = scalar_select %p38, %s39, %s40
      %p44 = pneg %p38
      %p45 = scmp.eq.s32.totalorder %s15, 3
      %p46 = por %p44, %p45
      %p47 = scmp.ne.s32.totalorder %s39, %s42
      %p48 = scmp.eq.s32.totalorder %s15, 0
      %p49 = por %p47, %p48
      %p50 = scmp.ne.s32.totalorder %s39, %s42
      %p51 = scmp.eq.s32.totalorder %s20, 3
      %p52 = por %p50, %p51
      %p53 = scmp.ne.s32.totalorder %s42, %s43
      %p54 = scmp.eq.s32.totalorder %s20, 0
      %p55 = por %p53, %p54
      %p56 = scmp.ne.s32.totalorder %s42, %s43
      %p57 = scmp.eq.s32.totalorder %s21, 3
      %p58 = por %p56, %p57
      %p60 = scmp.ne.s32.totalorder %s43, %s59
      %p61 = scmp.eq.s32.totalorder %s21, 0
      %p62 = por %p60, %p61
      %s63 = smul.u32 %s23, 8
      %s64 = ssub.s32 %s63, 1
      %p65 = scmp.gt.s32.totalorder %s64, 0
      %s66 = scalar_select %p65, %s64, 0
      %s67 = smul.u32 %s30, 8
      %s68 = ssub.s32 %s67, 1
      %p69 = scmp.gt.s32.totalorder %s68, 0
      %s70 = scalar_select %p69, %s68, 0
      %s71 = ssub.s32 %s22, %s34
      %s72 = ssub.s32 %s66, %s70
      %s73 = sor.u32 %s71, %s72
      %p74 = scmp.eq.s32.totalorder %s73, 0
      %s76 = sadd.s32 %s75, 1
      %s77 = scalar_select %p74, %s75, %s76
      %p80 = pneg %p74
      %p81 = scmp.eq.s32.totalorder %s15, 3
      %p82 = por %p80, %p81
      %p83 = scmp.ne.s32.totalorder %s75, %s78
      %p84 = scmp.eq.s32.totalorder %s15, 0
      %p85 = por %p83, %p84
      %p86 = scmp.ne.s32.totalorder %s75, %s78
      %p87 = scmp.eq.s32.totalorder %s20, 3
      %p88 = por %p86, %p87
      %p89 = scmp.ne.s32.totalorder %s78, %s79
      %p90 = scmp.eq.s32.totalorder %s20, 0
      %p91 = por %p89, %p90
      %p92 = scmp.ne.s32.totalorder %s78, %s79
      %p93 = scmp.eq.s32.totalorder %s21, 3
      %p94 = por %p92, %p93
      %p96 = scmp.ne.s32.totalorder %s79, %s95
      %p97 = scmp.eq.s32.totalorder %s21, 0
      %p98 = por %p96, %p97
      %s99 = sadd.s32 %s23, 1
      %s100 = smul.u32 %s99, 8
      %p101 = scmp.lt.s32.totalorder %s100, 15
      %s102 = scalar_select %p101, %s100, 15
      %s103 = sadd.s32 %s30, 1
      %s104 = smul.u32 %s103, 8
      %p105 = scmp.lt.s32.totalorder %s104, 15
      %s106 = scalar_select %p105, %s104, 15
      %s107 = ssub.s32 %s22, %s34
      %s108 = ssub.s32 %s102, %s106
      %s109 = sor.u32 %s107, %s108
      %p110 = scmp.eq.s32.totalorder %s109, 0
      %s112 = sadd.s32 %s111, 1
      %s113 = scalar_select %p110, %s111, %s112
      %p116 = pneg %p110
      %p117 = scmp.eq.s32.totalorder %s15, 3
      %p118 = por %p116, %p117
      %p119 = scmp.ne.s32.totalorder %s111, %s114
      %p120 = scmp.eq.s32.totalorder %s15, 0
      %p121 = por %p119, %p120
      %p122 = scmp.ne.s32.totalorder %s111, %s114
      %p123 = scmp.eq.s32.totalorder %s20, 3
      %p124 = por %p122, %p123
      %p125 = scmp.ne.s32.totalorder %s114, %s115
      %p126 = scmp.eq.s32.totalorder %s20, 0
      %p127 = por %p125, %p126
      %p128 = scmp.ne.s32.totalorder %s114, %s115
      %p129 = scmp.eq.s32.totalorder %s21, 3
      %p130 = por %p128, %p129
      %p132 = scmp.ne.s32.totalorder %s115, %s131
      %p133 = scmp.eq.s32.totalorder %s21, 0
      %p134 = por %p132, %p133
      %s136 = sadd.s32 %s135, 1
      %p139 = scmp.eq.s32.totalorder %s15, 3
      %p140 = scmp.ne.s32.totalorder %s135, %s137
      %p141 = scmp.eq.s32.totalorder %s15, 0
      %p142 = por %p140, %p141
      %p143 = scmp.ne.s32.totalorder %s135, %s137
      %p144 = scmp.eq.s32.totalorder %s20, 3
      %p145 = por %p143, %p144
      %p146 = scmp.ne.s32.totalorder %s137, %s138
      %p147 = scmp.eq.s32.totalorder %s20, 0
      %p148 = por %p146, %p147
      %p149 = scmp.ne.s32.totalorder %s137, %s138
      %p150 = scmp.eq.s32.totalorder %s21, 3
      %p151 = por %p149, %p150
      %p153 = scmp.ne.s32.totalorder %s138, %s152
      %p154 = scmp.eq.s32.totalorder %s21, 0
      %p155 = por %p153, %p154
      %s156 = ssub.s32 %s22, %s34
      %s157 = ssub.s32 %s23, %s30
      %s158 = sor.u32 %s156, %s157
      %p159 = scmp.eq.s32.totalorder %s158, 0
      %s161 = sadd.s32 %s160, 1
      %s162 = scalar_select %p159, %s160, %s161
      %p165 = pneg %p159
      %p166 = scmp.eq.s32.totalorder %s15, 3
      %p167 = por %p165, %p166
      %p168 = scmp.ne.s32.totalorder %s160, %s163
      %p169 = scmp.eq.s32.totalorder %s15, 0
      %p170 = por %p168, %p169
      %p171 = scmp.ne.s32.totalorder %s160, %s163
      %p172 = scmp.eq.s32.totalorder %s20, 3
      %p173 = por %p171, %p172
      %p174 = scmp.ne.s32.totalorder %s163, %s164
      %p175 = scmp.eq.s32.totalorder %s20, 0
      %p176 = por %p174, %p175
      %p177 = scmp.ne.s32.totalorder %s163, %s164
      %p178 = scmp.eq.s32.totalorder %s21, 3
      %p179 = por %p177, %p178
      %p181 = scmp.ne.s32.totalorder %s164, %s180
      %p182 = scmp.eq.s32.totalorder %s21, 0
      %p183 = por %p181, %p182
      %s184 = ssub.s32 %s22, %s34
      %s185 = ssub.s32 %s23, %s30
      %s186 = sor.u32 %s184, %s185
      %p187 = scmp.eq.s32.totalorder %s186, 0
      %s189 = sadd.s32 %s188, 1
      %s190 = scalar_select %p187, %s188, %s189
      %p193 = pneg %p187
      %p194 = scmp.eq.s32.totalorder %s15, 3
      %p195 = por %p193, %p194
      %p196 = scmp.ne.s32.totalorder %s188, %s191
      %p197 = scmp.eq.s32.totalorder %s15, 0
      %p198 = por %p196, %p197
      %p199 = scmp.ne.s32.totalorder %s188, %s191
      %p200 = scmp.eq.s32.totalorder %s20, 3
      %p201 = por %p199, %p200
      %p202 = scmp.ne.s32.totalorder %s191, %s192
      %p203 = scmp.eq.s32.totalorder %s20, 0
      %p204 = por %p202, %p203
      %p205 = scmp.ne.s32.totalorder %s191, %s192
      %p206 = scmp.eq.s32.totalorder %s21, 3
      %p207 = por %p205, %p206
      %p209 = scmp.ne.s32.totalorder %s192, %s208
      %p210 = scmp.eq.s32.totalorder %s21, 0
      %p211 = por %p209, %p210
      %p212 = scmp.le.s32.totalorder 1, %s15
      %p213 = scmp.lt.s32.totalorder %s15, 5
      %p214 = pnand %p212, %p213
      %p215 = pneg %p214
      // Predicated region
      $region9: #{tpu_custom_call.1} parent=5 // pred_check
        _
      $region10: #{tpu_custom_call.1} parent=5 // pred_check_branch
        %217 = sbr.rel (%p214) target = $region12
      $region11: #{tpu_custom_call.1} parent=5 // pred_region
        %s218 = ssub.s32 %s15, 1
        // Predicated region
        $region13: #{tpu_custom_call.1} parent=11 // pred_check
          %p219 = pneg %p148
        $region14: #{tpu_custom_call.1} parent=11 // pred_check_branch
          %221 = sbr.rel (%p219) target = $region16
        $region15: #{tpu_custom_call.1} parent=11 // pred_region
          _
        $region16: #{tpu_custom_call.1} parent=11 // pred_fallthru
          _
      $region12: #{tpu_custom_call.1} parent=5 // pred_fallthru
        _
      %p222 = scmp.lt.s32.totalorder %s15, 4
      // Predicated region
      $region17: #{tpu_custom_call.1} parent=5 // pred_check
        %p223 = pneg %p222
      $region18: #{tpu_custom_call.1} parent=5 // pred_check_branch
        %225 = sbr.rel (%p223) target = $region20
      $region19: #{tpu_custom_call.1} parent=5 // pred_region
        // Predicated region
        $region21: #{tpu_custom_call.1} parent=19 // pred_check
          %p226 = pneg %p49
        $region22: #{tpu_custom_call.1} parent=19 // pred_check_branch
          %228 = sbr.rel (%p226) target = $region24
        $region23: #{tpu_custom_call.1} parent=19 // pred_region
          %s229 = smul.u32 8, %s23
          %p230 = scmp.lt.s32.totalorder %s22, 1
          %s231 = scalar_select %p230, %s22, 1
          %p232 = scmp.lt.s32.totalorder %s229, 15
          %s233 = scalar_select %p232, %s229, 15
          %s234 = smul.addr %s233, 2
          %s235 = smul.addr %s231, 32
          %s236 = sadd.s32 %s234, %s235
          %s237 = smul.addr %s236, 8
          %s238 = scalar_lea.vmem %s0, %s237
          %s239 = smul.u32 8, %s23
        $region24: #{tpu_custom_call.1} parent=19 // pred_fallthru
          _
        // Predicated region
        $region25: #{tpu_custom_call.1} parent=19 // pred_check
          %p240 = pneg %p85
        $region26: #{tpu_custom_call.1} parent=19 // pred_check_branch
          %242 = sbr.rel (%p240) target = $region28
        $region27: #{tpu_custom_call.1} parent=19 // pred_region
          %s243 = smul.u32 %s23, 8
          %s244 = ssub.s32 %s243, 1
          %p245 = scmp.gt.s32.totalorder %s244, 0
          %s246 = scalar_select %p245, %s244, 0
          %p247 = scmp.lt.s32.totalorder %s22, 1
          %s248 = scalar_select %p247, %s22, 1
          %p249 = scmp.lt.s32.totalorder %s246, 15
          %s250 = scalar_select %p249, %s246, 15
          %s251 = smul.addr %s250, 2
          %s252 = smul.addr %s248, 32
          %s253 = sadd.s32 %s251, %s252
          %s254 = smul.addr %s253, 8
          %s255 = scalar_lea.vmem %s1, %s254
          %s256 = smul.u32 %s23, 8
          %s257 = ssub.s32 %s256, 1
          %p258 = scmp.gt.s32.totalorder %s257, 0
          %s259 = scalar_select %p258, %s257, 0
        $region28: #{tpu_custom_call.1} parent=19 // pred_fallthru
          _
        // Predicated region
        $region29: #{tpu_custom_call.1} parent=19 // pred_check
          %p260 = pneg %p121
        $region30: #{tpu_custom_call.1} parent=19 // pred_check_branch
          %262 = sbr.rel (%p260) target = $region32
        $region31: #{tpu_custom_call.1} parent=19 // pred_region
          %s263 = sadd.s32 %s23, 1
          %s264 = smul.u32 %s263, 8
          %p265 = scmp.lt.s32.totalorder %s264, 15
          %s266 = scalar_select %p265, %s264, 15
          %p267 = scmp.lt.s32.totalorder %s22, 1
          %s268 = scalar_select %p267, %s22, 1
          %p269 = scmp.lt.s32.totalorder %s266, 15
          %s270 = scalar_select %p269, %s266, 15
          %s271 = smul.addr %s270, 2
          %s272 = smul.addr %s268, 32
          %s273 = sadd.s32 %s271, %s272
          %s274 = smul.addr %s273, 8
          %s275 = scalar_lea.vmem %s2, %s274
          %s276 = sadd.s32 %s23, 1
          %s277 = smul.u32 %s276, 8
          %p278 = scmp.lt.s32.totalorder %s277, 15
          %s279 = scalar_select %p278, %s277, 15
        $region32: #{tpu_custom_call.1} parent=19 // pred_fallthru
          _
      $region20: #{tpu_custom_call.1} parent=5 // pred_fallthru
        _
      %p280 = scmp.le.s32.totalorder 1, %s15
      %p281 = scmp.lt.s32.totalorder %s15, 5
      %p282 = pnand %p280, %p281
      %p283 = pneg %p282
      // Predicated region
      $region33: #{tpu_custom_call.1} parent=5 // pred_check
        _
      $region34: #{tpu_custom_call.1} parent=5 // pred_check_branch
        %285 = sbr.rel (%p282) target = $region36
      $region35: #{tpu_custom_call.1} parent=5 // pred_region
        %s286 = ssub.s32 %s15, 1
        %s287 = smul.u32 8, %s25
        %p288 = scmp.lt.s32.totalorder %s24, 1
        %s289 = scalar_select %p288, %s24, 1
        %p290 = scmp.lt.s32.totalorder %s287, 15
        %s291 = scalar_select %p290, %s287, 15
        %s292 = smul.addr %s291, 2
        %s293 = smul.addr %s289, 32
        %s294 = sadd.s32 %s292, %s293
        %s295 = smul.addr %s294, 8
        %s296 = scalar_lea.vmem %s0, %s295
        %p297 = pneg %p55
        %p298 = pneg %p52
        %s299 = smul.u32 %s25, 8
        %s300 = ssub.s32 %s299, 1
        %p301 = scmp.gt.s32.totalorder %s300, 0
        %s302 = scalar_select %p301, %s300, 0
        %p303 = scmp.lt.s32.totalorder %s24, 1
        %s304 = scalar_select %p303, %s24, 1
        %p305 = scmp.lt.s32.totalorder %s302, 15
        %s306 = scalar_select %p305, %s302, 15
        %s307 = smul.addr %s306, 2
        %s308 = smul.addr %s304, 32
        %s309 = sadd.s32 %s307, %s308
        %s310 = smul.addr %s309, 8
        %s311 = scalar_lea.vmem %s1, %s310
        %p312 = pneg %p91
        %p313 = pneg %p88
        %s314 = sadd.s32 %s25, 1
        %s315 = smul.u32 %s314, 8
        %p316 = scmp.lt.s32.totalorder %s315, 15
        %s317 = scalar_select %p316, %s315, 15
        %p318 = scmp.lt.s32.totalorder %s24, 1
        %s319 = scalar_select %p318, %s24, 1
        %p320 = scmp.lt.s32.totalorder %s317, 15
        %s321 = scalar_select %p320, %s317, 15
        %s322 = smul.addr %s321, 2
        %s323 = smul.addr %s319, 32
        %s324 = sadd.s32 %s322, %s323
        %s325 = smul.addr %s324, 8
        %s326 = scalar_lea.vmem %s2, %s325
        %p327 = pneg %p127
        %p328 = pneg %p124
        %p329 = pneg %p148
        %p330 = pneg %p145
        %p331 = pneg %p176
        %p332 = pneg %p173
        %s333 = smul.u32 8, %s25
        %p334 = scmp.lt.s32.totalorder %s24, 1
        %s335 = scalar_select %p334, %s24, 1
        %p336 = scmp.lt.s32.totalorder %s333, 15
        %s337 = scalar_select %p336, %s333, 15
        %s338 = smul.addr %s337, 2
        %s339 = smul.addr %s335, 32
        %s340 = sadd.s32 %s338, %s339
        %s341 = smul.addr %s340, 8
        %s342 = scalar_lea.vmem %s4, %s341
        %p343 = pneg %p204
        %p344 = pneg %p201
        %s345 = sand.u32 %s191, 1
        %s346 = scalar_lea.sflag [#allocation3], %s345
        %s347 = sand.u32 %s191, 1
        %s348 = smul.addr %s347, 2
        %s349 = scalar_lea.vmem [#allocation2], %s348
        %s350 = smul.u32 8, %s25
        %p351 = scmp.lt.s32.totalorder %s24, 1
        %s352 = scalar_select %p351, %s24, 1
        %p353 = scmp.lt.s32.totalorder %s350, 15
        %s354 = scalar_select %p353, %s350, 15
        %s355 = smul.addr %s354, 2
        %s356 = smul.addr %s352, 32
        %s357 = sadd.s32 %s355, %s356
        %s358 = smul.addr %s357, 8
        %s359 = scalar_lea.vmem %s0, %s358
        %s360 = smul.u32 8, %s25
        %s361 = smul.u32 %s25, 8
        %s362 = ssub.s32 %s361, 1
        %p363 = scmp.gt.s32.totalorder %s362, 0
        %s364 = scalar_select %p363, %s362, 0
        %p365 = scmp.lt.s32.totalorder %s24, 1
        %s366 = scalar_select %p365, %s24, 1
        %p367 = scmp.lt.s32.totalorder %s364, 15
        %s368 = scalar_select %p367, %s364, 15
        %s369 = smul.addr %s368, 2
        %s370 = smul.addr %s366, 32
        %s371 = sadd.s32 %s369, %s370
        %s372 = smul.addr %s371, 8
        %s373 = scalar_lea.vmem %s1, %s372
        %s374 = smul.u32 %s25, 8
        %s375 = ssub.s32 %s374, 1
        %p376 = scmp.gt.s32.totalorder %s375, 0
        %s377 = scalar_select %p376, %s375, 0
        %s378 = sadd.s32 %s25, 1
        %s379 = smul.u32 %s378, 8
        %p380 = scmp.lt.s32.totalorder %s379, 15
        %s381 = scalar_select %p380, %s379, 15
        %p382 = scmp.lt.s32.totalorder %s24, 1
        %s383 = scalar_select %p382, %s24, 1
        %p384 = scmp.lt.s32.totalorder %s381, 15
        %s385 = scalar_select %p384, %s381, 15
        %s386 = smul.addr %s385, 2
        %s387 = smul.addr %s383, 32
        %s388 = sadd.s32 %s386, %s387
        %s389 = smul.addr %s388, 8
        %s390 = scalar_lea.vmem %s2, %s389
        %s391 = sadd.s32 %s25, 1
        %s392 = smul.u32 %s391, 8
        %p393 = scmp.lt.s32.totalorder %s392, 15
        %s394 = scalar_select %p393, %s392, 15
        %s395 = smul.u32 8, %s25
        %p396 = scmp.lt.s32.totalorder %s24, 1
        %s397 = scalar_select %p396, %s24, 1
        %p398 = scmp.lt.s32.totalorder %s395, 15
        %s399 = scalar_select %p398, %s395, 15
        %s400 = smul.addr %s399, 2
        %s401 = smul.addr %s397, 32
        %s402 = sadd.s32 %s400, %s401
        %s403 = smul.addr %s402, 8
        %s404 = scalar_lea.vmem %s4, %s403
        %s405 = smul.u32 8, %s25
        %p406 = scmp.gt.s32.totalorder %s25, 0
        %s407 = scalar_select %p406, 1, 0
        %s408 = scvt.s32.f32 %s407
        %p409 = scmp.lt.s32.totalorder %s25, 1
        %s410 = scalar_select %p409, 1, 0
        %s411 = scvt.s32.f32 %s410
        %v412 = vld [vmem:[%s359] sm:$0xff]
        %v413 = vld [vmem:[%s359 + $0x8] sm:$0xff]
        %v414 = vld [vmem:[%s359 + $0x10] sm:$0xff]
        %v415 = vld [vmem:[%s359 + $0x18] sm:$0xff]
        %v416 = vld [vmem:[%s359 + $0x20] sm:$0xff]
        %v417 = vld [vmem:[%s359 + $0x28] sm:$0xff]
        %v418 = vld [vmem:[%s359 + $0x30] sm:$0xff]
        %v419 = vld [vmem:[%s359 + $0x38] sm:$0xff]
        %v420 = vld [vmem:[%s359 + $0x40] sm:$0xff]
        %v421 = vld [vmem:[%s359 + $0x48] sm:$0xff]
        %v422 = vld [vmem:[%s359 + $0x50] sm:$0xff]
        %v423 = vld [vmem:[%s359 + $0x58] sm:$0xff]
        %v424 = vld [vmem:[%s359 + $0x60] sm:$0xff]
        %v425 = vld [vmem:[%s359 + $0x68] sm:$0xff]
        %v426 = vld [vmem:[%s359 + $0x70] sm:$0xff]
        %v427 = vld [vmem:[%s359 + $0x78] sm:$0xff]
        %v428 = vld [vmem:[%s373] sm:$0xff]
        %v429 = vld [vmem:[%s373 + $0x8] sm:$0xff]
        %v430 = vstv %s408
        %v431 = vmul.f32 %v428, %v430
        %v432 = vmul.f32 %v429, %v430
        %v433 = vld [vmem:[%s390] sm:$0xff]
        %v434 = vld [vmem:[%s390 + $0x8] sm:$0xff]
        %v435 = vstv %s411
        %v436 = vmul.f32 %v433, %v435
        %v437 = vmul.f32 %v434, %v435
        %v438 = vlaneseq
        %v439 = vshrl.u32 %v438, 7
        %v440 = vadd.s32 %v439, 8
        %vm441 = vcmp.eq.s32.totalorder %v439, 0
        %vm442 = vcmp.eq.s32.totalorder %v440, 0
        %v443 = vrot.slane %v431, 7
        %v444 = vrot.slane %v412, 7
        %v445 = vrot.slane %v414, 7
        %v446 = vrot.slane %v416, 7
        %v447 = vrot.slane %v418, 7
        %v448 = vrot.slane %v420, 7
        %v449 = vrot.slane %v422, 7
        %v450 = vrot.slane %v424, 7
        %v451 = vrot.slane %v426, 7
        %v452 = vrot.slane %v436, 7
        %v453 = vrot.slane %v432, 7
        %v454 = vrot.slane %v413, 7
        %v455 = vrot.slane %v415, 7
        %v456 = vrot.slane %v417, 7
        %v457 = vrot.slane %v419, 7
        %v458 = vrot.slane %v421, 7
        %v459 = vrot.slane %v423, 7
        %v460 = vrot.slane %v425, 7
        %v461 = vrot.slane %v427, 7
        %v462 = vrot.slane %v437, 7
        %vm463 = vcmp.lt.s32.totalorder %v439, 1
        %v464 = vsel %vm463, %v443, %v453
        %v465 = vsel %vm463, %v444, %v454
        %v466 = vsel %vm463, %v445, %v455
        %v467 = vsel %vm463, %v446, %v456
        %v468 = vsel %vm463, %v447, %v457
        %v469 = vsel %vm463, %v448, %v458
        %v470 = vsel %vm463, %v449, %v459
        %v471 = vsel %vm463, %v450, %v460
        %v472 = vsel %vm463, %v451, %v461
        %v473 = vsel %vm463, %v452, %v462
        %v474 = vsel %vm463, %v453, %v443
        %v475 = vsel %vm463, %v454, %v444
        %v476 = vsel %vm463, %v455, %v445
        %v477 = vsel %vm463, %v456, %v446
        %v478 = vsel %vm463, %v457, %v447
        %v479 = vsel %vm463, %v458, %v448
        %v480 = vsel %vm463, %v459, %v449
        %v481 = vsel %vm463, %v460, %v450
        %v482 = vsel %vm463, %v461, %v451
        %v483 = vsel %vm463, %v462, %v452
        %v484 = vsel %vm441, 0.0, %v474
        %v485 = vsel %vm442, 0.0, %v464
        %v486 = vsel %vm441, 0.0, %v475
        %v487 = vsel %vm442, 0.0, %v465
        %v488 = vsel %vm441, 0.0, %v476
        %v489 = vsel %vm442, 0.0, %v466
        %v490 = vsel %vm441, 0.0, %v477
        %v491 = vsel %vm442, 0.0, %v467
        %v492 = vsel %vm441, 0.0, %v478
        %v493 = vsel %vm442, 0.0, %v468
        %v494 = vsel %vm441, 0.0, %v479
        %v495 = vsel %vm442, 0.0, %v469
        %v496 = vsel %vm441, 0.0, %v480
        %v497 = vsel %vm442, 0.0, %v470
        %v498 = vsel %vm441, 0.0, %v481
        %v499 = vsel %vm442, 0.0, %v471
        %v500 = vsel %vm441, 0.0, %v482
        %v501 = vsel %vm442, 0.0, %v472
        %v502 = vsel %vm441, 0.0, %v483
        %v503 = vsel %vm442, 0.0, %v473
        %vm504 = vcmp.eq.s32.totalorder %v439, 15
        %vm505 = vcmp.eq.s32.totalorder %v440, 15
        %v506 = vrot.slane %v431, 1
        %v507 = vrot.slane %v412, 1
        %v508 = vrot.slane %v414, 1
        %v509 = vrot.slane %v416, 1
        %v510 = vrot.slane %v418, 1
        %v511 = vrot.slane %v420, 1
        %v512 = vrot.slane %v422, 1
        %v513 = vrot.slane %v424, 1
        %v514 = vrot.slane %v426, 1
        %v515 = vrot.slane %v436, 1
        %v516 = vrot.slane %v432, 1
        %v517 = vrot.slane %v413, 1
        %v518 = vrot.slane %v415, 1
        %v519 = vrot.slane %v417, 1
        %v520 = vrot.slane %v419, 1
        %v521 = vrot.slane %v421, 1
        %v522 = vrot.slane %v423, 1
        %v523 = vrot.slane %v425, 1
        %v524 = vrot.slane %v427, 1
        %v525 = vrot.slane %v437, 1
        %vm526 = vcmp.lt.s32.totalorder %v439, 7
        %v527 = vsel %vm526, %v506, %v516
        %v528 = vsel %vm526, %v507, %v517
        %v529 = vsel %vm526, %v508, %v518
        %v530 = vsel %vm526, %v509, %v519
        %v531 = vsel %vm526, %v510, %v520
        %v532 = vsel %vm526, %v511, %v521
        %v533 = vsel %vm526, %v512, %v522
        %v534 = vsel %vm526, %v513, %v523
        %v535 = vsel %vm526, %v514, %v524
        %v536 = vsel %vm526, %v515, %v525
        %v537 = vsel %vm526, %v516, %v506
        %v538 = vsel %vm526, %v517, %v507
        %v539 = vsel %vm526, %v518, %v508
        %v540 = vsel %vm526, %v519, %v509
        %v541 = vsel %vm526, %v520, %v510
        %v542 = vsel %vm526, %v521, %v511
        %v543 = vsel %vm526, %v522, %v512
        %v544 = vsel %vm526, %v523, %v513
        %v545 = vsel %vm526, %v524, %v514
        %v546 = vsel %vm526, %v525, %v515
        %v547 = vsel %vm504, 0.0, %v527
        %v548 = vsel %vm505, 0.0, %v537
        %v549 = vsel %vm504, 0.0, %v528
        %v550 = vsel %vm505, 0.0, %v538
        %v551 = vsel %vm504, 0.0, %v529
        %v552 = vsel %vm505, 0.0, %v539
        %v553 = vsel %vm504, 0.0, %v530
        %v554 = vsel %vm505, 0.0, %v540
        %v555 = vsel %vm504, 0.0, %v531
        %v556 = vsel %vm505, 0.0, %v541
        %v557 = vsel %vm504, 0.0, %v532
        %v558 = vsel %vm505, 0.0, %v542
        %v559 = vsel %vm504, 0.0, %v533
        %v560 = vsel %vm505, 0.0, %v543
        %v561 = vsel %vm504, 0.0, %v534
        %v562 = vsel %vm505, 0.0, %v544
        %v563 = vsel %vm504, 0.0, %v535
        %v564 = vsel %vm505, 0.0, %v545
        %v565 = vsel %vm504, 0.0, %v536
        %v566 = vsel %vm505, 0.0, %v546
        %v567 = vld [vmem:[%s3] sm:$0xf]
        %s568 = scalar_lea.vmem %s3, 4
        %v569 = vld [vmem:[%s568] sm:$0xf]
        %vm570 = vcmask 31744
        %v572 = vsel %vm570, %v431, 0
        %v575 = vsel %vm570, %v432, 0
        %v578 = vsel %vm570, %v412, 0
        %v581 = vsel %vm570, %v413, 0
        %v584 = vsel %vm570, %v414, 0
        %v587 = vsel %vm570, %v415, 0
        %v590 = vsel %vm570, %v416, 0
        %v593 = vsel %vm570, %v417, 0
        %v596 = vsel %vm570, %v418, 0
        %v599 = vsel %vm570, %v419, 0
        %v602 = vsel %vm570, %v420, 0
        %v605 = vsel %vm570, %v421, 0
        %v608 = vsel %vm570, %v422, 0
        %v611 = vsel %vm570, %v423, 0
        %v614 = vsel %vm570, %v424, 0
        %v617 = vsel %vm570, %v425, 0
        %vm619 = vcmask 1043456
        %v621 = vsel %vm619, %v569, 0
        %623 = vmatprep.subr.mxu0 0.0
        %624 = vmatpush1.msra.mxu0 0.0
        %625 = vmatprep.subr.mxu0 0.0
        %626 = vmatpush1.msra.mxu0 0.0
        %627 = vmatprep.subr.mxu0 0.0
        %628 = vmatpush1.msra.mxu0 0.0
        %629 = vmatprep.subr.mxu0 0.0
        %630 = vmatpush1.msra.mxu0 0.0
        %631 = vmatprep.subr.mxu0 0.0
        %632 = vmatpush1.msra.mxu0 0.0
        %633 = vmatprep.subr.mxu0 0.0
        %634 = vmatpush1.msra.mxu0 0.0
        %635 = vmatprep.subr.mxu0 0.0
        %636 = vmatpush1.msra.mxu0 0.0
        %637 = vmatprep.subr.mxu0 0.0
        %638 = vmatpush1.msra.mxu0 0.0
        %639 = vmatprep.subr.mxu0 0.0
        %640 = vmatpush1.msra.mxu0 0.0
        %641 = vmatprep.subr.mxu0 0.0
        %642 = vmatpush1.msra.mxu0 0.0
        %643 = vmatprep.subr.mxu0 0.0
        %644 = vmatpush1.msra.mxu0 0.0
        %645 = vmatprep.subr.mxu0 0.0
        %646 = vmatpush1.msra.mxu0 0.0
        %647 = vmatprep.subr.mxu0 0.0
        %648 = vmatpush1.msra.mxu0 0.0
        %649 = vmatprep.subr.mxu0 0.0
        %650 = vmatpush1.msra.mxu0 0.0
        %651 = vmatprep.subr.mxu0 0.0
        %652 = vmatpush1.msra.mxu0 0.0
        %653 = vmatprep.subr.mxu0 0.0
        %654 = vmatpush1.msra.mxu0 %v621
        %655 = vmatprep.subr.mxu0 0.0
        %656 = vmatpush2.msra.mxu0 0.0
        %657 = vmatprep.subr.mxu0 0.0
        %658 = vmatpush2.msra.mxu0 0.0
        %659 = vmatprep.subr.mxu0 0.0
        %660 = vmatpush2.msra.mxu0 0.0
        %661 = vmatprep.subr.mxu0 0.0
        %662 = vmatpush2.msra.mxu0 0.0
        %663 = vmatprep.subr.mxu0 0.0
        %664 = vmatpush2.msra.mxu0 0.0
        %665 = vmatprep.subr.mxu0 0.0
        %666 = vmatpush2.msra.mxu0 0.0
        %667 = vmatprep.subr.mxu0 0.0
        %668 = vmatpush2.msra.mxu0 0.0
        %669 = vmatprep.subr.mxu0 0.0
        %670 = vmatpush2.msra.mxu0 0.0
        %671 = vmatprep.subr.mxu0 0.0
        %672 = vmatpush2.msra.mxu0 0.0
        %673 = vmatprep.subr.mxu0 0.0
        %674 = vmatpush2.msra.mxu0 0.0
        %675 = vmatprep.subr.mxu0 0.0
        %676 = vmatpush2.msra.mxu0 0.0
        %677 = vmatprep.subr.mxu0 0.0
        %678 = vmatpush2.msra.mxu0 0.0
        %679 = vmatprep.subr.mxu0 0.0
        %680 = vmatpush2.msra.mxu0 0.0
        %681 = vmatprep.subr.mxu0 0.0
        %682 = vmatpush2.msra.mxu0 0.0
        %683 = vmatprep.subr.mxu0 0.0
        %684 = vmatpush2.msra.mxu0 0.0
        %685 = vmatprep.subr.mxu0 0.0
        %686 = vmatpush2.msra.mxu0 0.0
        %687 = vmatprep.mubr.f32.mxu0 0.0
        %688 = vmatmul.mubr.f32.gmra.mxu0 %v572
        %v689 = vpop.f32.mrf.mxu0
        %v690 = vadd.f32 0.0, %v689
        %v691 = vpop.f32.mrf.mxu0
        %692 = vmatprep.mubr.f32.mxu0 0.0
        %693 = vmatmul.mubr.f32.gmra.mxu0 %v575
        %v694 = vpop.f32.mrf.mxu0
        %v695 = vadd.f32 0.0, %v694
        %v696 = vpop.f32.mrf.mxu0
        %697 = vmatprep.mubr.f32.mxu0 0.0
        %698 = vmatmul.mubr.f32.gmra.mxu0 %v578
        %v699 = vpop.f32.mrf.mxu0
        %v700 = vadd.f32 0.0, %v699
        %v701 = vpop.f32.mrf.mxu0
        %702 = vmatprep.mubr.f32.mxu0 0.0
        %703 = vmatmul.mubr.f32.gmra.mxu0 %v581
        %v704 = vpop.f32.mrf.mxu0
        %v705 = vadd.f32 0.0, %v704
        %v706 = vpop.f32.mrf.mxu0
        %707 = vmatprep.mubr.f32.mxu0 0.0
        %708 = vmatmul.mubr.f32.gmra.mxu0 %v584
        %v709 = vpop.f32.mrf.mxu0
        %v710 = vadd.f32 0.0, %v709
        %v711 = vpop.f32.mrf.mxu0
        %712 = vmatprep.mubr.f32.mxu0 0.0
        %713 = vmatmul.mubr.f32.gmra.mxu0 %v587
        %v714 = vpop.f32.mrf.mxu0
        %v715 = vadd.f32 0.0, %v714
        %v716 = vpop.f32.mrf.mxu0
        %717 = vmatprep.mubr.f32.mxu0 0.0
        %718 = vmatmul.mubr.f32.gmra.mxu0 %v590
        %v719 = vpop.f32.mrf.mxu0
        %v720 = vadd.f32 0.0, %v719
        %v721 = vpop.f32.mrf.mxu0
        %722 = vmatprep.mubr.f32.mxu0 0.0
        %723 = vmatmul.mubr.f32.gmra.mxu0 %v593
        %v724 = vpop.f32.mrf.mxu0
        %v725 = vadd.f32 0.0, %v724
        %v726 = vpop.f32.mrf.mxu0
        %727 = vmatprep.mubr.f32.mxu0 0.0
        %728 = vmatmul.mubr.f32.gmra.mxu0 %v596
        %v729 = vpop.f32.mrf.mxu0
        %v730 = vadd.f32 0.0, %v729
        %v731 = vpop.f32.mrf.mxu0
        %732 = vmatprep.mubr.f32.mxu0 0.0
        %733 = vmatmul.mubr.f32.gmra.mxu0 %v599
        %v734 = vpop.f32.mrf.mxu0
        %v735 = vadd.f32 0.0, %v734
        %v736 = vpop.f32.mrf.mxu0
        %737 = vmatprep.mubr.f32.mxu0 0.0
        %738 = vmatmul.mubr.f32.gmra.mxu0 %v602
        %v739 = vpop.f32.mrf.mxu0
        %v740 = vadd.f32 0.0, %v739
        %v741 = vpop.f32.mrf.mxu0
        %742 = vmatprep.mubr.f32.mxu0 0.0
        %743 = vmatmul.mubr.f32.gmra.mxu0 %v605
        %v744 = vpop.f32.mrf.mxu0
        %v745 = vadd.f32 0.0, %v744
        %v746 = vpop.f32.mrf.mxu0
        %747 = vmatprep.mubr.f32.mxu0 0.0
        %748 = vmatmul.mubr.f32.gmra.mxu0 %v608
        %v749 = vpop.f32.mrf.mxu0
        %v750 = vadd.f32 0.0, %v749
        %v751 = vpop.f32.mrf.mxu0
        %752 = vmatprep.mubr.f32.mxu0 0.0
        %753 = vmatmul.mubr.f32.gmra.mxu0 %v611
        %v754 = vpop.f32.mrf.mxu0
        %v755 = vadd.f32 0.0, %v754
        %v756 = vpop.f32.mrf.mxu0
        %757 = vmatprep.mubr.f32.mxu0 0.0
        %758 = vmatmul.mubr.f32.gmra.mxu0 %v614
        %v759 = vpop.f32.mrf.mxu0
        %v760 = vadd.f32 0.0, %v759
        %v761 = vpop.f32.mrf.mxu0
        %762 = vmatprep.mubr.f32.mxu0 0.0
        %763 = vmatmul.mubr.f32.gmra.mxu0 %v617
        %v764 = vpop.f32.mrf.mxu0
        %v765 = vadd.f32 0.0, %v764
        %v766 = vpop.f32.mrf.mxu0
        %767 = vdwg.mxu0
        %v769 = vsel %vm570, %v484, 0
        %v772 = vsel %vm570, %v485, 0
        %v775 = vsel %vm570, %v486, 0
        %v778 = vsel %vm570, %v487, 0
        %v781 = vsel %vm570, %v488, 0
        %v784 = vsel %vm570, %v489, 0
        %v787 = vsel %vm570, %v490, 0
        %v790 = vsel %vm570, %v491, 0
        %v793 = vsel %vm570, %v492, 0
        %v796 = vsel %vm570, %v493, 0
        %v799 = vsel %vm570, %v494, 0
        %v802 = vsel %vm570, %v495, 0
        %v805 = vsel %vm570, %v496, 0
        %v808 = vsel %vm570, %v497, 0
        %v811 = vsel %vm570, %v498, 0
        %v814 = vsel %vm570, %v499, 0
        %v817 = vsel %vm619, %v567, 0
        %819 = vmatprep.subr.mxu0 0.0
        %820 = vmatpush1.msra.mxu0 0.0
        %821 = vmatprep.subr.mxu0 0.0
        %822 = vmatpush1.msra.mxu0 0.0
        %823 = vmatprep.subr.mxu0 0.0
        %824 = vmatpush1.msra.mxu0 0.0
        %825 = vmatprep.subr.mxu0 0.0
        %826 = vmatpush1.msra.mxu0 0.0
        %827 = vmatprep.subr.mxu0 0.0
        %828 = vmatpush1.msra.mxu0 0.0
        %829 = vmatprep.subr.mxu0 0.0
        %830 = vmatpush1.msra.mxu0 0.0
        %831 = vmatprep.subr.mxu0 0.0
        %832 = vmatpush1.msra.mxu0 0.0
        %833 = vmatprep.subr.mxu0 0.0
        %834 = vmatpush1.msra.mxu0 0.0
        %835 = vmatprep.subr.mxu0 0.0
        %836 = vmatpush1.msra.mxu0 0.0
        %837 = vmatprep.subr.mxu0 0.0
        %838 = vmatpush1.msra.mxu0 0.0
        %839 = vmatprep.subr.mxu0 0.0
        %840 = vmatpush1.msra.mxu0 0.0
        %841 = vmatprep.subr.mxu0 0.0
        %842 = vmatpush1.msra.mxu0 0.0
        %843 = vmatprep.subr.mxu0 0.0
        %844 = vmatpush1.msra.mxu0 0.0
        %845 = vmatprep.subr.mxu0 0.0
        %846 = vmatpush1.msra.mxu0 0.0
        %847 = vmatprep.subr.mxu0 0.0
        %848 = vmatpush1.msra.mxu0 0.0
        %849 = vmatprep.subr.mxu0 0.0
        %850 = vmatpush1.msra.mxu0 %v817
        %851 = vmatprep.subr.mxu0 0.0
        %852 = vmatpush2.msra.mxu0 0.0
        %853 = vmatprep.subr.mxu0 0.0
        %854 = vmatpush2.msra.mxu0 0.0
        %855 = vmatprep.subr.mxu0 0.0
        %856 = vmatpush2.msra.mxu0 0.0
        %857 = vmatprep.subr.mxu0 0.0
        %858 = vmatpush2.msra.mxu0 0.0
        %859 = vmatprep.subr.mxu0 0.0
        %860 = vmatpush2.msra.mxu0 0.0
        %861 = vmatprep.subr.mxu0 0.0
        %862 = vmatpush2.msra.mxu0 0.0
        %863 = vmatprep.subr.mxu0 0.0
        %864 = vmatpush2.msra.mxu0 0.0
        %865 = vmatprep.subr.mxu0 0.0
        %866 = vmatpush2.msra.mxu0 0.0
        %867 = vmatprep.subr.mxu0 0.0
        %868 = vmatpush2.msra.mxu0 0.0
        %869 = vmatprep.subr.mxu0 0.0
        %870 = vmatpush2.msra.mxu0 0.0
        %871 = vmatprep.subr.mxu0 0.0
        %872 = vmatpush2.msra.mxu0 0.0
        %873 = vmatprep.subr.mxu0 0.0
        %874 = vmatpush2.msra.mxu0 0.0
        %875 = vmatprep.subr.mxu0 0.0
        %876 = vmatpush2.msra.mxu0 0.0
        %877 = vmatprep.subr.mxu0 0.0
        %878 = vmatpush2.msra.mxu0 0.0
        %879 = vmatprep.subr.mxu0 0.0
        %880 = vmatpush2.msra.mxu0 0.0
        %881 = vmatprep.subr.mxu0 0.0
        %882 = vmatpush2.msra.mxu0 0.0
        %883 = vmatprep.mubr.f32.mxu0 0.0
        %884 = vmatmul.mubr.f32.gmra.mxu0 %v769
        %v885 = vpop.f32.mrf.mxu0
        %v886 = vadd.f32 %v690, %v885
        %v887 = vpop.f32.mrf.mxu0
        %888 = vmatprep.mubr.f32.mxu0 0.0
        %889 = vmatmul.mubr.f32.gmra.mxu0 %v772
        %v890 = vpop.f32.mrf.mxu0
        %v891 = vadd.f32 %v695, %v890
        %v892 = vpop.f32.mrf.mxu0
        %893 = vmatprep.mubr.f32.mxu0 0.0
        %894 = vmatmul.mubr.f32.gmra.mxu0 %v775
        %v895 = vpop.f32.mrf.mxu0
        %v896 = vadd.f32 %v700, %v895
        %v897 = vpop.f32.mrf.mxu0
        %898 = vmatprep.mubr.f32.mxu0 0.0
        %899 = vmatmul.mubr.f32.gmra.mxu0 %v778
        %v900 = vpop.f32.mrf.mxu0
        %v901 = vadd.f32 %v705, %v900
        %v902 = vpop.f32.mrf.mxu0
        %903 = vmatprep.mubr.f32.mxu0 0.0
        %904 = vmatmul.mubr.f32.gmra.mxu0 %v781
        %v905 = vpop.f32.mrf.mxu0
        %v906 = vadd.f32 %v710, %v905
        %v907 = vpop.f32.mrf.mxu0
        %908 = vmatprep.mubr.f32.mxu0 0.0
        %909 = vmatmul.mubr.f32.gmra.mxu0 %v784
        %v910 = vpop.f32.mrf.mxu0
        %v911 = vadd.f32 %v715, %v910
        %v912 = vpop.f32.mrf.mxu0
        %913 = vmatprep.mubr.f32.mxu0 0.0
        %914 = vmatmul.mubr.f32.gmra.mxu0 %v787
        %v915 = vpop.f32.mrf.mxu0
        %v916 = vadd.f32 %v720, %v915
        %v917 = vpop.f32.mrf.mxu0
        %918 = vmatprep.mubr.f32.mxu0 0.0
        %919 = vmatmul.mubr.f32.gmra.mxu0 %v790
        %v920 = vpop.f32.mrf.mxu0
        %v921 = vadd.f32 %v725, %v920
        %v922 = vpop.f32.mrf.mxu0
        %923 = vmatprep.mubr.f32.mxu0 0.0
        %924 = vmatmul.mubr.f32.gmra.mxu0 %v793
        %v925 = vpop.f32.mrf.mxu0
        %v926 = vadd.f32 %v730, %v925
        %v927 = vpop.f32.mrf.mxu0
        %928 = vmatprep.mubr.f32.mxu0 0.0
        %929 = vmatmul.mubr.f32.gmra.mxu0 %v796
        %v930 = vpop.f32.mrf.mxu0
        %v931 = vadd.f32 %v735, %v930
        %v932 = vpop.f32.mrf.mxu0
        %933 = vmatprep.mubr.f32.mxu0 0.0
        %934 = vmatmul.mubr.f32.gmra.mxu0 %v799
        %v935 = vpop.f32.mrf.mxu0
        %v936 = vadd.f32 %v740, %v935
        %v937 = vpop.f32.mrf.mxu0
        %938 = vmatprep.mubr.f32.mxu0 0.0
        %939 = vmatmul.mubr.f32.gmra.mxu0 %v802
        %v940 = vpop.f32.mrf.mxu0
        %v941 = vadd.f32 %v745, %v940
        %v942 = vpop.f32.mrf.mxu0
        %943 = vmatprep.mubr.f32.mxu0 0.0
        %944 = vmatmul.mubr.f32.gmra.mxu0 %v805
        %v945 = vpop.f32.mrf.mxu0
        %v946 = vadd.f32 %v750, %v945
        %v947 = vpop.f32.mrf.mxu0
        %948 = vmatprep.mubr.f32.mxu0 0.0
        %949 = vmatmul.mubr.f32.gmra.mxu0 %v808
        %v950 = vpop.f32.mrf.mxu0
        %v951 = vadd.f32 %v755, %v950
        %v952 = vpop.f32.mrf.mxu0
        %953 = vmatprep.mubr.f32.mxu0 0.0
        %954 = vmatmul.mubr.f32.gmra.mxu0 %v811
        %v955 = vpop.f32.mrf.mxu0
        %v956 = vadd.f32 %v760, %v955
        %v957 = vpop.f32.mrf.mxu0
        %958 = vmatprep.mubr.f32.mxu0 0.0
        %959 = vmatmul.mubr.f32.gmra.mxu0 %v814
        %v960 = vpop.f32.mrf.mxu0
        %v961 = vadd.f32 %v765, %v960
        %v962 = vpop.f32.mrf.mxu0
        %963 = vdwg.mxu0
        %s964 = scalar_lea.vmem %s3, 8
        %v965 = vld [vmem:[%s964] sm:$0xf]
        %v967 = vsel %vm570, %v547, 0
        %v970 = vsel %vm570, %v548, 0
        %v973 = vsel %vm570, %v549, 0
        %v976 = vsel %vm570, %v550, 0
        %v979 = vsel %vm570, %v551, 0
        %v982 = vsel %vm570, %v552, 0
        %v985 = vsel %vm570, %v553, 0
        %v988 = vsel %vm570, %v554, 0
        %v991 = vsel %vm570, %v555, 0
        %v994 = vsel %vm570, %v556, 0
        %v997 = vsel %vm570, %v557, 0
        %v1000 = vsel %vm570, %v558, 0
        %v1003 = vsel %vm570, %v559, 0
        %v1006 = vsel %vm570, %v560, 0
        %v1009 = vsel %vm570, %v561, 0
        %v1012 = vsel %vm570, %v562, 0
        %v1015 = vsel %vm619, %v965, 0
        %1017 = vmatprep.subr.mxu0 0.0
        %1018 = vmatpush1.msra.mxu0 0.0
        %1019 = vmatprep.subr.mxu0 0.0
        %1020 = vmatpush1.msra.mxu0 0.0
        %1021 = vmatprep.subr.mxu0 0.0
        %1022 = vmatpush1.msra.mxu0 0.0
        %1023 = vmatprep.subr.mxu0 0.0
        %1024 = vmatpush1.msra.mxu0 0.0
        %1025 = vmatprep.subr.mxu0 0.0
        %1026 = vmatpush1.msra.mxu0 0.0
        %1027 = vmatprep.subr.mxu0 0.0
        %1028 = vmatpush1.msra.mxu0 0.0
        %1029 = vmatprep.subr.mxu0 0.0
        %1030 = vmatpush1.msra.mxu0 0.0
        %1031 = vmatprep.subr.mxu0 0.0
        %1032 = vmatpush1.msra.mxu0 0.0
        %1033 = vmatprep.subr.mxu0 0.0
        %1034 = vmatpush1.msra.mxu0 0.0
        %1035 = vmatprep.subr.mxu0 0.0
        %1036 = vmatpush1.msra.mxu0 0.0
        %1037 = vmatprep.subr.mxu0 0.0
        %1038 = vmatpush1.msra.mxu0 0.0
        %1039 = vmatprep.subr.mxu0 0.0
        %1040 = vmatpush1.msra.mxu0 0.0
        %1041 = vmatprep.subr.mxu0 0.0
        %1042 = vmatpush1.msra.mxu0 0.0
        %1043 = vmatprep.subr.mxu0 0.0
        %1044 = vmatpush1.msra.mxu0 0.0
        %1045 = vmatprep.subr.mxu0 0.0
        %1046 = vmatpush1.msra.mxu0 0.0
        %1047 = vmatprep.subr.mxu0 0.0
        %1048 = vmatpush1.msra.mxu0 %v1015
        %1049 = vmatprep.subr.mxu0 0.0
        %1050 = vmatpush2.msra.mxu0 0.0
        %1051 = vmatprep.subr.mxu0 0.0
        %1052 = vmatpush2.msra.mxu0 0.0
        %1053 = vmatprep.subr.mxu0 0.0
        %1054 = vmatpush2.msra.mxu0 0.0
        %1055 = vmatprep.subr.mxu0 0.0
        %1056 = vmatpush2.msra.mxu0 0.0
        %1057 = vmatprep.subr.mxu0 0.0
        %1058 = vmatpush2.msra.mxu0 0.0
        %1059 = vmatprep.subr.mxu0 0.0
        %1060 = vmatpush2.msra.mxu0 0.0
        %1061 = vmatprep.subr.mxu0 0.0
        %1062 = vmatpush2.msra.mxu0 0.0
        %1063 = vmatprep.subr.mxu0 0.0
        %1064 = vmatpush2.msra.mxu0 0.0
        %1065 = vmatprep.subr.mxu0 0.0
        %1066 = vmatpush2.msra.mxu0 0.0
        %1067 = vmatprep.subr.mxu0 0.0
        %1068 = vmatpush2.msra.mxu0 0.0
        %1069 = vmatprep.subr.mxu0 0.0
        %1070 = vmatpush2.msra.mxu0 0.0
        %1071 = vmatprep.subr.mxu0 0.0
        %1072 = vmatpush2.msra.mxu0 0.0
        %1073 = vmatprep.subr.mxu0 0.0
        %1074 = vmatpush2.msra.mxu0 0.0
        %1075 = vmatprep.subr.mxu0 0.0
        %1076 = vmatpush2.msra.mxu0 0.0
        %1077 = vmatprep.subr.mxu0 0.0
        %1078 = vmatpush2.msra.mxu0 0.0
        %1079 = vmatprep.subr.mxu0 0.0
        %1080 = vmatpush2.msra.mxu0 0.0
        %1081 = vmatprep.mubr.f32.mxu0 0.0
        %1082 = vmatmul.mubr.f32.gmra.mxu0 %v967
        %v1083 = vpop.f32.mrf.mxu0
        %v1084 = vadd.f32 0.0, %v1083
        %v1085 = vpop.f32.mrf.mxu0
        %1086 = vmatprep.mubr.f32.mxu0 0.0
        %1087 = vmatmul.mubr.f32.gmra.mxu0 %v970
        %v1088 = vpop.f32.mrf.mxu0
        %v1089 = vadd.f32 0.0, %v1088
        %v1090 = vpop.f32.mrf.mxu0
        %1091 = vmatprep.mubr.f32.mxu0 0.0
        %1092 = vmatmul.mubr.f32.gmra.mxu0 %v973
        %v1093 = vpop.f32.mrf.mxu0
        %v1094 = vadd.f32 0.0, %v1093
        %v1095 = vpop.f32.mrf.mxu0
        %1096 = vmatprep.mubr.f32.mxu0 0.0
        %1097 = vmatmul.mubr.f32.gmra.mxu0 %v976
        %v1098 = vpop.f32.mrf.mxu0
        %v1099 = vadd.f32 0.0, %v1098
        %v1100 = vpop.f32.mrf.mxu0
        %1101 = vmatprep.mubr.f32.mxu0 0.0
        %1102 = vmatmul.mubr.f32.gmra.mxu0 %v979
        %v1103 = vpop.f32.mrf.mxu0
        %v1104 = vadd.f32 0.0, %v1103
        %v1105 = vpop.f32.mrf.mxu0
        %1106 = vmatprep.mubr.f32.mxu0 0.0
        %1107 = vmatmul.mubr.f32.gmra.mxu0 %v982
        %v1108 = vpop.f32.mrf.mxu0
        %v1109 = vadd.f32 0.0, %v1108
        %v1110 = vpop.f32.mrf.mxu0
        %1111 = vmatprep.mubr.f32.mxu0 0.0
        %1112 = vmatmul.mubr.f32.gmra.mxu0 %v985
        %v1113 = vpop.f32.mrf.mxu0
        %v1114 = vadd.f32 0.0, %v1113
        %v1115 = vpop.f32.mrf.mxu0
        %1116 = vmatprep.mubr.f32.mxu0 0.0
        %1117 = vmatmul.mubr.f32.gmra.mxu0 %v988
        %v1118 = vpop.f32.mrf.mxu0
        %v1119 = vadd.f32 0.0, %v1118
        %v1120 = vpop.f32.mrf.mxu0
        %1121 = vmatprep.mubr.f32.mxu0 0.0
        %1122 = vmatmul.mubr.f32.gmra.mxu0 %v991
        %v1123 = vpop.f32.mrf.mxu0
        %v1124 = vadd.f32 0.0, %v1123
        %v1125 = vpop.f32.mrf.mxu0
        %1126 = vmatprep.mubr.f32.mxu0 0.0
        %1127 = vmatmul.mubr.f32.gmra.mxu0 %v994
        %v1128 = vpop.f32.mrf.mxu0
        %v1129 = vadd.f32 0.0, %v1128
        %v1130 = vpop.f32.mrf.mxu0
        %1131 = vmatprep.mubr.f32.mxu0 0.0
        %1132 = vmatmul.mubr.f32.gmra.mxu0 %v997
        %v1133 = vpop.f32.mrf.mxu0
        %v1134 = vadd.f32 0.0, %v1133
        %v1135 = vpop.f32.mrf.mxu0
        %1136 = vmatprep.mubr.f32.mxu0 0.0
        %1137 = vmatmul.mubr.f32.gmra.mxu0 %v1000
        %v1138 = vpop.f32.mrf.mxu0
        %v1139 = vadd.f32 0.0, %v1138
        %v1140 = vpop.f32.mrf.mxu0
        %1141 = vmatprep.mubr.f32.mxu0 0.0
        %1142 = vmatmul.mubr.f32.gmra.mxu0 %v1003
        %v1143 = vpop.f32.mrf.mxu0
        %v1144 = vadd.f32 0.0, %v1143
        %v1145 = vpop.f32.mrf.mxu0
        %1146 = vmatprep.mubr.f32.mxu0 0.0
        %1147 = vmatmul.mubr.f32.gmra.mxu0 %v1006
        %v1148 = vpop.f32.mrf.mxu0
        %v1149 = vadd.f32 0.0, %v1148
        %v1150 = vpop.f32.mrf.mxu0
        %1151 = vmatprep.mubr.f32.mxu0 0.0
        %1152 = vmatmul.mubr.f32.gmra.mxu0 %v1009
        %v1153 = vpop.f32.mrf.mxu0
        %v1154 = vadd.f32 0.0, %v1153
        %v1155 = vpop.f32.mrf.mxu0
        %1156 = vmatprep.mubr.f32.mxu0 0.0
        %1157 = vmatmul.mubr.f32.gmra.mxu0 %v1012
        %v1158 = vpop.f32.mrf.mxu0
        %v1159 = vadd.f32 0.0, %v1158
        %v1160 = vpop.f32.mrf.mxu0
        %1161 = vdwg.mxu0
        %v1162 = vadd.f32 %v886, %v1084
        %v1163 = vadd.f32 %v891, %v1089
        %v1164 = vadd.f32 %v896, %v1094
        %v1165 = vadd.f32 %v901, %v1099
        %v1166 = vadd.f32 %v906, %v1104
        %v1167 = vadd.f32 %v911, %v1109
        %v1168 = vadd.f32 %v916, %v1114
        %v1169 = vadd.f32 %v921, %v1119
        %v1170 = vadd.f32 %v926, %v1124
        %v1171 = vadd.f32 %v931, %v1129
        %v1172 = vadd.f32 %v936, %v1134
        %v1173 = vadd.f32 %v941, %v1139
        %v1174 = vadd.f32 %v946, %v1144
        %v1175 = vadd.f32 %v951, %v1149
        %v1176 = vadd.f32 %v956, %v1154
        %v1177 = vadd.f32 %v961, %v1159
        %s1178 = scalar_lea.vmem %s3, 12
        %v1179 = vld [vmem:[%s1178] sm:$0xf]
        %v1181 = vsel %vm570, %v500, 0
        %v1184 = vsel %vm570, %v501, 0
        %v1187 = vsel %vm619, %v1179, 0
        %1189 = vmatprep.subr.mxu0 0.0
        %1190 = vmatpush1.msra.mxu0 0.0
        %1191 = vmatprep.subr.mxu0 0.0
        %1192 = vmatpush1.msra.mxu0 0.0
        %1193 = vmatprep.subr.mxu0 0.0
        %1194 = vmatpush1.msra.mxu0 0.0
        %1195 = vmatprep.subr.mxu0 0.0
        %1196 = vmatpush1.msra.mxu0 0.0
        %1197 = vmatprep.subr.mxu0 0.0
        %1198 = vmatpush1.msra.mxu0 0.0
        %1199 = vmatprep.subr.mxu0 0.0
        %1200 = vmatpush1.msra.mxu0 0.0
        %1201 = vmatprep.subr.mxu0 0.0
        %1202 = vmatpush1.msra.mxu0 0.0
        %1203 = vmatprep.subr.mxu0 0.0
        %1204 = vmatpush1.msra.mxu0 0.0
        %1205 = vmatprep.subr.mxu0 0.0
        %1206 = vmatpush1.msra.mxu0 0.0
        %1207 = vmatprep.subr.mxu0 0.0
        %1208 = vmatpush1.msra.mxu0 0.0
        %1209 = vmatprep.subr.mxu0 0.0
        %1210 = vmatpush1.msra.mxu0 0.0
        %1211 = vmatprep.subr.mxu0 0.0
        %1212 = vmatpush1.msra.mxu0 0.0
        %1213 = vmatprep.subr.mxu0 0.0
        %1214 = vmatpush1.msra.mxu0 0.0
        %1215 = vmatprep.subr.mxu0 0.0
        %1216 = vmatpush1.msra.mxu0 0.0
        %1217 = vmatprep.subr.mxu0 0.0
        %1218 = vmatpush1.msra.mxu0 0.0
        %1219 = vmatprep.subr.mxu0 0.0
        %1220 = vmatpush1.msra.mxu0 %v1187
        %1221 = vmatprep.subr.mxu0 0.0
        %1222 = vmatpush2.msra.mxu0 0.0
        %1223 = vmatprep.subr.mxu0 0.0
        %1224 = vmatpush2.msra.mxu0 0.0
        %1225 = vmatprep.subr.mxu0 0.0
        %1226 = vmatpush2.msra.mxu0 0.0
        %1227 = vmatprep.subr.mxu0 0.0
        %1228 = vmatpush2.msra.mxu0 0.0
        %1229 = vmatprep.subr.mxu0 0.0
        %1230 = vmatpush2.msra.mxu0 0.0
        %1231 = vmatprep.subr.mxu0 0.0
        %1232 = vmatpush2.msra.mxu0 0.0
        %1233 = vmatprep.subr.mxu0 0.0
        %1234 = vmatpush2.msra.mxu0 0.0
        %1235 = vmatprep.subr.mxu0 0.0
        %1236 = vmatpush2.msra.mxu0 0.0
        %1237 = vmatprep.subr.mxu0 0.0
        %1238 = vmatpush2.msra.mxu0 0.0
        %1239 = vmatprep.subr.mxu0 0.0
        %1240 = vmatpush2.msra.mxu0 0.0
        %1241 = vmatprep.subr.mxu0 0.0
        %1242 = vmatpush2.msra.mxu0 0.0
        %1243 = vmatprep.subr.mxu0 0.0
        %1244 = vmatpush2.msra.mxu0 0.0
        %1245 = vmatprep.subr.mxu0 0.0
        %1246 = vmatpush2.msra.mxu0 0.0
        %1247 = vmatprep.subr.mxu0 0.0
        %1248 = vmatpush2.msra.mxu0 0.0
        %1249 = vmatprep.subr.mxu0 0.0
        %1250 = vmatpush2.msra.mxu0 0.0
        %1251 = vmatprep.subr.mxu0 0.0
        %1252 = vmatpush2.msra.mxu0 0.0
        %1253 = vmatprep.mubr.f32.mxu0 0.0
        %1254 = vmatmul.mubr.f32.gmra.mxu0 %v775
        %v1255 = vpop.f32.mrf.mxu0
        %v1256 = vadd.f32 0.0, %v1255
        %v1257 = vpop.f32.mrf.mxu0
        %1258 = vmatprep.mubr.f32.mxu0 0.0
        %1259 = vmatmul.mubr.f32.gmra.mxu0 %v778
        %v1260 = vpop.f32.mrf.mxu0
        %v1261 = vadd.f32 0.0, %v1260
        %v1262 = vpop.f32.mrf.mxu0
        %1263 = vmatprep.mubr.f32.mxu0 0.0
        %1264 = vmatmul.mubr.f32.gmra.mxu0 %v781
        %v1265 = vpop.f32.mrf.mxu0
        %v1266 = vadd.f32 0.0, %v1265
        %v1267 = vpop.f32.mrf.mxu0
        %1268 = vmatprep.mubr.f32.mxu0 0.0
        %1269 = vmatmul.mubr.f32.gmra.mxu0 %v784
        %v1270 = vpop.f32.mrf.mxu0
        %v1271 = vadd.f32 0.0, %v1270
        %v1272 = vpop.f32.mrf.mxu0
        %1273 = vmatprep.mubr.f32.mxu0 0.0
        %1274 = vmatmul.mubr.f32.gmra.mxu0 %v787
        %v1275 = vpop.f32.mrf.mxu0
        %v1276 = vadd.f32 0.0, %v1275
        %v1277 = vpop.f32.mrf.mxu0
        %1278 = vmatprep.mubr.f32.mxu0 0.0
        %1279 = vmatmul.mubr.f32.gmra.mxu0 %v790
        %v1280 = vpop.f32.mrf.mxu0
        %v1281 = vadd.f32 0.0, %v1280
        %v1282 = vpop.f32.mrf.mxu0
        %1283 = vmatprep.mubr.f32.mxu0 0.0
        %1284 = vmatmul.mubr.f32.gmra.mxu0 %v793
        %v1285 = vpop.f32.mrf.mxu0
        %v1286 = vadd.f32 0.0, %v1285
        %v1287 = vpop.f32.mrf.mxu0
        %1288 = vmatprep.mubr.f32.mxu0 0.0
        %1289 = vmatmul.mubr.f32.gmra.mxu0 %v796
        %v1290 = vpop.f32.mrf.mxu0
        %v1291 = vadd.f32 0.0, %v1290
        %v1292 = vpop.f32.mrf.mxu0
        %1293 = vmatprep.mubr.f32.mxu0 0.0
        %1294 = vmatmul.mubr.f32.gmra.mxu0 %v799
        %v1295 = vpop.f32.mrf.mxu0
        %v1296 = vadd.f32 0.0, %v1295
        %v1297 = vpop.f32.mrf.mxu0
        %1298 = vmatprep.mubr.f32.mxu0 0.0
        %1299 = vmatmul.mubr.f32.gmra.mxu0 %v802
        %v1300 = vpop.f32.mrf.mxu0
        %v1301 = vadd.f32 0.0, %v1300
        %v1302 = vpop.f32.mrf.mxu0
        %1303 = vmatprep.mubr.f32.mxu0 0.0
        %1304 = vmatmul.mubr.f32.gmra.mxu0 %v805
        %v1305 = vpop.f32.mrf.mxu0
        %v1306 = vadd.f32 0.0, %v1305
        %v1307 = vpop.f32.mrf.mxu0
        %1308 = vmatprep.mubr.f32.mxu0 0.0
        %1309 = vmatmul.mubr.f32.gmra.mxu0 %v808
        %v1310 = vpop.f32.mrf.mxu0
        %v1311 = vadd.f32 0.0, %v1310
        %v1312 = vpop.f32.mrf.mxu0
        %1313 = vmatprep.mubr.f32.mxu0 0.0
        %1314 = vmatmul.mubr.f32.gmra.mxu0 %v811
        %v1315 = vpop.f32.mrf.mxu0
        %v1316 = vadd.f32 0.0, %v1315
        %v1317 = vpop.f32.mrf.mxu0
        %1318 = vmatprep.mubr.f32.mxu0 0.0
        %1319 = vmatmul.mubr.f32.gmra.mxu0 %v814
        %v1320 = vpop.f32.mrf.mxu0
        %v1321 = vadd.f32 0.0, %v1320
        %v1322 = vpop.f32.mrf.mxu0
        %1323 = vmatprep.mubr.f32.mxu0 0.0
        %1324 = vmatmul.mubr.f32.gmra.mxu0 %v1181
        %v1325 = vpop.f32.mrf.mxu0
        %v1326 = vadd.f32 0.0, %v1325
        %v1327 = vpop.f32.mrf.mxu0
        %1328 = vmatprep.mubr.f32.mxu0 0.0
        %1329 = vmatmul.mubr.f32.gmra.mxu0 %v1184
        %v1330 = vpop.f32.mrf.mxu0
        %v1331 = vadd.f32 0.0, %v1330
        %v1332 = vpop.f32.mrf.mxu0
        %1333 = vdwg.mxu0
        %v1334 = vadd.f32 %v1162, %v1256
        %v1335 = vadd.f32 %v1163, %v1261
        %v1336 = vadd.f32 %v1164, %v1266
        %v1337 = vadd.f32 %v1165, %v1271
        %v1338 = vadd.f32 %v1166, %v1276
        %v1339 = vadd.f32 %v1167, %v1281
        %v1340 = vadd.f32 %v1168, %v1286
        %v1341 = vadd.f32 %v1169, %v1291
        %v1342 = vadd.f32 %v1170, %v1296
        %v1343 = vadd.f32 %v1171, %v1301
        %v1344 = vadd.f32 %v1172, %v1306
        %v1345 = vadd.f32 %v1173, %v1311
        %v1346 = vadd.f32 %v1174, %v1316
        %v1347 = vadd.f32 %v1175, %v1321
        %v1348 = vadd.f32 %v1176, %v1326
        %v1349 = vadd.f32 %v1177, %v1331
        %s1350 = scalar_lea.vmem %s3, 16
        %v1351 = vld [vmem:[%s1350] sm:$0xf]
        %v1353 = vsel %vm570, %v426, 0
        %v1356 = vsel %vm570, %v427, 0
        %v1359 = vsel %vm619, %v1351, 0
        %1361 = vmatprep.subr.mxu0 0.0
        %1362 = vmatpush1.msra.mxu0 0.0
        %1363 = vmatprep.subr.mxu0 0.0
        %1364 = vmatpush1.msra.mxu0 0.0
        %1365 = vmatprep.subr.mxu0 0.0
        %1366 = vmatpush1.msra.mxu0 0.0
        %1367 = vmatprep.subr.mxu0 0.0
        %1368 = vmatpush1.msra.mxu0 0.0
        %1369 = vmatprep.subr.mxu0 0.0
        %1370 = vmatpush1.msra.mxu0 0.0
        %1371 = vmatprep.subr.mxu0 0.0
        %1372 = vmatpush1.msra.mxu0 0.0
        %1373 = vmatprep.subr.mxu0 0.0
        %1374 = vmatpush1.msra.mxu0 0.0
        %1375 = vmatprep.subr.mxu0 0.0
        %1376 = vmatpush1.msra.mxu0 0.0
        %1377 = vmatprep.subr.mxu0 0.0
        %1378 = vmatpush1.msra.mxu0 0.0
        %1379 = vmatprep.subr.mxu0 0.0
        %1380 = vmatpush1.msra.mxu0 0.0
        %1381 = vmatprep.subr.mxu0 0.0
        %1382 = vmatpush1.msra.mxu0 0.0
        %1383 = vmatprep.subr.mxu0 0.0
        %1384 = vmatpush1.msra.mxu0 0.0
        %1385 = vmatprep.subr.mxu0 0.0
        %1386 = vmatpush1.msra.mxu0 0.0
        %1387 = vmatprep.subr.mxu0 0.0
        %1388 = vmatpush1.msra.mxu0 0.0
        %1389 = vmatprep.subr.mxu0 0.0
        %1390 = vmatpush1.msra.mxu0 0.0
        %1391 = vmatprep.subr.mxu0 0.0
        %1392 = vmatpush1.msra.mxu0 %v1359
        %1393 = vmatprep.subr.mxu0 0.0
        %1394 = vmatpush2.msra.mxu0 0.0
        %1395 = vmatprep.subr.mxu0 0.0
        %1396 = vmatpush2.msra.mxu0 0.0
        %1397 = vmatprep.subr.mxu0 0.0
        %1398 = vmatpush2.msra.mxu0 0.0
        %1399 = vmatprep.subr.mxu0 0.0
        %1400 = vmatpush2.msra.mxu0 0.0
        %1401 = vmatprep.subr.mxu0 0.0
        %1402 = vmatpush2.msra.mxu0 0.0
        %1403 = vmatprep.subr.mxu0 0.0
        %1404 = vmatpush2.msra.mxu0 0.0
        %1405 = vmatprep.subr.mxu0 0.0
        %1406 = vmatpush2.msra.mxu0 0.0
        %1407 = vmatprep.subr.mxu0 0.0
        %1408 = vmatpush2.msra.mxu0 0.0
        %1409 = vmatprep.subr.mxu0 0.0
        %1410 = vmatpush2.msra.mxu0 0.0
        %1411 = vmatprep.subr.mxu0 0.0
        %1412 = vmatpush2.msra.mxu0 0.0
        %1413 = vmatprep.subr.mxu0 0.0
        %1414 = vmatpush2.msra.mxu0 0.0
        %1415 = vmatprep.subr.mxu0 0.0
        %1416 = vmatpush2.msra.mxu0 0.0
        %1417 = vmatprep.subr.mxu0 0.0
        %1418 = vmatpush2.msra.mxu0 0.0
        %1419 = vmatprep.subr.mxu0 0.0
        %1420 = vmatpush2.msra.mxu0 0.0
        %1421 = vmatprep.subr.mxu0 0.0
        %1422 = vmatpush2.msra.mxu0 0.0
        %1423 = vmatprep.subr.mxu0 0.0
        %1424 = vmatpush2.msra.mxu0 0.0
        %1425 = vmatprep.mubr.f32.mxu0 0.0
        %1426 = vmatmul.mubr.f32.gmra.mxu0 %v578
        %v1427 = vpop.f32.mrf.mxu0
        %v1428 = vadd.f32 0.0, %v1427
        %v1429 = vpop.f32.mrf.mxu0
        %1430 = vmatprep.mubr.f32.mxu0 0.0
        %1431 = vmatmul.mubr.f32.gmra.mxu0 %v581
        %v1432 = vpop.f32.mrf.mxu0
        %v1433 = vadd.f32 0.0, %v1432
        %v1434 = vpop.f32.mrf.mxu0
        %1435 = vmatprep.mubr.f32.mxu0 0.0
        %1436 = vmatmul.mubr.f32.gmra.mxu0 %v584
        %v1437 = vpop.f32.mrf.mxu0
        %v1438 = vadd.f32 0.0, %v1437
        %v1439 = vpop.f32.mrf.mxu0
        %1440 = vmatprep.mubr.f32.mxu0 0.0
        %1441 = vmatmul.mubr.f32.gmra.mxu0 %v587
        %v1442 = vpop.f32.mrf.mxu0
        %v1443 = vadd.f32 0.0, %v1442
        %v1444 = vpop.f32.mrf.mxu0
        %1445 = vmatprep.mubr.f32.mxu0 0.0
        %1446 = vmatmul.mubr.f32.gmra.mxu0 %v590
        %v1447 = vpop.f32.mrf.mxu0
        %v1448 = vadd.f32 0.0, %v1447
        %v1449 = vpop.f32.mrf.mxu0
        %1450 = vmatprep.mubr.f32.mxu0 0.0
        %1451 = vmatmul.mubr.f32.gmra.mxu0 %v593
        %v1452 = vpop.f32.mrf.mxu0
        %v1453 = vadd.f32 0.0, %v1452
        %v1454 = vpop.f32.mrf.mxu0
        %1455 = vmatprep.mubr.f32.mxu0 0.0
        %1456 = vmatmul.mubr.f32.gmra.mxu0 %v596
        %v1457 = vpop.f32.mrf.mxu0
        %v1458 = vadd.f32 0.0, %v1457
        %v1459 = vpop.f32.mrf.mxu0
        %1460 = vmatprep.mubr.f32.mxu0 0.0
        %1461 = vmatmul.mubr.f32.gmra.mxu0 %v599
        %v1462 = vpop.f32.mrf.mxu0
        %v1463 = vadd.f32 0.0, %v1462
        %v1464 = vpop.f32.mrf.mxu0
        %1465 = vmatprep.mubr.f32.mxu0 0.0
        %1466 = vmatmul.mubr.f32.gmra.mxu0 %v602
        %v1467 = vpop.f32.mrf.mxu0
        %v1468 = vadd.f32 0.0, %v1467
        %v1469 = vpop.f32.mrf.mxu0
        %1470 = vmatprep.mubr.f32.mxu0 0.0
        %1471 = vmatmul.mubr.f32.gmra.mxu0 %v605
        %v1472 = vpop.f32.mrf.mxu0
        %v1473 = vadd.f32 0.0, %v1472
        %v1474 = vpop.f32.mrf.mxu0
        %1475 = vmatprep.mubr.f32.mxu0 0.0
        %1476 = vmatmul.mubr.f32.gmra.mxu0 %v608
        %v1477 = vpop.f32.mrf.mxu0
        %v1478 = vadd.f32 0.0, %v1477
        %v1479 = vpop.f32.mrf.mxu0
        %1480 = vmatprep.mubr.f32.mxu0 0.0
        %1481 = vmatmul.mubr.f32.gmra.mxu0 %v611
        %v1482 = vpop.f32.mrf.mxu0
        %v1483 = vadd.f32 0.0, %v1482
        %v1484 = vpop.f32.mrf.mxu0
        %1485 = vmatprep.mubr.f32.mxu0 0.0
        %1486 = vmatmul.mubr.f32.gmra.mxu0 %v614
        %v1487 = vpop.f32.mrf.mxu0
        %v1488 = vadd.f32 0.0, %v1487
        %v1489 = vpop.f32.mrf.mxu0
        %1490 = vmatprep.mubr.f32.mxu0 0.0
        %1491 = vmatmul.mubr.f32.gmra.mxu0 %v617
        %v1492 = vpop.f32.mrf.mxu0
        %v1493 = vadd.f32 0.0, %v1492
        %v1494 = vpop.f32.mrf.mxu0
        %1495 = vmatprep.mubr.f32.mxu0 0.0
        %1496 = vmatmul.mubr.f32.gmra.mxu0 %v1353
        %v1497 = vpop.f32.mrf.mxu0
        %v1498 = vadd.f32 0.0, %v1497
        %v1499 = vpop.f32.mrf.mxu0
        %1500 = vmatprep.mubr.f32.mxu0 0.0
        %1501 = vmatmul.mubr.f32.gmra.mxu0 %v1356
        %v1502 = vpop.f32.mrf.mxu0
        %v1503 = vadd.f32 0.0, %v1502
        %v1504 = vpop.f32.mrf.mxu0
        %1505 = vdwg.mxu0
        %v1506 = vadd.f32 %v1334, %v1428
        %v1507 = vadd.f32 %v1335, %v1433
        %v1508 = vadd.f32 %v1336, %v1438
        %v1509 = vadd.f32 %v1337, %v1443
        %v1510 = vadd.f32 %v1338, %v1448
        %v1511 = vadd.f32 %v1339, %v1453
        %v1512 = vadd.f32 %v1340, %v1458
        %v1513 = vadd.f32 %v1341, %v1463
        %v1514 = vadd.f32 %v1342, %v1468
        %v1515 = vadd.f32 %v1343, %v1473
        %v1516 = vadd.f32 %v1344, %v1478
        %v1517 = vadd.f32 %v1345, %v1483
        %v1518 = vadd.f32 %v1346, %v1488
        %v1519 = vadd.f32 %v1347, %v1493
        %v1520 = vadd.f32 %v1348, %v1498
        %v1521 = vadd.f32 %v1349, %v1503
        %s1522 = scalar_lea.vmem %s3, 20
        %v1523 = vld [vmem:[%s1522] sm:$0xf]
        %v1525 = vsel %vm570, %v563, 0
        %v1528 = vsel %vm570, %v564, 0
        %v1531 = vsel %vm619, %v1523, 0
        %1533 = vmatprep.subr.mxu0 0.0
        %1534 = vmatpush1.msra.mxu0 0.0
        %1535 = vmatprep.subr.mxu0 0.0
        %1536 = vmatpush1.msra.mxu0 0.0
        %1537 = vmatprep.subr.mxu0 0.0
        %1538 = vmatpush1.msra.mxu0 0.0
        %1539 = vmatprep.subr.mxu0 0.0
        %1540 = vmatpush1.msra.mxu0 0.0
        %1541 = vmatprep.subr.mxu0 0.0
        %1542 = vmatpush1.msra.mxu0 0.0
        %1543 = vmatprep.subr.mxu0 0.0
        %1544 = vmatpush1.msra.mxu0 0.0
        %1545 = vmatprep.subr.mxu0 0.0
        %1546 = vmatpush1.msra.mxu0 0.0
        %1547 = vmatprep.subr.mxu0 0.0
        %1548 = vmatpush1.msra.mxu0 0.0
        %1549 = vmatprep.subr.mxu0 0.0
        %1550 = vmatpush1.msra.mxu0 0.0
        %1551 = vmatprep.subr.mxu0 0.0
        %1552 = vmatpush1.msra.mxu0 0.0
        %1553 = vmatprep.subr.mxu0 0.0
        %1554 = vmatpush1.msra.mxu0 0.0
        %1555 = vmatprep.subr.mxu0 0.0
        %1556 = vmatpush1.msra.mxu0 0.0
        %1557 = vmatprep.subr.mxu0 0.0
        %1558 = vmatpush1.msra.mxu0 0.0
        %1559 = vmatprep.subr.mxu0 0.0
        %1560 = vmatpush1.msra.mxu0 0.0
        %1561 = vmatprep.subr.mxu0 0.0
        %1562 = vmatpush1.msra.mxu0 0.0
        %1563 = vmatprep.subr.mxu0 0.0
        %1564 = vmatpush1.msra.mxu0 %v1531
        %1565 = vmatprep.subr.mxu0 0.0
        %1566 = vmatpush2.msra.mxu0 0.0
        %1567 = vmatprep.subr.mxu0 0.0
        %1568 = vmatpush2.msra.mxu0 0.0
        %1569 = vmatprep.subr.mxu0 0.0
        %1570 = vmatpush2.msra.mxu0 0.0
        %1571 = vmatprep.subr.mxu0 0.0
        %1572 = vmatpush2.msra.mxu0 0.0
        %1573 = vmatprep.subr.mxu0 0.0
        %1574 = vmatpush2.msra.mxu0 0.0
        %1575 = vmatprep.subr.mxu0 0.0
        %1576 = vmatpush2.msra.mxu0 0.0
        %1577 = vmatprep.subr.mxu0 0.0
        %1578 = vmatpush2.msra.mxu0 0.0
        %1579 = vmatprep.subr.mxu0 0.0
        %1580 = vmatpush2.msra.mxu0 0.0
        %1581 = vmatprep.subr.mxu0 0.0
        %1582 = vmatpush2.msra.mxu0 0.0
        %1583 = vmatprep.subr.mxu0 0.0
        %1584 = vmatpush2.msra.mxu0 0.0
        %1585 = vmatprep.subr.mxu0 0.0
        %1586 = vmatpush2.msra.mxu0 0.0
        %1587 = vmatprep.subr.mxu0 0.0
        %1588 = vmatpush2.msra.mxu0 0.0
        %1589 = vmatprep.subr.mxu0 0.0
        %1590 = vmatpush2.msra.mxu0 0.0
        %1591 = vmatprep.subr.mxu0 0.0
        %1592 = vmatpush2.msra.mxu0 0.0
        %1593 = vmatprep.subr.mxu0 0.0
        %1594 = vmatpush2.msra.mxu0 0.0
        %1595 = vmatprep.subr.mxu0 0.0
        %1596 = vmatpush2.msra.mxu0 0.0
        %1597 = vmatprep.mubr.f32.mxu0 0.0
        %1598 = vmatmul.mubr.f32.gmra.mxu0 %v973
        %v1599 = vpop.f32.mrf.mxu0
        %v1600 = vadd.f32 0.0, %v1599
        %v1601 = vpop.f32.mrf.mxu0
        %1602 = vmatprep.mubr.f32.mxu0 0.0
        %1603 = vmatmul.mubr.f32.gmra.mxu0 %v976
        %v1604 = vpop.f32.mrf.mxu0
        %v1605 = vadd.f32 0.0, %v1604
        %v1606 = vpop.f32.mrf.mxu0
        %1607 = vmatprep.mubr.f32.mxu0 0.0
        %1608 = vmatmul.mubr.f32.gmra.mxu0 %v979
        %v1609 = vpop.f32.mrf.mxu0
        %v1610 = vadd.f32 0.0, %v1609
        %v1611 = vpop.f32.mrf.mxu0
        %1612 = vmatprep.mubr.f32.mxu0 0.0
        %1613 = vmatmul.mubr.f32.gmra.mxu0 %v982
        %v1614 = vpop.f32.mrf.mxu0
        %v1615 = vadd.f32 0.0, %v1614
        %v1616 = vpop.f32.mrf.mxu0
        %1617 = vmatprep.mubr.f32.mxu0 0.0
        %1618 = vmatmul.mubr.f32.gmra.mxu0 %v985
        %v1619 = vpop.f32.mrf.mxu0
        %v1620 = vadd.f32 0.0, %v1619
        %v1621 = vpop.f32.mrf.mxu0
        %1622 = vmatprep.mubr.f32.mxu0 0.0
        %1623 = vmatmul.mubr.f32.gmra.mxu0 %v988
        %v1624 = vpop.f32.mrf.mxu0
        %v1625 = vadd.f32 0.0, %v1624
        %v1626 = vpop.f32.mrf.mxu0
        %1627 = vmatprep.mubr.f32.mxu0 0.0
        %1628 = vmatmul.mubr.f32.gmra.mxu0 %v991
        %v1629 = vpop.f32.mrf.mxu0
        %v1630 = vadd.f32 0.0, %v1629
        %v1631 = vpop.f32.mrf.mxu0
        %1632 = vmatprep.mubr.f32.mxu0 0.0
        %1633 = vmatmul.mubr.f32.gmra.mxu0 %v994
        %v1634 = vpop.f32.mrf.mxu0
        %v1635 = vadd.f32 0.0, %v1634
        %v1636 = vpop.f32.mrf.mxu0
        %1637 = vmatprep.mubr.f32.mxu0 0.0
        %1638 = vmatmul.mubr.f32.gmra.mxu0 %v997
        %v1639 = vpop.f32.mrf.mxu0
        %v1640 = vadd.f32 0.0, %v1639
        %v1641 = vpop.f32.mrf.mxu0
        %1642 = vmatprep.mubr.f32.mxu0 0.0
        %1643 = vmatmul.mubr.f32.gmra.mxu0 %v1000
        %v1644 = vpop.f32.mrf.mxu0
        %v1645 = vadd.f32 0.0, %v1644
        %v1646 = vpop.f32.mrf.mxu0
        %1647 = vmatprep.mubr.f32.mxu0 0.0
        %1648 = vmatmul.mubr.f32.gmra.mxu0 %v1003
        %v1649 = vpop.f32.mrf.mxu0
        %v1650 = vadd.f32 0.0, %v1649
        %v1651 = vpop.f32.mrf.mxu0
        %1652 = vmatprep.mubr.f32.mxu0 0.0
        %1653 = vmatmul.mubr.f32.gmra.mxu0 %v1006
        %v1654 = vpop.f32.mrf.mxu0
        %v1655 = vadd.f32 0.0, %v1654
        %v1656 = vpop.f32.mrf.mxu0
        %1657 = vmatprep.mubr.f32.mxu0 0.0
        %1658 = vmatmul.mubr.f32.gmra.mxu0 %v1009
        %v1659 = vpop.f32.mrf.mxu0
        %v1660 = vadd.f32 0.0, %v1659
        %v1661 = vpop.f32.mrf.mxu0
        %1662 = vmatprep.mubr.f32.mxu0 0.0
        %1663 = vmatmul.mubr.f32.gmra.mxu0 %v1012
        %v1664 = vpop.f32.mrf.mxu0
        %v1665 = vadd.f32 0.0, %v1664
        %v1666 = vpop.f32.mrf.mxu0
        %1667 = vmatprep.mubr.f32.mxu0 0.0
        %1668 = vmatmul.mubr.f32.gmra.mxu0 %v1525
        %v1669 = vpop.f32.mrf.mxu0
        %v1670 = vadd.f32 0.0, %v1669
        %v1671 = vpop.f32.mrf.mxu0
        %1672 = vmatprep.mubr.f32.mxu0 0.0
        %1673 = vmatmul.mubr.f32.gmra.mxu0 %v1528
        %v1674 = vpop.f32.mrf.mxu0
        %v1675 = vadd.f32 0.0, %v1674
        %v1676 = vpop.f32.mrf.mxu0
        %1677 = vdwg.mxu0
        %v1678 = vadd.f32 %v1506, %v1600
        %v1679 = vadd.f32 %v1507, %v1605
        %v1680 = vadd.f32 %v1508, %v1610
        %v1681 = vadd.f32 %v1509, %v1615
        %v1682 = vadd.f32 %v1510, %v1620
        %v1683 = vadd.f32 %v1511, %v1625
        %v1684 = vadd.f32 %v1512, %v1630
        %v1685 = vadd.f32 %v1513, %v1635
        %v1686 = vadd.f32 %v1514, %v1640
        %v1687 = vadd.f32 %v1515, %v1645
        %v1688 = vadd.f32 %v1516, %v1650
        %v1689 = vadd.f32 %v1517, %v1655
        %v1690 = vadd.f32 %v1518, %v1660
        %v1691 = vadd.f32 %v1519, %v1665
        %v1692 = vadd.f32 %v1520, %v1670
        %v1693 = vadd.f32 %v1521, %v1675
        %s1694 = scalar_lea.vmem %s3, 24
        %v1695 = vld [vmem:[%s1694] sm:$0xf]
        %v1697 = vsel %vm570, %v502, 0
        %v1700 = vsel %vm570, %v503, 0
        %v1703 = vsel %vm619, %v1695, 0
        %1705 = vmatprep.subr.mxu0 0.0
        %1706 = vmatpush1.msra.mxu0 0.0
        %1707 = vmatprep.subr.mxu0 0.0
        %1708 = vmatpush1.msra.mxu0 0.0
        %1709 = vmatprep.subr.mxu0 0.0
        %1710 = vmatpush1.msra.mxu0 0.0
        %1711 = vmatprep.subr.mxu0 0.0
        %1712 = vmatpush1.msra.mxu0 0.0
        %1713 = vmatprep.subr.mxu0 0.0
        %1714 = vmatpush1.msra.mxu0 0.0
        %1715 = vmatprep.subr.mxu0 0.0
        %1716 = vmatpush1.msra.mxu0 0.0
        %1717 = vmatprep.subr.mxu0 0.0
        %1718 = vmatpush1.msra.mxu0 0.0
        %1719 = vmatprep.subr.mxu0 0.0
        %1720 = vmatpush1.msra.mxu0 0.0
        %1721 = vmatprep.subr.mxu0 0.0
        %1722 = vmatpush1.msra.mxu0 0.0
        %1723 = vmatprep.subr.mxu0 0.0
        %1724 = vmatpush1.msra.mxu0 0.0
        %1725 = vmatprep.subr.mxu0 0.0
        %1726 = vmatpush1.msra.mxu0 0.0
        %1727 = vmatprep.subr.mxu0 0.0
        %1728 = vmatpush1.msra.mxu0 0.0
        %1729 = vmatprep.subr.mxu0 0.0
        %1730 = vmatpush1.msra.mxu0 0.0
        %1731 = vmatprep.subr.mxu0 0.0
        %1732 = vmatpush1.msra.mxu0 0.0
        %1733 = vmatprep.subr.mxu0 0.0
        %1734 = vmatpush1.msra.mxu0 0.0
        %1735 = vmatprep.subr.mxu0 0.0
        %1736 = vmatpush1.msra.mxu0 %v1703
        %1737 = vmatprep.subr.mxu0 0.0
        %1738 = vmatpush2.msra.mxu0 0.0
        %1739 = vmatprep.subr.mxu0 0.0
        %1740 = vmatpush2.msra.mxu0 0.0
        %1741 = vmatprep.subr.mxu0 0.0
        %1742 = vmatpush2.msra.mxu0 0.0
        %1743 = vmatprep.subr.mxu0 0.0
        %1744 = vmatpush2.msra.mxu0 0.0
        %1745 = vmatprep.subr.mxu0 0.0
        %1746 = vmatpush2.msra.mxu0 0.0
        %1747 = vmatprep.subr.mxu0 0.0
        %1748 = vmatpush2.msra.mxu0 0.0
        %1749 = vmatprep.subr.mxu0 0.0
        %1750 = vmatpush2.msra.mxu0 0.0
        %1751 = vmatprep.subr.mxu0 0.0
        %1752 = vmatpush2.msra.mxu0 0.0
        %1753 = vmatprep.subr.mxu0 0.0
        %1754 = vmatpush2.msra.mxu0 0.0
        %1755 = vmatprep.subr.mxu0 0.0
        %1756 = vmatpush2.msra.mxu0 0.0
        %1757 = vmatprep.subr.mxu0 0.0
        %1758 = vmatpush2.msra.mxu0 0.0
        %1759 = vmatprep.subr.mxu0 0.0
        %1760 = vmatpush2.msra.mxu0 0.0
        %1761 = vmatprep.subr.mxu0 0.0
        %1762 = vmatpush2.msra.mxu0 0.0
        %1763 = vmatprep.subr.mxu0 0.0
        %1764 = vmatpush2.msra.mxu0 0.0
        %1765 = vmatprep.subr.mxu0 0.0
        %1766 = vmatpush2.msra.mxu0 0.0
        %1767 = vmatprep.subr.mxu0 0.0
        %1768 = vmatpush2.msra.mxu0 0.0
        %1769 = vmatprep.mubr.f32.mxu0 0.0
        %1770 = vmatmul.mubr.f32.gmra.mxu0 %v781
        %v1771 = vpop.f32.mrf.mxu0
        %v1772 = vadd.f32 0.0, %v1771
        %v1773 = vpop.f32.mrf.mxu0
        %1774 = vmatprep.mubr.f32.mxu0 0.0
        %1775 = vmatmul.mubr.f32.gmra.mxu0 %v784
        %v1776 = vpop.f32.mrf.mxu0
        %v1777 = vadd.f32 0.0, %v1776
        %v1778 = vpop.f32.mrf.mxu0
        %1779 = vmatprep.mubr.f32.mxu0 0.0
        %1780 = vmatmul.mubr.f32.gmra.mxu0 %v787
        %v1781 = vpop.f32.mrf.mxu0
        %v1782 = vadd.f32 0.0, %v1781
        %v1783 = vpop.f32.mrf.mxu0
        %1784 = vmatprep.mubr.f32.mxu0 0.0
        %1785 = vmatmul.mubr.f32.gmra.mxu0 %v790
        %v1786 = vpop.f32.mrf.mxu0
        %v1787 = vadd.f32 0.0, %v1786
        %v1788 = vpop.f32.mrf.mxu0
        %1789 = vmatprep.mubr.f32.mxu0 0.0
        %1790 = vmatmul.mubr.f32.gmra.mxu0 %v793
        %v1791 = vpop.f32.mrf.mxu0
        %v1792 = vadd.f32 0.0, %v1791
        %v1793 = vpop.f32.mrf.mxu0
        %1794 = vmatprep.mubr.f32.mxu0 0.0
        %1795 = vmatmul.mubr.f32.gmra.mxu0 %v796
        %v1796 = vpop.f32.mrf.mxu0
        %v1797 = vadd.f32 0.0, %v1796
        %v1798 = vpop.f32.mrf.mxu0
        %1799 = vmatprep.mubr.f32.mxu0 0.0
        %1800 = vmatmul.mubr.f32.gmra.mxu0 %v799
        %v1801 = vpop.f32.mrf.mxu0
        %v1802 = vadd.f32 0.0, %v1801
        %v1803 = vpop.f32.mrf.mxu0
        %1804 = vmatprep.mubr.f32.mxu0 0.0
        %1805 = vmatmul.mubr.f32.gmra.mxu0 %v802
        %v1806 = vpop.f32.mrf.mxu0
        %v1807 = vadd.f32 0.0, %v1806
        %v1808 = vpop.f32.mrf.mxu0
        %1809 = vmatprep.mubr.f32.mxu0 0.0
        %1810 = vmatmul.mubr.f32.gmra.mxu0 %v805
        %v1811 = vpop.f32.mrf.mxu0
        %v1812 = vadd.f32 0.0, %v1811
        %v1813 = vpop.f32.mrf.mxu0
        %1814 = vmatprep.mubr.f32.mxu0 0.0
        %1815 = vmatmul.mubr.f32.gmra.mxu0 %v808
        %v1816 = vpop.f32.mrf.mxu0
        %v1817 = vadd.f32 0.0, %v1816
        %v1818 = vpop.f32.mrf.mxu0
        %1819 = vmatprep.mubr.f32.mxu0 0.0
        %1820 = vmatmul.mubr.f32.gmra.mxu0 %v811
        %v1821 = vpop.f32.mrf.mxu0
        %v1822 = vadd.f32 0.0, %v1821
        %v1823 = vpop.f32.mrf.mxu0
        %1824 = vmatprep.mubr.f32.mxu0 0.0
        %1825 = vmatmul.mubr.f32.gmra.mxu0 %v814
        %v1826 = vpop.f32.mrf.mxu0
        %v1827 = vadd.f32 0.0, %v1826
        %v1828 = vpop.f32.mrf.mxu0
        %1829 = vmatprep.mubr.f32.mxu0 0.0
        %1830 = vmatmul.mubr.f32.gmra.mxu0 %v1181
        %v1831 = vpop.f32.mrf.mxu0
        %v1832 = vadd.f32 0.0, %v1831
        %v1833 = vpop.f32.mrf.mxu0
        %1834 = vmatprep.mubr.f32.mxu0 0.0
        %1835 = vmatmul.mubr.f32.gmra.mxu0 %v1184
        %v1836 = vpop.f32.mrf.mxu0
        %v1837 = vadd.f32 0.0, %v1836
        %v1838 = vpop.f32.mrf.mxu0
        %1839 = vmatprep.mubr.f32.mxu0 0.0
        %1840 = vmatmul.mubr.f32.gmra.mxu0 %v1697
        %v1841 = vpop.f32.mrf.mxu0
        %v1842 = vadd.f32 0.0, %v1841
        %v1843 = vpop.f32.mrf.mxu0
        %1844 = vmatprep.mubr.f32.mxu0 0.0
        %1845 = vmatmul.mubr.f32.gmra.mxu0 %v1700
        %v1846 = vpop.f32.mrf.mxu0
        %v1847 = vadd.f32 0.0, %v1846
        %v1848 = vpop.f32.mrf.mxu0
        %1849 = vdwg.mxu0
        %v1850 = vadd.f32 %v1678, %v1772
        %v1851 = vadd.f32 %v1679, %v1777
        %v1852 = vadd.f32 %v1680, %v1782
        %v1853 = vadd.f32 %v1681, %v1787
        %v1854 = vadd.f32 %v1682, %v1792
        %v1855 = vadd.f32 %v1683, %v1797
        %v1856 = vadd.f32 %v1684, %v1802
        %v1857 = vadd.f32 %v1685, %v1807
        %v1858 = vadd.f32 %v1686, %v1812
        %v1859 = vadd.f32 %v1687, %v1817
        %v1860 = vadd.f32 %v1688, %v1822
        %v1861 = vadd.f32 %v1689, %v1827
        %v1862 = vadd.f32 %v1690, %v1832
        %v1863 = vadd.f32 %v1691, %v1837
        %v1864 = vadd.f32 %v1692, %v1842
        %v1865 = vadd.f32 %v1693, %v1847
        %s1866 = scalar_lea.vmem %s3, 28
        %v1867 = vld [vmem:[%s1866] sm:$0xf]
        %v1869 = vsel %vm570, %v436, 0
        %v1872 = vsel %vm570, %v437, 0
        %v1875 = vsel %vm619, %v1867, 0
        %1877 = vmatprep.subr.mxu0 0.0
        %1878 = vmatpush1.msra.mxu0 0.0
        %1879 = vmatprep.subr.mxu0 0.0
        %1880 = vmatpush1.msra.mxu0 0.0
        %1881 = vmatprep.subr.mxu0 0.0
        %1882 = vmatpush1.msra.mxu0 0.0
        %1883 = vmatprep.subr.mxu0 0.0
        %1884 = vmatpush1.msra.mxu0 0.0
        %1885 = vmatprep.subr.mxu0 0.0
        %1886 = vmatpush1.msra.mxu0 0.0
        %1887 = vmatprep.subr.mxu0 0.0
        %1888 = vmatpush1.msra.mxu0 0.0
        %1889 = vmatprep.subr.mxu0 0.0
        %1890 = vmatpush1.msra.mxu0 0.0
        %1891 = vmatprep.subr.mxu0 0.0
        %1892 = vmatpush1.msra.mxu0 0.0
        %1893 = vmatprep.subr.mxu0 0.0
        %1894 = vmatpush1.msra.mxu0 0.0
        %1895 = vmatprep.subr.mxu0 0.0
        %1896 = vmatpush1.msra.mxu0 0.0
        %1897 = vmatprep.subr.mxu0 0.0
        %1898 = vmatpush1.msra.mxu0 0.0
        %1899 = vmatprep.subr.mxu0 0.0
        %1900 = vmatpush1.msra.mxu0 0.0
        %1901 = vmatprep.subr.mxu0 0.0
        %1902 = vmatpush1.msra.mxu0 0.0
        %1903 = vmatprep.subr.mxu0 0.0
        %1904 = vmatpush1.msra.mxu0 0.0
        %1905 = vmatprep.subr.mxu0 0.0
        %1906 = vmatpush1.msra.mxu0 0.0
        %1907 = vmatprep.subr.mxu0 0.0
        %1908 = vmatpush1.msra.mxu0 %v1875
        %1909 = vmatprep.subr.mxu0 0.0
        %1910 = vmatpush2.msra.mxu0 0.0
        %1911 = vmatprep.subr.mxu0 0.0
        %1912 = vmatpush2.msra.mxu0 0.0
        %1913 = vmatprep.subr.mxu0 0.0
        %1914 = vmatpush2.msra.mxu0 0.0
        %1915 = vmatprep.subr.mxu0 0.0
        %1916 = vmatpush2.msra.mxu0 0.0
        %1917 = vmatprep.subr.mxu0 0.0
        %1918 = vmatpush2.msra.mxu0 0.0
        %1919 = vmatprep.subr.mxu0 0.0
        %1920 = vmatpush2.msra.mxu0 0.0
        %1921 = vmatprep.subr.mxu0 0.0
        %1922 = vmatpush2.msra.mxu0 0.0
        %1923 = vmatprep.subr.mxu0 0.0
        %1924 = vmatpush2.msra.mxu0 0.0
        %1925 = vmatprep.subr.mxu0 0.0
        %1926 = vmatpush2.msra.mxu0 0.0
        %1927 = vmatprep.subr.mxu0 0.0
        %1928 = vmatpush2.msra.mxu0 0.0
        %1929 = vmatprep.subr.mxu0 0.0
        %1930 = vmatpush2.msra.mxu0 0.0
        %1931 = vmatprep.subr.mxu0 0.0
        %1932 = vmatpush2.msra.mxu0 0.0
        %1933 = vmatprep.subr.mxu0 0.0
        %1934 = vmatpush2.msra.mxu0 0.0
        %1935 = vmatprep.subr.mxu0 0.0
        %1936 = vmatpush2.msra.mxu0 0.0
        %1937 = vmatprep.subr.mxu0 0.0
        %1938 = vmatpush2.msra.mxu0 0.0
        %1939 = vmatprep.subr.mxu0 0.0
        %1940 = vmatpush2.msra.mxu0 0.0
        %1941 = vmatprep.mubr.f32.mxu0 0.0
        %1942 = vmatmul.mubr.f32.gmra.mxu0 %v584
        %v1943 = vpop.f32.mrf.mxu0
        %v1944 = vadd.f32 0.0, %v1943
        %v1945 = vpop.f32.mrf.mxu0
        %1946 = vmatprep.mubr.f32.mxu0 0.0
        %1947 = vmatmul.mubr.f32.gmra.mxu0 %v587
        %v1948 = vpop.f32.mrf.mxu0
        %v1949 = vadd.f32 0.0, %v1948
        %v1950 = vpop.f32.mrf.mxu0
        %1951 = vmatprep.mubr.f32.mxu0 0.0
        %1952 = vmatmul.mubr.f32.gmra.mxu0 %v590
        %v1953 = vpop.f32.mrf.mxu0
        %v1954 = vadd.f32 0.0, %v1953
        %v1955 = vpop.f32.mrf.mxu0
        %1956 = vmatprep.mubr.f32.mxu0 0.0
        %1957 = vmatmul.mubr.f32.gmra.mxu0 %v593
        %v1958 = vpop.f32.mrf.mxu0
        %v1959 = vadd.f32 0.0, %v1958
        %v1960 = vpop.f32.mrf.mxu0
        %1961 = vmatprep.mubr.f32.mxu0 0.0
        %1962 = vmatmul.mubr.f32.gmra.mxu0 %v596
        %v1963 = vpop.f32.mrf.mxu0
        %v1964 = vadd.f32 0.0, %v1963
        %v1965 = vpop.f32.mrf.mxu0
        %1966 = vmatprep.mubr.f32.mxu0 0.0
        %1967 = vmatmul.mubr.f32.gmra.mxu0 %v599
        %v1968 = vpop.f32.mrf.mxu0
        %v1969 = vadd.f32 0.0, %v1968
        %v1970 = vpop.f32.mrf.mxu0
        %1971 = vmatprep.mubr.f32.mxu0 0.0
        %1972 = vmatmul.mubr.f32.gmra.mxu0 %v602
        %v1973 = vpop.f32.mrf.mxu0
        %v1974 = vadd.f32 0.0, %v1973
        %v1975 = vpop.f32.mrf.mxu0
        %1976 = vmatprep.mubr.f32.mxu0 0.0
        %1977 = vmatmul.mubr.f32.gmra.mxu0 %v605
        %v1978 = vpop.f32.mrf.mxu0
        %v1979 = vadd.f32 0.0, %v1978
        %v1980 = vpop.f32.mrf.mxu0
        %1981 = vmatprep.mubr.f32.mxu0 0.0
        %1982 = vmatmul.mubr.f32.gmra.mxu0 %v608
        %v1983 = vpop.f32.mrf.mxu0
        %v1984 = vadd.f32 0.0, %v1983
        %v1985 = vpop.f32.mrf.mxu0
        %1986 = vmatprep.mubr.f32.mxu0 0.0
        %1987 = vmatmul.mubr.f32.gmra.mxu0 %v611
        %v1988 = vpop.f32.mrf.mxu0
        %v1989 = vadd.f32 0.0, %v1988
        %v1990 = vpop.f32.mrf.mxu0
        %1991 = vmatprep.mubr.f32.mxu0 0.0
        %1992 = vmatmul.mubr.f32.gmra.mxu0 %v614
        %v1993 = vpop.f32.mrf.mxu0
        %v1994 = vadd.f32 0.0, %v1993
        %v1995 = vpop.f32.mrf.mxu0
        %1996 = vmatprep.mubr.f32.mxu0 0.0
        %1997 = vmatmul.mubr.f32.gmra.mxu0 %v617
        %v1998 = vpop.f32.mrf.mxu0
        %v1999 = vadd.f32 0.0, %v1998
        %v2000 = vpop.f32.mrf.mxu0
        %2001 = vmatprep.mubr.f32.mxu0 0.0
        %2002 = vmatmul.mubr.f32.gmra.mxu0 %v1353
        %v2003 = vpop.f32.mrf.mxu0
        %v2004 = vadd.f32 0.0, %v2003
        %v2005 = vpop.f32.mrf.mxu0
        %2006 = vmatprep.mubr.f32.mxu0 0.0
        %2007 = vmatmul.mubr.f32.gmra.mxu0 %v1356
        %v2008 = vpop.f32.mrf.mxu0
        %v2009 = vadd.f32 0.0, %v2008
        %v2010 = vpop.f32.mrf.mxu0
        %2011 = vmatprep.mubr.f32.mxu0 0.0
        %2012 = vmatmul.mubr.f32.gmra.mxu0 %v1869
        %v2013 = vpop.f32.mrf.mxu0
        %v2014 = vadd.f32 0.0, %v2013
        %v2015 = vpop.f32.mrf.mxu0
        %2016 = vmatprep.mubr.f32.mxu0 0.0
        %2017 = vmatmul.mubr.f32.gmra.mxu0 %v1872
        %v2018 = vpop.f32.mrf.mxu0
        %v2019 = vadd.f32 0.0, %v2018
        %v2020 = vpop.f32.mrf.mxu0
        %2021 = vdwg.mxu0
        %v2022 = vadd.f32 %v1850, %v1944
        %v2023 = vadd.f32 %v1851, %v1949
        %v2024 = vadd.f32 %v1852, %v1954
        %v2025 = vadd.f32 %v1853, %v1959
        %v2026 = vadd.f32 %v1854, %v1964
        %v2027 = vadd.f32 %v1855, %v1969
        %v2028 = vadd.f32 %v1856, %v1974
        %v2029 = vadd.f32 %v1857, %v1979
        %v2030 = vadd.f32 %v1858, %v1984
        %v2031 = vadd.f32 %v1859, %v1989
        %v2032 = vadd.f32 %v1860, %v1994
        %v2033 = vadd.f32 %v1861, %v1999
        %v2034 = vadd.f32 %v1862, %v2004
        %v2035 = vadd.f32 %v1863, %v2009
        %v2036 = vadd.f32 %v1864, %v2014
        %v2037 = vadd.f32 %v1865, %v2019
        %s2038 = scalar_lea.vmem %s3, 32
        %v2039 = vld [vmem:[%s2038] sm:$0xf]
        %v2041 = vsel %vm570, %v565, 0
        %v2044 = vsel %vm570, %v566, 0
        %v2047 = vsel %vm619, %v2039, 0
        %2049 = vmatprep.subr.mxu0 0.0
        %2050 = vmatpush1.msra.mxu0 0.0
        %2051 = vmatprep.subr.mxu0 0.0
        %2052 = vmatpush1.msra.mxu0 0.0
        %2053 = vmatprep.subr.mxu0 0.0
        %2054 = vmatpush1.msra.mxu0 0.0
        %2055 = vmatprep.subr.mxu0 0.0
        %2056 = vmatpush1.msra.mxu0 0.0
        %2057 = vmatprep.subr.mxu0 0.0
        %2058 = vmatpush1.msra.mxu0 0.0
        %2059 = vmatprep.subr.mxu0 0.0
        %2060 = vmatpush1.msra.mxu0 0.0
        %2061 = vmatprep.subr.mxu0 0.0
        %2062 = vmatpush1.msra.mxu0 0.0
        %2063 = vmatprep.subr.mxu0 0.0
        %2064 = vmatpush1.msra.mxu0 0.0
        %2065 = vmatprep.subr.mxu0 0.0
        %2066 = vmatpush1.msra.mxu0 0.0
        %2067 = vmatprep.subr.mxu0 0.0
        %2068 = vmatpush1.msra.mxu0 0.0
        %2069 = vmatprep.subr.mxu0 0.0
        %2070 = vmatpush1.msra.mxu0 0.0
        %2071 = vmatprep.subr.mxu0 0.0
        %2072 = vmatpush1.msra.mxu0 0.0
        %2073 = vmatprep.subr.mxu0 0.0
        %2074 = vmatpush1.msra.mxu0 0.0
        %2075 = vmatprep.subr.mxu0 0.0
        %2076 = vmatpush1.msra.mxu0 0.0
        %2077 = vmatprep.subr.mxu0 0.0
        %2078 = vmatpush1.msra.mxu0 0.0
        %2079 = vmatprep.subr.mxu0 0.0
        %2080 = vmatpush1.msra.mxu0 %v2047
        %2081 = vmatprep.subr.mxu0 0.0
        %2082 = vmatpush2.msra.mxu0 0.0
        %2083 = vmatprep.subr.mxu0 0.0
        %2084 = vmatpush2.msra.mxu0 0.0
        %2085 = vmatprep.subr.mxu0 0.0
        %2086 = vmatpush2.msra.mxu0 0.0
        %2087 = vmatprep.subr.mxu0 0.0
        %2088 = vmatpush2.msra.mxu0 0.0
        %2089 = vmatprep.subr.mxu0 0.0
        %2090 = vmatpush2.msra.mxu0 0.0
        %2091 = vmatprep.subr.mxu0 0.0
        %2092 = vmatpush2.msra.mxu0 0.0
        %2093 = vmatprep.subr.mxu0 0.0
        %2094 = vmatpush2.msra.mxu0 0.0
        %2095 = vmatprep.subr.mxu0 0.0
        %2096 = vmatpush2.msra.mxu0 0.0
        %2097 = vmatprep.subr.mxu0 0.0
        %2098 = vmatpush2.msra.mxu0 0.0
        %2099 = vmatprep.subr.mxu0 0.0
        %2100 = vmatpush2.msra.mxu0 0.0
        %2101 = vmatprep.subr.mxu0 0.0
        %2102 = vmatpush2.msra.mxu0 0.0
        %2103 = vmatprep.subr.mxu0 0.0
        %2104 = vmatpush2.msra.mxu0 0.0
        %2105 = vmatprep.subr.mxu0 0.0
        %2106 = vmatpush2.msra.mxu0 0.0
        %2107 = vmatprep.subr.mxu0 0.0
        %2108 = vmatpush2.msra.mxu0 0.0
        %2109 = vmatprep.subr.mxu0 0.0
        %2110 = vmatpush2.msra.mxu0 0.0
        %2111 = vmatprep.subr.mxu0 0.0
        %2112 = vmatpush2.msra.mxu0 0.0
        %2113 = vmatprep.mubr.f32.mxu0 0.0
        %2114 = vmatmul.mubr.f32.gmra.mxu0 %v979
        %v2115 = vpop.f32.mrf.mxu0
        %v2116 = vadd.f32 0.0, %v2115
        %v2117 = vpop.f32.mrf.mxu0
        %2118 = vmatprep.mubr.f32.mxu0 0.0
        %2119 = vmatmul.mubr.f32.gmra.mxu0 %v982
        %v2120 = vpop.f32.mrf.mxu0
        %v2121 = vadd.f32 0.0, %v2120
        %v2122 = vpop.f32.mrf.mxu0
        %2123 = vmatprep.mubr.f32.mxu0 0.0
        %2124 = vmatmul.mubr.f32.gmra.mxu0 %v985
        %v2125 = vpop.f32.mrf.mxu0
        %v2126 = vadd.f32 0.0, %v2125
        %v2127 = vpop.f32.mrf.mxu0
        %2128 = vmatprep.mubr.f32.mxu0 0.0
        %2129 = vmatmul.mubr.f32.gmra.mxu0 %v988
        %v2130 = vpop.f32.mrf.mxu0
        %v2131 = vadd.f32 0.0, %v2130
        %v2132 = vpop.f32.mrf.mxu0
        %2133 = vmatprep.mubr.f32.mxu0 0.0
        %2134 = vmatmul.mubr.f32.gmra.mxu0 %v991
        %v2135 = vpop.f32.mrf.mxu0
        %v2136 = vadd.f32 0.0, %v2135
        %v2137 = vpop.f32.mrf.mxu0
        %2138 = vmatprep.mubr.f32.mxu0 0.0
        %2139 = vmatmul.mubr.f32.gmra.mxu0 %v994
        %v2140 = vpop.f32.mrf.mxu0
        %v2141 = vadd.f32 0.0, %v2140
        %v2142 = vpop.f32.mrf.mxu0
        %2143 = vmatprep.mubr.f32.mxu0 0.0
        %2144 = vmatmul.mubr.f32.gmra.mxu0 %v997
        %v2145 = vpop.f32.mrf.mxu0
        %v2146 = vadd.f32 0.0, %v2145
        %v2147 = vpop.f32.mrf.mxu0
        %2148 = vmatprep.mubr.f32.mxu0 0.0
        %2149 = vmatmul.mubr.f32.gmra.mxu0 %v1000
        %v2150 = vpop.f32.mrf.mxu0
        %v2151 = vadd.f32 0.0, %v2150
        %v2152 = vpop.f32.mrf.mxu0
        %2153 = vmatprep.mubr.f32.mxu0 0.0
        %2154 = vmatmul.mubr.f32.gmra.mxu0 %v1003
        %v2155 = vpop.f32.mrf.mxu0
        %v2156 = vadd.f32 0.0, %v2155
        %v2157 = vpop.f32.mrf.mxu0
        %2158 = vmatprep.mubr.f32.mxu0 0.0
        %2159 = vmatmul.mubr.f32.gmra.mxu0 %v1006
        %v2160 = vpop.f32.mrf.mxu0
        %v2161 = vadd.f32 0.0, %v2160
        %v2162 = vpop.f32.mrf.mxu0
        %2163 = vmatprep.mubr.f32.mxu0 0.0
        %2164 = vmatmul.mubr.f32.gmra.mxu0 %v1009
        %v2165 = vpop.f32.mrf.mxu0
        %v2166 = vadd.f32 0.0, %v2165
        %v2167 = vpop.f32.mrf.mxu0
        %2168 = vmatprep.mubr.f32.mxu0 0.0
        %2169 = vmatmul.mubr.f32.gmra.mxu0 %v1012
        %v2170 = vpop.f32.mrf.mxu0
        %v2171 = vadd.f32 0.0, %v2170
        %v2172 = vpop.f32.mrf.mxu0
        %2173 = vmatprep.mubr.f32.mxu0 0.0
        %2174 = vmatmul.mubr.f32.gmra.mxu0 %v1525
        %v2175 = vpop.f32.mrf.mxu0
        %v2176 = vadd.f32 0.0, %v2175
        %v2177 = vpop.f32.mrf.mxu0
        %2178 = vmatprep.mubr.f32.mxu0 0.0
        %2179 = vmatmul.mubr.f32.gmra.mxu0 %v1528
        %v2180 = vpop.f32.mrf.mxu0
        %v2181 = vadd.f32 0.0, %v2180
        %v2182 = vpop.f32.mrf.mxu0
        %2183 = vmatprep.mubr.f32.mxu0 0.0
        %2184 = vmatmul.mubr.f32.gmra.mxu0 %v2041
        %v2185 = vpop.f32.mrf.mxu0
        %v2186 = vadd.f32 0.0, %v2185
        %v2187 = vpop.f32.mrf.mxu0
        %2188 = vmatprep.mubr.f32.mxu0 0.0
        %2189 = vmatmul.mubr.f32.gmra.mxu0 %v2044
        %v2190 = vpop.f32.mrf.mxu0
        %v2191 = vadd.f32 0.0, %v2190
        %v2192 = vpop.f32.mrf.mxu0
        %2193 = vdwg.mxu0
        %v2194 = vadd.f32 %v2022, %v2116
        %v2195 = vadd.f32 %v2023, %v2121
        %v2196 = vadd.f32 %v2024, %v2126
        %v2197 = vadd.f32 %v2025, %v2131
        %v2198 = vadd.f32 %v2026, %v2136
        %v2199 = vadd.f32 %v2027, %v2141
        %v2200 = vadd.f32 %v2028, %v2146
        %v2201 = vadd.f32 %v2029, %v2151
        %v2202 = vadd.f32 %v2030, %v2156
        %v2203 = vadd.f32 %v2031, %v2161
        %v2204 = vadd.f32 %v2032, %v2166
        %v2205 = vadd.f32 %v2033, %v2171
        %v2206 = vadd.f32 %v2034, %v2176
        %v2207 = vadd.f32 %v2035, %v2181
        %v2208 = vadd.f32 %v2036, %v2186
        %v2209 = vadd.f32 %v2037, %v2191
        %vm2210 = vcmask 64512
        %2211 = vst.msk [vmem:[%s404] sm:$0xff] %vm2210, %v2194
        %2212 = vst.msk [vmem:[%s404 + $0x8] sm:$0xff] %vm2210, %v2195
        %2213 = vst.msk [vmem:[%s404 + $0x10] sm:$0xff] %vm2210, %v2196
        %2214 = vst.msk [vmem:[%s404 + $0x18] sm:$0xff] %vm2210, %v2197
        %2215 = vst.msk [vmem:[%s404 + $0x20] sm:$0xff] %vm2210, %v2198
        %2216 = vst.msk [vmem:[%s404 + $0x28] sm:$0xff] %vm2210, %v2199
        %2217 = vst.msk [vmem:[%s404 + $0x30] sm:$0xff] %vm2210, %v2200
        %2218 = vst.msk [vmem:[%s404 + $0x38] sm:$0xff] %vm2210, %v2201
        %2219 = vst.msk [vmem:[%s404 + $0x40] sm:$0xff] %vm2210, %v2202
        %2220 = vst.msk [vmem:[%s404 + $0x48] sm:$0xff] %vm2210, %v2203
        %2221 = vst.msk [vmem:[%s404 + $0x50] sm:$0xff] %vm2210, %v2204
        %2222 = vst.msk [vmem:[%s404 + $0x58] sm:$0xff] %vm2210, %v2205
        %2223 = vst.msk [vmem:[%s404 + $0x60] sm:$0xff] %vm2210, %v2206
        %2224 = vst.msk [vmem:[%s404 + $0x68] sm:$0xff] %vm2210, %v2207
        %2225 = vst.msk [vmem:[%s404 + $0x70] sm:$0xff] %vm2210, %v2208
        %2226 = vst.msk [vmem:[%s404 + $0x78] sm:$0xff] %vm2210, %v2209
        %v2227 = vsel %vm2210, %v2194, 0.0
        %v2228 = vsel %vm2210, %v2195, 0.0
        %v2229 = vadd.f32 %v2227, %v2228
        %v2230 = vsel %vm2210, %v2196, 0.0
        %v2231 = vadd.f32 %v2229, %v2230
        %v2232 = vsel %vm2210, %v2197, 0.0
        %v2233 = vadd.f32 %v2231, %v2232
        %v2234 = vsel %vm2210, %v2198, 0.0
        %v2235 = vadd.f32 %v2233, %v2234
        %v2236 = vsel %vm2210, %v2199, 0.0
        %v2237 = vadd.f32 %v2235, %v2236
        %v2238 = vsel %vm2210, %v2200, 0.0
        %v2239 = vadd.f32 %v2237, %v2238
        %v2240 = vsel %vm2210, %v2201, 0.0
        %v2241 = vadd.f32 %v2239, %v2240
        %v2242 = vsel %vm2210, %v2202, 0.0
        %v2243 = vadd.f32 %v2241, %v2242
        %v2244 = vsel %vm2210, %v2203, 0.0
        %v2245 = vadd.f32 %v2243, %v2244
        %v2246 = vsel %vm2210, %v2204, 0.0
        %v2247 = vadd.f32 %v2245, %v2246
        %v2248 = vsel %vm2210, %v2205, 0.0
        %v2249 = vadd.f32 %v2247, %v2248
        %v2250 = vsel %vm2210, %v2206, 0.0
        %v2251 = vadd.f32 %v2249, %v2250
        %v2252 = vsel %vm2210, %v2207, 0.0
        %v2253 = vadd.f32 %v2251, %v2252
        %v2254 = vsel %vm2210, %v2208, 0.0
        %v2255 = vadd.f32 %v2253, %v2254
        %v2256 = vsel %vm2210, %v2209, 0.0
        %v2257 = vadd.f32 %v2255, %v2256
        %v2258 = vrot.slane %v2257, 4
        %v2259 = vadd.f32 %v2257, %v2258
        %v2260 = vrot.slane %v2259, 2
        %v2261 = vadd.f32 %v2259, %v2260
        %v2262 = vrot.slane %v2261, 1
        %v2263 = vadd.f32 %v2261, %v2262
        %v2264 = vmul.f32 %v2194, %v2194
        %v2265 = vmul.f32 %v2195, %v2195
        %v2266 = vmul.f32 %v2196, %v2196
        %v2267 = vmul.f32 %v2197, %v2197
        %v2268 = vmul.f32 %v2198, %v2198
        %v2269 = vmul.f32 %v2199, %v2199
        %v2270 = vmul.f32 %v2200, %v2200
        %v2271 = vmul.f32 %v2201, %v2201
        %v2272 = vmul.f32 %v2202, %v2202
        %v2273 = vmul.f32 %v2203, %v2203
        %v2274 = vmul.f32 %v2204, %v2204
        %v2275 = vmul.f32 %v2205, %v2205
        %v2276 = vmul.f32 %v2206, %v2206
        %v2277 = vmul.f32 %v2207, %v2207
        %v2278 = vmul.f32 %v2208, %v2208
        %v2279 = vmul.f32 %v2209, %v2209
        %v2280 = vsel %vm2210, %v2264, 0.0
        %v2281 = vsel %vm2210, %v2265, 0.0
        %v2282 = vadd.f32 %v2280, %v2281
        %v2283 = vsel %vm2210, %v2266, 0.0
        %v2284 = vadd.f32 %v2282, %v2283
        %v2285 = vsel %vm2210, %v2267, 0.0
        %v2286 = vadd.f32 %v2284, %v2285
        %v2287 = vsel %vm2210, %v2268, 0.0
        %v2288 = vadd.f32 %v2286, %v2287
        %v2289 = vsel %vm2210, %v2269, 0.0
        %v2290 = vadd.f32 %v2288, %v2289
        %v2291 = vsel %vm2210, %v2270, 0.0
        %v2292 = vadd.f32 %v2290, %v2291
        %v2293 = vsel %vm2210, %v2271, 0.0
        %v2294 = vadd.f32 %v2292, %v2293
        %v2295 = vsel %vm2210, %v2272, 0.0
        %v2296 = vadd.f32 %v2294, %v2295
        %v2297 = vsel %vm2210, %v2273, 0.0
        %v2298 = vadd.f32 %v2296, %v2297
        %v2299 = vsel %vm2210, %v2274, 0.0
        %v2300 = vadd.f32 %v2298, %v2299
        %v2301 = vsel %vm2210, %v2275, 0.0
        %v2302 = vadd.f32 %v2300, %v2301
        %v2303 = vsel %vm2210, %v2276, 0.0
        %v2304 = vadd.f32 %v2302, %v2303
        %v2305 = vsel %vm2210, %v2277, 0.0
        %v2306 = vadd.f32 %v2304, %v2305
        %v2307 = vsel %vm2210, %v2278, 0.0
        %v2308 = vadd.f32 %v2306, %v2307
        %v2309 = vsel %vm2210, %v2279, 0.0
        %v2310 = vadd.f32 %v2308, %v2309
        %v2311 = vrot.slane %v2310, 4
        %v2312 = vadd.f32 %v2310, %v2311
        %v2313 = vrot.slane %v2312, 2
        %v2314 = vadd.f32 %v2312, %v2313
        %v2315 = vrot.slane %v2314, 1
        %v2316 = vadd.f32 %v2314, %v2315
        %vm2317 = vcmask 1040384
        %v2318 = vsel %vm2317, %v2263, %v2316
        %vm2319 = vcmask 58368
        %2320 = vst.msk [vmem:[%s349] sm:$0x3] %vm2319, %v2318
        %s2321 = smul.u32 8, %s25
        %p2322 = scmp.lt.s32.totalorder %s24, 1
        %s2323 = scalar_select %p2322, %s24, 1
        %p2324 = scmp.lt.s32.totalorder %s2321, 15
        %s2325 = scalar_select %p2324, %s2321, 15
        %s2326 = smul.addr %s2325, 2
        %s2327 = smul.addr %s2323, 32
        %s2328 = sadd.s32 %s2326, %s2327
        %s2329 = smul.addr %s2328, 8
        %s2330 = scalar_lea.vmem %s4, %s2329
        %s2331 = sand.u32 %s191, 1
        %s2332 = scalar_lea.sflag [#allocation3], %s2331
        %s2333 = sand.u32 %s191, 1
        %s2334 = smul.addr %s2333, 2
        %s2335 = scalar_lea.vmem [#allocation2], %s2334
        // Predicated region
        $region37: #{tpu_custom_call.1} parent=35 // pred_check
          %p2336 = pneg %p173
        $region38: #{tpu_custom_call.1} parent=35 // pred_check_branch
          %2338 = sbr.rel (%p2336) target = $region40
        $region39: #{tpu_custom_call.1} parent=35 // pred_region
          %s2339 = smul.u32 8, %s25
        $region40: #{tpu_custom_call.1} parent=35 // pred_fallthru
          _
        // Predicated region
        $region41: #{tpu_custom_call.1} parent=35 // pred_check
          %p2340 = pneg %p201
        $region42: #{tpu_custom_call.1} parent=35 // pred_check_branch
          %2342 = sbr.rel (%p2340) target = $region44
        $region43: #{tpu_custom_call.1} parent=35 // pred_region
          %s2344 = ssub.s32 32, 32
          %2345 = vsyncadd %s2332, %s2344
          %s2346 = smul.addr %s24, 2
          %s2347 = sadd.s32 %s25, %s2346
          %s2348 = smul.addr %s2347, 32
          %s2349 = scalar_lea.hbm %s5, %s2348
          %s2351 = sshll.u32 %s2335, 4
          %s2352 = int_to_ptr.vmem [resolvable:$true] %s2351
          %2354 = dma.vmem_to_hbm [thread:$0]  %s2352, 32, %s2349, %s2332
        $region44: #{tpu_custom_call.1} parent=35 // pred_fallthru
          _
      $region36: #{tpu_custom_call.1} parent=5 // pred_fallthru
        _
      %p2355 = scmp.le.s32.totalorder 2, %s15
      // Predicated region
      $region45: #{tpu_custom_call.1} parent=5 // pred_check
        %p2356 = pneg %p2355
      $region46: #{tpu_custom_call.1} parent=5 // pred_check_branch
        %2358 = sbr.rel (%p2356) target = $region48
      $region47: #{tpu_custom_call.1} parent=5 // pred_region
        %s2359 = ssub.s32 %s15, 2
        // Predicated region
        $region49: #{tpu_custom_call.1} parent=47 // pred_check
          %p2360 = pneg %p179
        $region50: #{tpu_custom_call.1} parent=47 // pred_check_branch
          %2362 = sbr.rel (%p2360) target = $region52
        $region51: #{tpu_custom_call.1} parent=47 // pred_region
          %s2363 = smul.u32 8, %s27
          %p2364 = scmp.lt.s32.totalorder %s26, 1
          %s2365 = scalar_select %p2364, %s26, 1
          %p2366 = scmp.lt.s32.totalorder %s2363, 15
          %s2367 = scalar_select %p2366, %s2363, 15
          %s2368 = smul.addr %s2367, 2
          %s2369 = smul.addr %s2365, 32
          %s2370 = sadd.s32 %s2368, %s2369
          %s2371 = smul.addr %s2370, 8
          %s2372 = scalar_lea.vmem %s4, %s2371
        $region52: #{tpu_custom_call.1} parent=47 // pred_fallthru
          _
        // Predicated region
        $region53: #{tpu_custom_call.1} parent=47 // pred_check
          %p2373 = pneg %p207
        $region54: #{tpu_custom_call.1} parent=47 // pred_check_branch
          %2375 = sbr.rel (%p2373) target = $region56
        $region55: #{tpu_custom_call.1} parent=47 // pred_region
          %s2376 = sand.u32 %s192, 1
          %s2377 = scalar_lea.sflag [#allocation3], %s2376
          %s2378 = sand.u32 %s192, 1
          %s2379 = smul.addr %s2378, 2
          %s2380 = scalar_lea.vmem [#allocation2], %s2379
          %2381 = dma.done %s2377, 32
        $region56: #{tpu_custom_call.1} parent=47 // pred_fallthru
          _
      $region48: #{tpu_custom_call.1} parent=5 // pred_fallthru
        _
    $region6: #{tpu_custom_call.1} parent=1 // loop_footer
      %s19 = sadd.s32 1, %s15
    $region7: #{tpu_custom_call.1} parent=1 // loop_footer_branch
      %14 = sbr.rel target = $region3
    $region8: #{tpu_custom_call.1} parent=1 // loop_exit
      _
    %2382 = vsyncpa [#allocation3], 1
    %s2383 = scalar_lea.sflag [#allocation3], 1
    %2384 = vsyncpa %s2383, 1

</llo_original>
